<compile_context>
chip_gen: v6e
topology: v6e:2x2x1
jax: 0.10.0
libtpu: 0.0.40
codegen_flags: <defaults>
</compile_context>

<pallas_src>
import functools

import jax
import jax.numpy as jnp
from jax.experimental import pallas as pl
from jax.experimental.pallas import tpu as pltpu


def _bn_kernel(x_ref, w_ref, b_ref, o_ref, *, eps, inv_l):
    # x_ref: (Ct, L)   one tile of channels, full reduction axis
    # w_ref: (Ct, 1)   per-channel gamma
    # b_ref: (Ct, 1)   per-channel beta
    x = x_ref[...].astype(jnp.float32)

    # One-pass stats: sweep the tile once.
    s1 = jnp.sum(x, axis=1, keepdims=True)            # (Ct, 1)
    s2 = jnp.sum(x * x, axis=1, keepdims=True)        # (Ct, 1)
    mean = s1 * inv_l
    var = s2 * inv_l - mean * mean                    # biased variance
    var = jnp.maximum(var, 0.0)                       # guard f32 cancellation
    inv = jax.lax.rsqrt(var + eps)                    # EUP slot

    # Fold normalization + affine into one broadcasted multiply-add.
    a = w_ref[...].astype(jnp.float32) * inv          # (Ct, 1)
    b = b_ref[...].astype(jnp.float32) - mean * a     # (Ct, 1)
    o_ref[...] = (x * a + b).astype(o_ref.dtype)


def _pick_channel_tile(c, l, itemsize, vmem_budget_bytes):
    """Largest multiple-of-8 divisor of C whose double-buffered (in+out)
    working set fits the VMEM budget, preferring a grid of >= 2 steps so
    v7x's two TensorCores both get work."""
    def fits(ct):
        # input tile + output tile, each double-buffered by the pipeline
        return 2 * 2 * ct * l * itemsize <= vmem_budget_bytes

    fallback = None
    for ct in range(8 * (c // 8), 7, -8):
        if c % ct == 0 and fits(ct):
            if c // ct >= 2:
                return ct
            if fallback is None:
                fallback = ct   # fits but grid=(1,); keep looking for >=2 steps
    return fallback if fallback is not None else c


def batchnorm2d_pallas(x, weight, bias, *, eps=1e-5, vmem_budget_bytes=8 << 20):
    """Training-mode BatchNorm2d over NCHW input."""
    n, c, h, w = x.shape
    l = n * h * w

    # NCHW -> (C, N*H*W).  For N=1 this is a free reshape (layout-preserving).
    # TODO(synk): for N>1 this transpose is a real HBM pass; a two-level grid
    # accumulating (sum, sumsq) per N-block would avoid it.
    x_cl = jnp.transpose(x, (1, 0, 2, 3)).reshape(c, l)
    w_c1 = weight.reshape(c, 1)
    b_c1 = bias.reshape(c, 1)

    itemsize = jnp.dtype(x.dtype).itemsize
    ct = _pick_channel_tile(c, l, itemsize, vmem_budget_bytes)
    grid = (c // ct,)

    out_cl = pl.pallas_call(
        functools.partial(_bn_kernel, eps=eps, inv_l=1.0 / l),
        out_shape=jax.ShapeDtypeStruct((c, l), x.dtype),
        grid_spec=pltpu.PrefetchScalarGridSpec(
            num_scalar_prefetch=0,
            grid=grid,
            in_specs=[
                pl.BlockSpec((ct, l), lambda i: (i, 0)),
                pl.BlockSpec((ct, 1), lambda i: (i, 0)),
                pl.BlockSpec((ct, 1), lambda i: (i, 0)),
            ],
            out_specs=pl.BlockSpec((ct, l), lambda i: (i, 0)),
        ),
        compiler_params=pltpu.CompilerParams(
            dimension_semantics=("parallel",),   # channel tiles are independent
            vmem_limit_bytes=32 * 1024 * 1024,   # explicit, safe on v5e/v6e/v7x
        ),
    )(x_cl, w_c1, b_c1)

    # (C, N*H*W) -> NCHW
    return jnp.transpose(out_cl.reshape(c, n, h, w), (1, 0, 2, 3))


def _reference_bn(x, weight, bias, eps=1e-5):
    xf = x.astype(jnp.float32)
    mean = jnp.mean(xf, axis=(0, 2, 3), keepdims=True)
    var = jnp.mean((xf - mean) ** 2, axis=(0, 2, 3), keepdims=True)
    xhat = (xf - mean) * jax.lax.rsqrt(var + eps)
    return (xhat * weight.reshape(1, -1, 1, 1) + bias.reshape(1, -1, 1, 1)).astype(x.dtype)


if __name__ == "__main__":
    # Shapes from the module: x316 = torch.randn([1, 1584, 14, 14]),
    # BatchNorm2d(1584, eps=1e-5, affine=True).
    N, C, H, W = 1, 1584, 14, 14

    key = jax.random.PRNGKey(0)
    kx, kw, kb = jax.random.split(key, 3)
    x = jax.random.normal(kx, (N, C, H, W), dtype=jnp.float32)
    # PyTorch default init is gamma=1, beta=0; perturb slightly so the affine
    # path is actually exercised.
    gamma = 1.0 + 0.1 * jax.random.normal(kw, (C,), dtype=jnp.float32)
    beta = 0.1 * jax.random.normal(kb, (C,), dtype=jnp.float32)

    out = batchnorm2d_pallas(x, gamma, beta, eps=1e-5)
    out = jax.block_until_ready(out)

    ref = _reference_bn(x, gamma, beta, eps=1e-5)
    assert out.shape == (N, C, H, W)
    assert jnp.allclose(out, ref, atol=1e-4, rtol=1e-4)

    print("KERNEL_OK")
</pallas_src>

<mosaic_0001>
module attributes {stable_mosaic.version = 11 : i64} {
  func.func @_bn_kernel(%arg0: i32, %arg1: memref<792x196xf32, #tpu.memory_space<vmem>>, %arg2: memref<792x1xf32, #tpu.memory_space<vmem>>, %arg3: memref<792x1xf32, #tpu.memory_space<vmem>>, %arg4: memref<792x196xf32, #tpu.memory_space<vmem>>) attributes {dimension_semantics = [#tpu.dimension_semantics<parallel>], iteration_bounds = array<i64: 2>, scalar_prefetch = 0 : i64, scratch_operands = 0 : i64, tpu.core_type = #tpu.core_type<tc>, window_params = [{transform_indices = @transform_0, window_bounds = array<i64: 792, 196>}, {transform_indices = @transform_1, window_bounds = array<i64: 792, 1>}, {transform_indices = @transform_2, window_bounds = array<i64: 792, 1>}, {transform_indices = @transform_3, window_bounds = array<i64: 792, 196>}]} {
    %c0 = arith.constant 0 : index
    %c0_0 = arith.constant 0 : index
    %0 = vector.load %arg1[%c0, %c0_0] : memref<792x196xf32, #tpu.memory_space<vmem>>, vector<792x196xf32>
    %cst = arith.constant dense<0.000000e+00> : vector<792xf32>
    %1 = vector.multi_reduction <add>, %0, %cst [1] : vector<792x196xf32> to vector<792xf32>
    %2 = vector.shape_cast %1 : vector<792xf32> to vector<792x1xf32>
    %3 = arith.mulf %0, %0 : vector<792x196xf32>
    %cst_1 = arith.constant dense<0.000000e+00> : vector<792xf32>
    %4 = vector.multi_reduction <add>, %3, %cst_1 [1] : vector<792x196xf32> to vector<792xf32>
    %5 = vector.shape_cast %4 : vector<792xf32> to vector<792x1xf32>
    %cst_2 = arith.constant 0.00510204071 : f32
    %6 = vector.broadcast %cst_2 : f32 to vector<792x1xf32>
    %7 = arith.mulf %2, %6 : vector<792x1xf32>
    %cst_3 = arith.constant 0.00510204071 : f32
    %8 = vector.broadcast %cst_3 : f32 to vector<792x1xf32>
    %9 = arith.mulf %5, %8 : vector<792x1xf32>
    %10 = arith.mulf %7, %7 : vector<792x1xf32>
    %11 = arith.subf %9, %10 : vector<792x1xf32>
    %cst_4 = arith.constant 0.000000e+00 : f32
    %12 = vector.broadcast %cst_4 : f32 to vector<792x1xf32>
    %13 = arith.maximumf %11, %12 : vector<792x1xf32>
    %cst_5 = arith.constant 9.99999974E-6 : f32
    %14 = vector.broadcast %cst_5 : f32 to vector<792x1xf32>
    %15 = arith.addf %13, %14 : vector<792x1xf32>
    %16 = math.rsqrt %15 : vector<792x1xf32>
    %c0_6 = arith.constant 0 : index
    %c0_7 = arith.constant 0 : index
    %17 = vector.load %arg2[%c0_6, %c0_7] : memref<792x1xf32, #tpu.memory_space<vmem>>, vector<792x1xf32>
    %18 = arith.mulf %17, %16 : vector<792x1xf32>
    %c0_8 = arith.constant 0 : index
    %c0_9 = arith.constant 0 : index
    %19 = vector.load %arg3[%c0_8, %c0_9] : memref<792x1xf32, #tpu.memory_space<vmem>>, vector<792x1xf32>
    %20 = arith.mulf %7, %18 : vector<792x1xf32>
    %21 = arith.subf %19, %20 : vector<792x1xf32>
    %22 = vector.broadcast %18 : vector<792x1xf32> to vector<792x196xf32>
    %23 = arith.mulf %0, %22 : vector<792x196xf32>
    %24 = vector.broadcast %21 : vector<792x1xf32> to vector<792x196xf32>
    %25 = arith.addf %23, %24 : vector<792x196xf32>
    %c0_10 = arith.constant 0 : index
    %c0_11 = arith.constant 0 : index
    %26 = vector.load %arg4[%c0_10, %c0_11] : memref<792x196xf32, #tpu.memory_space<vmem>>, vector<792x196xf32>
    tpu.vector_store %arg4[%c0_10, %c0_11], %25 {strides = array<i32>} : memref<792x196xf32, #tpu.memory_space<vmem>>, vector<792x196xf32>,
    return
  }
  func.func @transform_0(%arg0: i32) -> (i32, i32) {
    %c0_i32 = arith.constant 0 : i32
    %c0_i32_0 = arith.constant 0 : i32
    return %arg0, %c0_i32 : i32, i32
  }
  func.func @transform_1(%arg0: i32) -> (i32, i32) {
    %c0_i32 = arith.constant 0 : i32
    %c0_i32_0 = arith.constant 0 : i32
    return %arg0, %c0_i32 : i32, i32
  }
  func.func @transform_2(%arg0: i32) -> (i32, i32) {
    %c0_i32 = arith.constant 0 : i32
    %c0_i32_0 = arith.constant 0 : i32
    return %arg0, %c0_i32 : i32, i32
  }
  func.func @transform_3(%arg0: i32) -> (i32, i32) {
    %c0_i32 = arith.constant 0 : i32
    %c0_i32_0 = arith.constant 0 : i32
    return %arg0, %c0_i32 : i32, i32
  }
}

</mosaic_0001>

<llo_original>
// kernel: tpu_custom_call.1
$region0: #{tpu_custom_call.1}
  #allocation0 [shape = 'u32[]', space=smem, size = 0x4, offset = 0x4, fixed_abs, tag = 'smem constant byte address 0x4 - core index']
  #allocation1 [shape = 'u32[144,128]{1,0:T(1,128)}', space=vmem, size = 0x12000, scoped, tag = 'internal scratch']
  %s0 = inlined_call_operand.vmem [shape: f32[1584,196], index: 0, kind: input, shape index: {}]
  %s1 = inlined_call_operand.vmem [shape: f32[1584,1], index: 1, kind: input, shape index: {}]
  %s2 = inlined_call_operand.vmem [shape: f32[1584,1], index: 2, kind: input, shape index: {}]
  %s3 = inlined_call_operand.vmem [shape: f32[1584,196], index: 3, kind: output, shape index: {}]
  %s4 = sld [smem:[#allocation0]]
  $region45: #{tpu_custom_call.1} parent=0
    _
  %s6 = ssub.s32 1, %s4
  %s7 = scalar_select 0, %s6, %s4
  loop: start=0, step=1, limit=4
  $region2: #{tpu_custom_call.1} parent=0 // loop_pre_header
    _
  $region3: #{tpu_custom_call.1} parent=0 // loop_header
    %s9 = sphi 0, %s13
    %p10 = scmp.ge.s32.totalorder %s9, 4
    %s19 = sphi 0, %s21
    %s22 = sphi 0, %s19
    %s23 = sphi 0, %s22
    %s39 = sphi 0, %s23
    %s45 = sphi 0, %s47
    %s48 = sphi 0, %s45
    %s49 = sphi 0, %s48
    %s65 = sphi 0, %s49
    %s71 = sphi 0, %s73
    %s74 = sphi 0, %s71
    %s75 = sphi 0, %s74
    %s91 = sphi 0, %s75
    %s97 = sphi 0, %s99
    %s100 = sphi 0, %s97
    %s101 = sphi 0, %s100
    %s117 = sphi 0, %s101
  $region4: #{tpu_custom_call.1} parent=0 // loop_header_branch
    %12 = sbr.rel (%p10) target = $region8
  $region5: #{tpu_custom_call.1} parent=0 // loop_body
    %s14 = ssub.s32 %s9, 1
    %s15 = ssub.s32 %s9, 2
    %s16 = sadd.s32 %s9, 1
    %s17 = ssub.s32 %s9, %s16
    %p18 = scmp.eq.s32.totalorder %s17, 0
    %s20 = sadd.s32 %s19, 1
    %s21 = scalar_select %p18, %s19, %s20
    %p24 = pneg %p18
    %p25 = scmp.eq.s32.totalorder %s9, 1
    %p26 = por %p24, %p25
    %p27 = scmp.ne.s32.totalorder %s19, %s22
    %p28 = scmp.eq.s32.totalorder %s9, 0
    %p29 = por %p27, %p28
    %p30 = scmp.ne.s32.totalorder %s19, %s22
    %p31 = scmp.eq.s32.totalorder %s14, 1
    %p32 = por %p30, %p31
    %p33 = scmp.ne.s32.totalorder %s22, %s23
    %p34 = scmp.eq.s32.totalorder %s14, 0
    %p35 = por %p33, %p34
    %p36 = scmp.ne.s32.totalorder %s22, %s23
    %p37 = scmp.eq.s32.totalorder %s15, 1
    %p38 = por %p36, %p37
    %p40 = scmp.ne.s32.totalorder %s23, %s39
    %p41 = scmp.eq.s32.totalorder %s15, 0
    %p42 = por %p40, %p41
    %s43 = ssub.s32 %s9, %s16
    %p44 = scmp.eq.s32.totalorder %s43, 0
    %s46 = sadd.s32 %s45, 1
    %s47 = scalar_select %p44, %s45, %s46
    %p50 = pneg %p44
    %p51 = scmp.eq.s32.totalorder %s9, 1
    %p52 = por %p50, %p51
    %p53 = scmp.ne.s32.totalorder %s45, %s48
    %p54 = scmp.eq.s32.totalorder %s9, 0
    %p55 = por %p53, %p54
    %p56 = scmp.ne.s32.totalorder %s45, %s48
    %p57 = scmp.eq.s32.totalorder %s14, 1
    %p58 = por %p56, %p57
    %p59 = scmp.ne.s32.totalorder %s48, %s49
    %p60 = scmp.eq.s32.totalorder %s14, 0
    %p61 = por %p59, %p60
    %p62 = scmp.ne.s32.totalorder %s48, %s49
    %p63 = scmp.eq.s32.totalorder %s15, 1
    %p64 = por %p62, %p63
    %p66 = scmp.ne.s32.totalorder %s49, %s65
    %p67 = scmp.eq.s32.totalorder %s15, 0
    %p68 = por %p66, %p67
    %s69 = ssub.s32 %s9, %s16
    %p70 = scmp.eq.s32.totalorder %s69, 0
    %s72 = sadd.s32 %s71, 1
    %s73 = scalar_select %p70, %s71, %s72
    %p76 = pneg %p70
    %p77 = scmp.eq.s32.totalorder %s9, 1
    %p78 = por %p76, %p77
    %p79 = scmp.ne.s32.totalorder %s71, %s74
    %p80 = scmp.eq.s32.totalorder %s9, 0
    %p81 = por %p79, %p80
    %p82 = scmp.ne.s32.totalorder %s71, %s74
    %p83 = scmp.eq.s32.totalorder %s14, 1
    %p84 = por %p82, %p83
    %p85 = scmp.ne.s32.totalorder %s74, %s75
    %p86 = scmp.eq.s32.totalorder %s14, 0
    %p87 = por %p85, %p86
    %p88 = scmp.ne.s32.totalorder %s74, %s75
    %p89 = scmp.eq.s32.totalorder %s15, 1
    %p90 = por %p88, %p89
    %p92 = scmp.ne.s32.totalorder %s75, %s91
    %p93 = scmp.eq.s32.totalorder %s15, 0
    %p94 = por %p92, %p93
    %s95 = ssub.s32 %s9, %s16
    %p96 = scmp.eq.s32.totalorder %s95, 0
    %s98 = sadd.s32 %s97, 1
    %s99 = scalar_select %p96, %s97, %s98
    %p102 = pneg %p96
    %p103 = scmp.eq.s32.totalorder %s9, 1
    %p104 = por %p102, %p103
    %p105 = scmp.ne.s32.totalorder %s97, %s100
    %p106 = scmp.eq.s32.totalorder %s9, 0
    %p107 = por %p105, %p106
    %p108 = scmp.ne.s32.totalorder %s97, %s100
    %p109 = scmp.eq.s32.totalorder %s14, 1
    %p110 = por %p108, %p109
    %p111 = scmp.ne.s32.totalorder %s100, %s101
    %p112 = scmp.eq.s32.totalorder %s14, 0
    %p113 = por %p111, %p112
    %p114 = scmp.ne.s32.totalorder %s100, %s101
    %p115 = scmp.eq.s32.totalorder %s15, 1
    %p116 = por %p114, %p115
    %p118 = scmp.ne.s32.totalorder %s101, %s117
    %p119 = scmp.eq.s32.totalorder %s15, 0
    %p120 = por %p118, %p119
    %p121 = scmp.le.s32.totalorder 1, %s9
    %p122 = scmp.lt.s32.totalorder %s9, 3
    %p123 = pnand %p121, %p122
    %p124 = pneg %p123
    // Predicated region
    $region9: #{tpu_custom_call.1} parent=5 // pred_check
      _
    $region10: #{tpu_custom_call.1} parent=5 // pred_check_branch
      %126 = sbr.rel (%p123) target = $region12
    $region11: #{tpu_custom_call.1} parent=5 // pred_region
      %s127 = ssub.s32 %s9, 1
    $region12: #{tpu_custom_call.1} parent=5 // pred_fallthru
      _
    %p128 = scmp.lt.s32.totalorder %s9, 2
    // Predicated region
    $region13: #{tpu_custom_call.1} parent=5 // pred_check
      %p129 = pneg %p128
    $region14: #{tpu_custom_call.1} parent=5 // pred_check_branch
      %131 = sbr.rel (%p129) target = $region16
    $region15: #{tpu_custom_call.1} parent=5 // pred_region
      // Predicated region
      $region17: #{tpu_custom_call.1} parent=15 // pred_check
        %p132 = pneg %p29
      $region18: #{tpu_custom_call.1} parent=15 // pred_check_branch
        %134 = sbr.rel (%p132) target = $region20
      $region19: #{tpu_custom_call.1} parent=15 // pred_region
        %s135 = smul.u32 99, %s9
        %p136 = scmp.lt.s32.totalorder %s135, 197
        %s137 = scalar_select %p136, %s135, 197
        %s138 = smul.addr %s137, 2
        %s139 = smul.addr %s138, 8
        %s140 = scalar_lea.vmem %s0, %s139
        %s141 = smul.u32 99, %s9
      $region20: #{tpu_custom_call.1} parent=15 // pred_fallthru
        _
      // Predicated region
      $region21: #{tpu_custom_call.1} parent=15 // pred_check
        %p142 = pneg %p55
      $region22: #{tpu_custom_call.1} parent=15 // pred_check_branch
        %144 = sbr.rel (%p142) target = $region24
      $region23: #{tpu_custom_call.1} parent=15 // pred_region
        %s145 = smul.u32 99, %s9
        %p146 = scmp.lt.s32.totalorder %s145, 197
        %s147 = scalar_select %p146, %s145, 197
        %s148 = smul.addr %s147, 8
        %s149 = scalar_lea.vmem %s1, %s148
        %s150 = smul.u32 99, %s9
      $region24: #{tpu_custom_call.1} parent=15 // pred_fallthru
        _
      // Predicated region
      $region25: #{tpu_custom_call.1} parent=15 // pred_check
        %p151 = pneg %p81
      $region26: #{tpu_custom_call.1} parent=15 // pred_check_branch
        %153 = sbr.rel (%p151) target = $region28
      $region27: #{tpu_custom_call.1} parent=15 // pred_region
        %s154 = smul.u32 99, %s9
        %p155 = scmp.lt.s32.totalorder %s154, 197
        %s156 = scalar_select %p155, %s154, 197
        %s157 = smul.addr %s156, 8
        %s158 = scalar_lea.vmem %s2, %s157
        %s159 = smul.u32 99, %s9
      $region28: #{tpu_custom_call.1} parent=15 // pred_fallthru
        _
    $region16: #{tpu_custom_call.1} parent=5 // pred_fallthru
      _
    %p160 = scmp.le.s32.totalorder 1, %s9
    %p161 = scmp.lt.s32.totalorder %s9, 3
    %p162 = pnand %p160, %p161
    %p163 = pneg %p162
    // Predicated region
    $region29: #{tpu_custom_call.1} parent=5 // pred_check
      _
    $region30: #{tpu_custom_call.1} parent=5 // pred_check_branch
      %165 = sbr.rel (%p162) target = $region32
    $region31: #{tpu_custom_call.1} parent=5 // pred_region
      %s166 = ssub.s32 %s9, 1
      %s167 = smul.u32 99, %s14
      %p168 = scmp.lt.s32.totalorder %s167, 197
      %s169 = scalar_select %p168, %s167, 197
      %s170 = smul.addr %s169, 2
      %s171 = smul.addr %s170, 8
      %s172 = scalar_lea.vmem %s0, %s171
      %p173 = pneg %p35
      %p174 = pneg %p32
      %s175 = smul.u32 99, %s14
      %p176 = scmp.lt.s32.totalorder %s175, 197
      %s177 = scalar_select %p176, %s175, 197
      %s178 = smul.addr %s177, 8
      %s179 = scalar_lea.vmem %s1, %s178
      %p180 = pneg %p61
      %p181 = pneg %p58
      %s182 = smul.u32 99, %s14
      %p183 = scmp.lt.s32.totalorder %s182, 197
      %s184 = scalar_select %p183, %s182, 197
      %s185 = smul.addr %s184, 8
      %s186 = scalar_lea.vmem %s2, %s185
      %p187 = pneg %p87
      %p188 = pneg %p84
      %p189 = pneg %p113
      %p190 = pneg %p110
      %s191 = smul.u32 99, %s14
      %p192 = scmp.lt.s32.totalorder %s191, 197
      %s193 = scalar_select %p192, %s191, 197
      %s194 = smul.addr %s193, 2
      %s195 = smul.addr %s194, 8
      %s196 = scalar_lea.vmem %s3, %s195
      %s197 = smul.u32 99, %s14
      %p198 = scmp.lt.s32.totalorder %s197, 197
      %s199 = scalar_select %p198, %s197, 197
      %s200 = smul.addr %s199, 2
      %s201 = smul.addr %s200, 8
      %s202 = scalar_lea.vmem %s0, %s201
      %s203 = smul.u32 99, %s14
      %s204 = smul.u32 99, %s14
      %p205 = scmp.lt.s32.totalorder %s204, 197
      %s206 = scalar_select %p205, %s204, 197
      %s207 = smul.addr %s206, 8
      %s208 = scalar_lea.vmem %s1, %s207
      %s209 = smul.u32 99, %s14
      %s210 = smul.u32 99, %s14
      %p211 = scmp.lt.s32.totalorder %s210, 197
      %s212 = scalar_select %p211, %s210, 197
      %s213 = smul.addr %s212, 8
      %s214 = scalar_lea.vmem %s2, %s213
      %s215 = smul.u32 99, %s14
      %s216 = smul.u32 99, %s14
      %p217 = scmp.lt.s32.totalorder %s216, 197
      %s218 = scalar_select %p217, %s216, 197
      %s219 = smul.addr %s218, 2
      %s220 = smul.addr %s219, 8
      %s221 = scalar_lea.vmem %s3, %s220
      %s222 = smul.u32 99, %s14
      %v223 = vld [vmem:[%s202] sm:$0xff]
      %v224 = vld [vmem:[%s202 + $0x8] sm:$0xff]
      %v225 = vld [vmem:[%s202 + $0x10] sm:$0xff]
      %v226 = vld [vmem:[%s202 + $0x18] sm:$0xff]
      %v227 = vld [vmem:[%s202 + $0x20] sm:$0xff]
      %v228 = vld [vmem:[%s202 + $0x28] sm:$0xff]
      %v229 = vld [vmem:[%s202 + $0x30] sm:$0xff]
      %v230 = vld [vmem:[%s202 + $0x38] sm:$0xff]
      %v231 = vld [vmem:[%s202 + $0x40] sm:$0xff]
      %v232 = vld [vmem:[%s202 + $0x48] sm:$0xff]
      %v233 = vld [vmem:[%s202 + $0x50] sm:$0xff]
      %v234 = vld [vmem:[%s202 + $0x58] sm:$0xff]
      %v235 = vld [vmem:[%s202 + $0x60] sm:$0xff]
      %v236 = vld [vmem:[%s202 + $0x68] sm:$0xff]
      %v237 = vld [vmem:[%s202 + $0x70] sm:$0xff]
      %v238 = vld [vmem:[%s202 + $0x78] sm:$0xff]
      %v239 = vld [vmem:[%s202 + $0x80] sm:$0xff]
      %v240 = vld [vmem:[%s202 + $0x88] sm:$0xff]
      %v241 = vld [vmem:[%s202 + $0x90] sm:$0xff]
      %v242 = vld [vmem:[%s202 + $0x98] sm:$0xff]
      %v243 = vld [vmem:[%s202 + $0xa0] sm:$0xff]
      %v244 = vld [vmem:[%s202 + $0xa8] sm:$0xff]
      %v245 = vld [vmem:[%s202 + $0xb0] sm:$0xff]
      %v246 = vld [vmem:[%s202 + $0xb8] sm:$0xff]
      %v247 = vld [vmem:[%s202 + $0xc0] sm:$0xff]
      %v248 = vld [vmem:[%s202 + $0xc8] sm:$0xff]
      %v249 = vld [vmem:[%s202 + $0xd0] sm:$0xff]
      %v250 = vld [vmem:[%s202 + $0xd8] sm:$0xff]
      %v251 = vld [vmem:[%s202 + $0xe0] sm:$0xff]
      %v252 = vld [vmem:[%s202 + $0xe8] sm:$0xff]
      %v253 = vld [vmem:[%s202 + $0xf0] sm:$0xff]
      %v254 = vld [vmem:[%s202 + $0xf8] sm:$0xff]
      %v255 = vld [vmem:[%s202 + $0x100] sm:$0xff]
      %v256 = vld [vmem:[%s202 + $0x108] sm:$0xff]
      %v257 = vld [vmem:[%s202 + $0x110] sm:$0xff]
      %v258 = vld [vmem:[%s202 + $0x118] sm:$0xff]
      %v259 = vld [vmem:[%s202 + $0x120] sm:$0xff]
      %v260 = vld [vmem:[%s202 + $0x128] sm:$0xff]
      %v261 = vld [vmem:[%s202 + $0x130] sm:$0xff]
      %v262 = vld [vmem:[%s202 + $0x138] sm:$0xff]
      %v263 = vld [vmem:[%s202 + $0x140] sm:$0xff]
      %v264 = vld [vmem:[%s202 + $0x148] sm:$0xff]
      %v265 = vld [vmem:[%s202 + $0x150] sm:$0xff]
      %v266 = vld [vmem:[%s202 + $0x158] sm:$0xff]
      %v267 = vld [vmem:[%s202 + $0x160] sm:$0xff]
      %v268 = vld [vmem:[%s202 + $0x168] sm:$0xff]
      %v269 = vld [vmem:[%s202 + $0x170] sm:$0xff]
      %v270 = vld [vmem:[%s202 + $0x178] sm:$0xff]
      %v271 = vld [vmem:[%s202 + $0x180] sm:$0xff]
      %v272 = vld [vmem:[%s202 + $0x188] sm:$0xff]
      %v273 = vld [vmem:[%s202 + $0x190] sm:$0xff]
      %v274 = vld [vmem:[%s202 + $0x198] sm:$0xff]
      %v275 = vld [vmem:[%s202 + $0x1a0] sm:$0xff]
      %v276 = vld [vmem:[%s202 + $0x1a8] sm:$0xff]
      %v277 = vld [vmem:[%s202 + $0x1b0] sm:$0xff]
      %v278 = vld [vmem:[%s202 + $0x1b8] sm:$0xff]
      %v279 = vld [vmem:[%s202 + $0x1c0] sm:$0xff]
      %v280 = vld [vmem:[%s202 + $0x1c8] sm:$0xff]
      %v281 = vld [vmem:[%s202 + $0x1d0] sm:$0xff]
      %v282 = vld [vmem:[%s202 + $0x1d8] sm:$0xff]
      %v283 = vld [vmem:[%s202 + $0x1e0] sm:$0xff]
      %v284 = vld [vmem:[%s202 + $0x1e8] sm:$0xff]
      %v285 = vld [vmem:[%s202 + $0x1f0] sm:$0xff]
      %v286 = vld [vmem:[%s202 + $0x1f8] sm:$0xff]
      %v287 = vld [vmem:[%s202 + $0x200] sm:$0xff]
      %v288 = vld [vmem:[%s202 + $0x208] sm:$0xff]
      %v289 = vld [vmem:[%s202 + $0x210] sm:$0xff]
      %v290 = vld [vmem:[%s202 + $0x218] sm:$0xff]
      %v291 = vld [vmem:[%s202 + $0x220] sm:$0xff]
      %v292 = vld [vmem:[%s202 + $0x228] sm:$0xff]
      %v293 = vld [vmem:[%s202 + $0x230] sm:$0xff]
      %v294 = vld [vmem:[%s202 + $0x238] sm:$0xff]
      %v295 = vld [vmem:[%s202 + $0x240] sm:$0xff]
      %v296 = vld [vmem:[%s202 + $0x248] sm:$0xff]
      %v297 = vld [vmem:[%s202 + $0x250] sm:$0xff]
      %v298 = vld [vmem:[%s202 + $0x258] sm:$0xff]
      %v299 = vld [vmem:[%s202 + $0x260] sm:$0xff]
      %v300 = vld [vmem:[%s202 + $0x268] sm:$0xff]
      %v301 = vld [vmem:[%s202 + $0x270] sm:$0xff]
      %v302 = vld [vmem:[%s202 + $0x278] sm:$0xff]
      %v303 = vld [vmem:[%s202 + $0x280] sm:$0xff]
      %v304 = vld [vmem:[%s202 + $0x288] sm:$0xff]
      %v305 = vld [vmem:[%s202 + $0x290] sm:$0xff]
      %v306 = vld [vmem:[%s202 + $0x298] sm:$0xff]
      %v307 = vld [vmem:[%s202 + $0x2a0] sm:$0xff]
      %v308 = vld [vmem:[%s202 + $0x2a8] sm:$0xff]
      %v309 = vld [vmem:[%s202 + $0x2b0] sm:$0xff]
      %v310 = vld [vmem:[%s202 + $0x2b8] sm:$0xff]
      %v311 = vld [vmem:[%s202 + $0x2c0] sm:$0xff]
      %v312 = vld [vmem:[%s202 + $0x2c8] sm:$0xff]
      %v313 = vld [vmem:[%s202 + $0x2d0] sm:$0xff]
      %v314 = vld [vmem:[%s202 + $0x2d8] sm:$0xff]
      %v315 = vld [vmem:[%s202 + $0x2e0] sm:$0xff]
      %v316 = vld [vmem:[%s202 + $0x2e8] sm:$0xff]
      %v317 = vld [vmem:[%s202 + $0x2f0] sm:$0xff]
      %v318 = vld [vmem:[%s202 + $0x2f8] sm:$0xff]
      %v319 = vld [vmem:[%s202 + $0x300] sm:$0xff]
      %v320 = vld [vmem:[%s202 + $0x308] sm:$0xff]
      %v321 = vld [vmem:[%s202 + $0x310] sm:$0xff]
      %v322 = vld [vmem:[%s202 + $0x318] sm:$0xff]
      %v323 = vld [vmem:[%s202 + $0x320] sm:$0xff]
      %v324 = vld [vmem:[%s202 + $0x328] sm:$0xff]
      %v325 = vld [vmem:[%s202 + $0x330] sm:$0xff]
      %v326 = vld [vmem:[%s202 + $0x338] sm:$0xff]
      %v327 = vld [vmem:[%s202 + $0x340] sm:$0xff]
      %v328 = vld [vmem:[%s202 + $0x348] sm:$0xff]
      %v329 = vld [vmem:[%s202 + $0x350] sm:$0xff]
      %v330 = vld [vmem:[%s202 + $0x358] sm:$0xff]
      %v331 = vld [vmem:[%s202 + $0x360] sm:$0xff]
      %v332 = vld [vmem:[%s202 + $0x368] sm:$0xff]
      %v333 = vld [vmem:[%s202 + $0x370] sm:$0xff]
      %v334 = vld [vmem:[%s202 + $0x378] sm:$0xff]
      %v335 = vld [vmem:[%s202 + $0x380] sm:$0xff]
      %v336 = vld [vmem:[%s202 + $0x388] sm:$0xff]
      %v337 = vld [vmem:[%s202 + $0x390] sm:$0xff]
      %v338 = vld [vmem:[%s202 + $0x398] sm:$0xff]
      %v339 = vld [vmem:[%s202 + $0x3a0] sm:$0xff]
      %v340 = vld [vmem:[%s202 + $0x3a8] sm:$0xff]
      %v341 = vld [vmem:[%s202 + $0x3b0] sm:$0xff]
      %v342 = vld [vmem:[%s202 + $0x3b8] sm:$0xff]
      %v343 = vld [vmem:[%s202 + $0x3c0] sm:$0xff]
      %v344 = vld [vmem:[%s202 + $0x3c8] sm:$0xff]
      %v345 = vld [vmem:[%s202 + $0x3d0] sm:$0xff]
      %v346 = vld [vmem:[%s202 + $0x3d8] sm:$0xff]
      %v347 = vld [vmem:[%s202 + $0x3e0] sm:$0xff]
      %v348 = vld [vmem:[%s202 + $0x3e8] sm:$0xff]
      %v349 = vld [vmem:[%s202 + $0x3f0] sm:$0xff]
      %v350 = vld [vmem:[%s202 + $0x3f8] sm:$0xff]
      %v351 = vld [vmem:[%s202 + $0x400] sm:$0xff]
      %v352 = vld [vmem:[%s202 + $0x408] sm:$0xff]
      %v353 = vld [vmem:[%s202 + $0x410] sm:$0xff]
      %v354 = vld [vmem:[%s202 + $0x418] sm:$0xff]
      %v355 = vld [vmem:[%s202 + $0x420] sm:$0xff]
      %v356 = vld [vmem:[%s202 + $0x428] sm:$0xff]
      %v357 = vld [vmem:[%s202 + $0x430] sm:$0xff]
      %v358 = vld [vmem:[%s202 + $0x438] sm:$0xff]
      %v359 = vld [vmem:[%s202 + $0x440] sm:$0xff]
      %v360 = vld [vmem:[%s202 + $0x448] sm:$0xff]
      %v361 = vld [vmem:[%s202 + $0x450] sm:$0xff]
      %v362 = vld [vmem:[%s202 + $0x458] sm:$0xff]
      %v363 = vld [vmem:[%s202 + $0x460] sm:$0xff]
      %v364 = vld [vmem:[%s202 + $0x468] sm:$0xff]
      %v365 = vld [vmem:[%s202 + $0x470] sm:$0xff]
      %v366 = vld [vmem:[%s202 + $0x478] sm:$0xff]
      %v367 = vld [vmem:[%s202 + $0x480] sm:$0xff]
      %v368 = vld [vmem:[%s202 + $0x488] sm:$0xff]
      %v369 = vld [vmem:[%s202 + $0x490] sm:$0xff]
      %v370 = vld [vmem:[%s202 + $0x498] sm:$0xff]
      %v371 = vld [vmem:[%s202 + $0x4a0] sm:$0xff]
      %v372 = vld [vmem:[%s202 + $0x4a8] sm:$0xff]
      %v373 = vld [vmem:[%s202 + $0x4b0] sm:$0xff]
      %v374 = vld [vmem:[%s202 + $0x4b8] sm:$0xff]
      %v375 = vld [vmem:[%s202 + $0x4c0] sm:$0xff]
      %v376 = vld [vmem:[%s202 + $0x4c8] sm:$0xff]
      %v377 = vld [vmem:[%s202 + $0x4d0] sm:$0xff]
      %v378 = vld [vmem:[%s202 + $0x4d8] sm:$0xff]
      %v379 = vld [vmem:[%s202 + $0x4e0] sm:$0xff]
      %v380 = vld [vmem:[%s202 + $0x4e8] sm:$0xff]
      %v381 = vld [vmem:[%s202 + $0x4f0] sm:$0xff]
      %v382 = vld [vmem:[%s202 + $0x4f8] sm:$0xff]
      %v383 = vld [vmem:[%s202 + $0x500] sm:$0xff]
      %v384 = vld [vmem:[%s202 + $0x508] sm:$0xff]
      %v385 = vld [vmem:[%s202 + $0x510] sm:$0xff]
      %v386 = vld [vmem:[%s202 + $0x518] sm:$0xff]
      %v387 = vld [vmem:[%s202 + $0x520] sm:$0xff]
      %v388 = vld [vmem:[%s202 + $0x528] sm:$0xff]
      %v389 = vld [vmem:[%s202 + $0x530] sm:$0xff]
      %v390 = vld [vmem:[%s202 + $0x538] sm:$0xff]
      %v391 = vld [vmem:[%s202 + $0x540] sm:$0xff]
      %v392 = vld [vmem:[%s202 + $0x548] sm:$0xff]
      %v393 = vld [vmem:[%s202 + $0x550] sm:$0xff]
      %v394 = vld [vmem:[%s202 + $0x558] sm:$0xff]
      %v395 = vld [vmem:[%s202 + $0x560] sm:$0xff]
      %v396 = vld [vmem:[%s202 + $0x568] sm:$0xff]
      %v397 = vld [vmem:[%s202 + $0x570] sm:$0xff]
      %v398 = vld [vmem:[%s202 + $0x578] sm:$0xff]
      %v399 = vld [vmem:[%s202 + $0x580] sm:$0xff]
      %v400 = vld [vmem:[%s202 + $0x588] sm:$0xff]
      %v401 = vld [vmem:[%s202 + $0x590] sm:$0xff]
      %v402 = vld [vmem:[%s202 + $0x598] sm:$0xff]
      %v403 = vld [vmem:[%s202 + $0x5a0] sm:$0xff]
      %v404 = vld [vmem:[%s202 + $0x5a8] sm:$0xff]
      %v405 = vld [vmem:[%s202 + $0x5b0] sm:$0xff]
      %v406 = vld [vmem:[%s202 + $0x5b8] sm:$0xff]
      %v407 = vld [vmem:[%s202 + $0x5c0] sm:$0xff]
      %v408 = vld [vmem:[%s202 + $0x5c8] sm:$0xff]
      %v409 = vld [vmem:[%s202 + $0x5d0] sm:$0xff]
      %v410 = vld [vmem:[%s202 + $0x5d8] sm:$0xff]
      %v411 = vld [vmem:[%s202 + $0x5e0] sm:$0xff]
      %v412 = vld [vmem:[%s202 + $0x5e8] sm:$0xff]
      %v413 = vld [vmem:[%s202 + $0x5f0] sm:$0xff]
      %v414 = vld [vmem:[%s202 + $0x5f8] sm:$0xff]
      %v415 = vld [vmem:[%s202 + $0x600] sm:$0xff]
      %v416 = vld [vmem:[%s202 + $0x608] sm:$0xff]
      %v417 = vld [vmem:[%s202 + $0x610] sm:$0xff]
      %v418 = vld [vmem:[%s202 + $0x618] sm:$0xff]
      %v419 = vld [vmem:[%s202 + $0x620] sm:$0xff]
      %v420 = vld [vmem:[%s202 + $0x628] sm:$0xff]
      %vm421 = vcmask 556032
      %v422 = vsel %vm421, %v224, 0.0
      %v423 = vadd.f32 %v223, %v422
      %424 = vadd.xlane.f32.xlu0 %v423
      %v425 = vpop.xlane.xlu0 %424
      %v426 = vsel %vm421, %v226, 0.0
      %v427 = vadd.f32 %v225, %v426
      %428 = vadd.xlane.f32.xlu0 %v427
      %v429 = vpop.xlane.xlu0 %428
      %v430 = vsel %vm421, %v228, 0.0
      %v431 = vadd.f32 %v227, %v430
      %432 = vadd.xlane.f32.xlu0 %v431
      %v433 = vpop.xlane.xlu0 %432
      %v434 = vsel %vm421, %v230, 0.0
      %v435 = vadd.f32 %v229, %v434
      %436 = vadd.xlane.f32.xlu0 %v435
      %v437 = vpop.xlane.xlu0 %436
      %v438 = vsel %vm421, %v232, 0.0
      %v439 = vadd.f32 %v231, %v438
      %440 = vadd.xlane.f32.xlu0 %v439
      %v441 = vpop.xlane.xlu0 %440
      %v442 = vsel %vm421, %v234, 0.0
      %v443 = vadd.f32 %v233, %v442
      %444 = vadd.xlane.f32.xlu0 %v443
      %v445 = vpop.xlane.xlu0 %444
      %v446 = vsel %vm421, %v236, 0.0
      %v447 = vadd.f32 %v235, %v446
      %448 = vadd.xlane.f32.xlu0 %v447
      %v449 = vpop.xlane.xlu0 %448
      %v450 = vsel %vm421, %v238, 0.0
      %v451 = vadd.f32 %v237, %v450
      %452 = vadd.xlane.f32.xlu0 %v451
      %v453 = vpop.xlane.xlu0 %452
      %v454 = vsel %vm421, %v240, 0.0
      %v455 = vadd.f32 %v239, %v454
      %456 = vadd.xlane.f32.xlu0 %v455
      %v457 = vpop.xlane.xlu0 %456
      %v458 = vsel %vm421, %v242, 0.0
      %v459 = vadd.f32 %v241, %v458
      %460 = vadd.xlane.f32.xlu0 %v459
      %v461 = vpop.xlane.xlu0 %460
      %v462 = vsel %vm421, %v244, 0.0
      %v463 = vadd.f32 %v243, %v462
      %464 = vadd.xlane.f32.xlu0 %v463
      %v465 = vpop.xlane.xlu0 %464
      %v466 = vsel %vm421, %v246, 0.0
      %v467 = vadd.f32 %v245, %v466
      %468 = vadd.xlane.f32.xlu0 %v467
      %v469 = vpop.xlane.xlu0 %468
      %v470 = vsel %vm421, %v248, 0.0
      %v471 = vadd.f32 %v247, %v470
      %472 = vadd.xlane.f32.xlu0 %v471
      %v473 = vpop.xlane.xlu0 %472
      %v474 = vsel %vm421, %v250, 0.0
      %v475 = vadd.f32 %v249, %v474
      %476 = vadd.xlane.f32.xlu0 %v475
      %v477 = vpop.xlane.xlu0 %476
      %v478 = vsel %vm421, %v252, 0.0
      %v479 = vadd.f32 %v251, %v478
      %480 = vadd.xlane.f32.xlu0 %v479
      %v481 = vpop.xlane.xlu0 %480
      %v482 = vsel %vm421, %v254, 0.0
      %v483 = vadd.f32 %v253, %v482
      %484 = vadd.xlane.f32.xlu0 %v483
      %v485 = vpop.xlane.xlu0 %484
      %v486 = vsel %vm421, %v256, 0.0
      %v487 = vadd.f32 %v255, %v486
      %488 = vadd.xlane.f32.xlu0 %v487
      %v489 = vpop.xlane.xlu0 %488
      %v490 = vsel %vm421, %v258, 0.0
      %v491 = vadd.f32 %v257, %v490
      %492 = vadd.xlane.f32.xlu0 %v491
      %v493 = vpop.xlane.xlu0 %492
      %v494 = vsel %vm421, %v260, 0.0
      %v495 = vadd.f32 %v259, %v494
      %496 = vadd.xlane.f32.xlu0 %v495
      %v497 = vpop.xlane.xlu0 %496
      %v498 = vsel %vm421, %v262, 0.0
      %v499 = vadd.f32 %v261, %v498
      %500 = vadd.xlane.f32.xlu0 %v499
      %v501 = vpop.xlane.xlu0 %500
      %v502 = vsel %vm421, %v264, 0.0
      %v503 = vadd.f32 %v263, %v502
      %504 = vadd.xlane.f32.xlu0 %v503
      %v505 = vpop.xlane.xlu0 %504
      %v506 = vsel %vm421, %v266, 0.0
      %v507 = vadd.f32 %v265, %v506
      %508 = vadd.xlane.f32.xlu0 %v507
      %v509 = vpop.xlane.xlu0 %508
      %v510 = vsel %vm421, %v268, 0.0
      %v511 = vadd.f32 %v267, %v510
      %512 = vadd.xlane.f32.xlu0 %v511
      %v513 = vpop.xlane.xlu0 %512
      %v514 = vsel %vm421, %v270, 0.0
      %v515 = vadd.f32 %v269, %v514
      %516 = vadd.xlane.f32.xlu0 %v515
      %v517 = vpop.xlane.xlu0 %516
      %v518 = vsel %vm421, %v272, 0.0
      %v519 = vadd.f32 %v271, %v518
      %520 = vadd.xlane.f32.xlu0 %v519
      %v521 = vpop.xlane.xlu0 %520
      %v522 = vsel %vm421, %v274, 0.0
      %v523 = vadd.f32 %v273, %v522
      %524 = vadd.xlane.f32.xlu0 %v523
      %v525 = vpop.xlane.xlu0 %524
      %v526 = vsel %vm421, %v276, 0.0
      %v527 = vadd.f32 %v275, %v526
      %528 = vadd.xlane.f32.xlu0 %v527
      %v529 = vpop.xlane.xlu0 %528
      %v530 = vsel %vm421, %v278, 0.0
      %v531 = vadd.f32 %v277, %v530
      %532 = vadd.xlane.f32.xlu0 %v531
      %v533 = vpop.xlane.xlu0 %532
      %v534 = vsel %vm421, %v280, 0.0
      %v535 = vadd.f32 %v279, %v534
      %536 = vadd.xlane.f32.xlu0 %v535
      %v537 = vpop.xlane.xlu0 %536
      %v538 = vsel %vm421, %v282, 0.0
      %v539 = vadd.f32 %v281, %v538
      %540 = vadd.xlane.f32.xlu0 %v539
      %v541 = vpop.xlane.xlu0 %540
      %v542 = vsel %vm421, %v284, 0.0
      %v543 = vadd.f32 %v283, %v542
      %544 = vadd.xlane.f32.xlu0 %v543
      %v545 = vpop.xlane.xlu0 %544
      %v546 = vsel %vm421, %v286, 0.0
      %v547 = vadd.f32 %v285, %v546
      %548 = vadd.xlane.f32.xlu0 %v547
      %v549 = vpop.xlane.xlu0 %548
      %v550 = vsel %vm421, %v288, 0.0
      %v551 = vadd.f32 %v287, %v550
      %552 = vadd.xlane.f32.xlu0 %v551
      %v553 = vpop.xlane.xlu0 %552
      %v554 = vsel %vm421, %v290, 0.0
      %v555 = vadd.f32 %v289, %v554
      %556 = vadd.xlane.f32.xlu0 %v555
      %v557 = vpop.xlane.xlu0 %556
      %v558 = vsel %vm421, %v292, 0.0
      %v559 = vadd.f32 %v291, %v558
      %560 = vadd.xlane.f32.xlu0 %v559
      %v561 = vpop.xlane.xlu0 %560
      %v562 = vsel %vm421, %v294, 0.0
      %v563 = vadd.f32 %v293, %v562
      %564 = vadd.xlane.f32.xlu0 %v563
      %v565 = vpop.xlane.xlu0 %564
      %v566 = vsel %vm421, %v296, 0.0
      %v567 = vadd.f32 %v295, %v566
      %568 = vadd.xlane.f32.xlu0 %v567
      %v569 = vpop.xlane.xlu0 %568
      %v570 = vsel %vm421, %v298, 0.0
      %v571 = vadd.f32 %v297, %v570
      %572 = vadd.xlane.f32.xlu0 %v571
      %v573 = vpop.xlane.xlu0 %572
      %v574 = vsel %vm421, %v300, 0.0
      %v575 = vadd.f32 %v299, %v574
      %576 = vadd.xlane.f32.xlu0 %v575
      %v577 = vpop.xlane.xlu0 %576
      %v578 = vsel %vm421, %v302, 0.0
      %v579 = vadd.f32 %v301, %v578
      %580 = vadd.xlane.f32.xlu0 %v579
      %v581 = vpop.xlane.xlu0 %580
      %v582 = vsel %vm421, %v304, 0.0
      %v583 = vadd.f32 %v303, %v582
      %584 = vadd.xlane.f32.xlu0 %v583
      %v585 = vpop.xlane.xlu0 %584
      %v586 = vsel %vm421, %v306, 0.0
      %v587 = vadd.f32 %v305, %v586
      %588 = vadd.xlane.f32.xlu0 %v587
      %v589 = vpop.xlane.xlu0 %588
      %v590 = vsel %vm421, %v308, 0.0
      %v591 = vadd.f32 %v307, %v590
      %592 = vadd.xlane.f32.xlu0 %v591
      %v593 = vpop.xlane.xlu0 %592
      %v594 = vsel %vm421, %v310, 0.0
      %v595 = vadd.f32 %v309, %v594
      %596 = vadd.xlane.f32.xlu0 %v595
      %v597 = vpop.xlane.xlu0 %596
      %v598 = vsel %vm421, %v312, 0.0
      %v599 = vadd.f32 %v311, %v598
      %600 = vadd.xlane.f32.xlu0 %v599
      %v601 = vpop.xlane.xlu0 %600
      %v602 = vsel %vm421, %v314, 0.0
      %v603 = vadd.f32 %v313, %v602
      %604 = vadd.xlane.f32.xlu0 %v603
      %v605 = vpop.xlane.xlu0 %604
      %v606 = vsel %vm421, %v316, 0.0
      %v607 = vadd.f32 %v315, %v606
      %608 = vadd.xlane.f32.xlu0 %v607
      %v609 = vpop.xlane.xlu0 %608
      %v610 = vsel %vm421, %v318, 0.0
      %v611 = vadd.f32 %v317, %v610
      %612 = vadd.xlane.f32.xlu0 %v611
      %v613 = vpop.xlane.xlu0 %612
      %v614 = vsel %vm421, %v320, 0.0
      %v615 = vadd.f32 %v319, %v614
      %616 = vadd.xlane.f32.xlu0 %v615
      %v617 = vpop.xlane.xlu0 %616
      %v618 = vsel %vm421, %v322, 0.0
      %v619 = vadd.f32 %v321, %v618
      %620 = vadd.xlane.f32.xlu0 %v619
      %v621 = vpop.xlane.xlu0 %620
      %v622 = vsel %vm421, %v324, 0.0
      %v623 = vadd.f32 %v323, %v622
      %624 = vadd.xlane.f32.xlu0 %v623
      %v625 = vpop.xlane.xlu0 %624
      %v626 = vsel %vm421, %v326, 0.0
      %v627 = vadd.f32 %v325, %v626
      %628 = vadd.xlane.f32.xlu0 %v627
      %v629 = vpop.xlane.xlu0 %628
      %v630 = vsel %vm421, %v328, 0.0
      %v631 = vadd.f32 %v327, %v630
      %632 = vadd.xlane.f32.xlu0 %v631
      %v633 = vpop.xlane.xlu0 %632
      %v634 = vsel %vm421, %v330, 0.0
      %v635 = vadd.f32 %v329, %v634
      %636 = vadd.xlane.f32.xlu0 %v635
      %v637 = vpop.xlane.xlu0 %636
      %v638 = vsel %vm421, %v332, 0.0
      %v639 = vadd.f32 %v331, %v638
      %640 = vadd.xlane.f32.xlu0 %v639
      %v641 = vpop.xlane.xlu0 %640
      %v642 = vsel %vm421, %v334, 0.0
      %v643 = vadd.f32 %v333, %v642
      %644 = vadd.xlane.f32.xlu0 %v643
      %v645 = vpop.xlane.xlu0 %644
      %v646 = vsel %vm421, %v336, 0.0
      %v647 = vadd.f32 %v335, %v646
      %648 = vadd.xlane.f32.xlu0 %v647
      %v649 = vpop.xlane.xlu0 %648
      %v650 = vsel %vm421, %v338, 0.0
      %v651 = vadd.f32 %v337, %v650
      %652 = vadd.xlane.f32.xlu0 %v651
      %v653 = vpop.xlane.xlu0 %652
      %v654 = vsel %vm421, %v340, 0.0
      %v655 = vadd.f32 %v339, %v654
      %656 = vadd.xlane.f32.xlu0 %v655
      %v657 = vpop.xlane.xlu0 %656
      %v658 = vsel %vm421, %v342, 0.0
      %v659 = vadd.f32 %v341, %v658
      %660 = vadd.xlane.f32.xlu0 %v659
      %v661 = vpop.xlane.xlu0 %660
      %v662 = vsel %vm421, %v344, 0.0
      %v663 = vadd.f32 %v343, %v662
      %664 = vadd.xlane.f32.xlu0 %v663
      %v665 = vpop.xlane.xlu0 %664
      %v666 = vsel %vm421, %v346, 0.0
      %v667 = vadd.f32 %v345, %v666
      %668 = vadd.xlane.f32.xlu0 %v667
      %v669 = vpop.xlane.xlu0 %668
      %v670 = vsel %vm421, %v348, 0.0
      %v671 = vadd.f32 %v347, %v670
      %672 = vadd.xlane.f32.xlu0 %v671
      %v673 = vpop.xlane.xlu0 %672
      %v674 = vsel %vm421, %v350, 0.0
      %v675 = vadd.f32 %v349, %v674
      %676 = vadd.xlane.f32.xlu0 %v675
      %v677 = vpop.xlane.xlu0 %676
      %v678 = vsel %vm421, %v352, 0.0
      %v679 = vadd.f32 %v351, %v678
      %680 = vadd.xlane.f32.xlu0 %v679
      %v681 = vpop.xlane.xlu0 %680
      %v682 = vsel %vm421, %v354, 0.0
      %v683 = vadd.f32 %v353, %v682
      %684 = vadd.xlane.f32.xlu0 %v683
      %v685 = vpop.xlane.xlu0 %684
      %v686 = vsel %vm421, %v356, 0.0
      %v687 = vadd.f32 %v355, %v686
      %688 = vadd.xlane.f32.xlu0 %v687
      %v689 = vpop.xlane.xlu0 %688
      %v690 = vsel %vm421, %v358, 0.0
      %v691 = vadd.f32 %v357, %v690
      %692 = vadd.xlane.f32.xlu0 %v691
      %v693 = vpop.xlane.xlu0 %692
      %v694 = vsel %vm421, %v360, 0.0
      %v695 = vadd.f32 %v359, %v694
      %696 = vadd.xlane.f32.xlu0 %v695
      %v697 = vpop.xlane.xlu0 %696
      %v698 = vsel %vm421, %v362, 0.0
      %v699 = vadd.f32 %v361, %v698
      %700 = vadd.xlane.f32.xlu0 %v699
      %v701 = vpop.xlane.xlu0 %700
      %v702 = vsel %vm421, %v364, 0.0
      %v703 = vadd.f32 %v363, %v702
      %704 = vadd.xlane.f32.xlu0 %v703
      %v705 = vpop.xlane.xlu0 %704
      %v706 = vsel %vm421, %v366, 0.0
      %v707 = vadd.f32 %v365, %v706
      %708 = vadd.xlane.f32.xlu0 %v707
      %v709 = vpop.xlane.xlu0 %708
      %v710 = vsel %vm421, %v368, 0.0
      %v711 = vadd.f32 %v367, %v710
      %712 = vadd.xlane.f32.xlu0 %v711
      %v713 = vpop.xlane.xlu0 %712
      %v714 = vsel %vm421, %v370, 0.0
      %v715 = vadd.f32 %v369, %v714
      %716 = vadd.xlane.f32.xlu0 %v715
      %v717 = vpop.xlane.xlu0 %716
      %v718 = vsel %vm421, %v372, 0.0
      %v719 = vadd.f32 %v371, %v718
      %720 = vadd.xlane.f32.xlu0 %v719
      %v721 = vpop.xlane.xlu0 %720
      %v722 = vsel %vm421, %v374, 0.0
      %v723 = vadd.f32 %v373, %v722
      %724 = vadd.xlane.f32.xlu0 %v723
      %v725 = vpop.xlane.xlu0 %724
      %v726 = vsel %vm421, %v376, 0.0
      %v727 = vadd.f32 %v375, %v726
      %728 = vadd.xlane.f32.xlu0 %v727
      %v729 = vpop.xlane.xlu0 %728
      %v730 = vsel %vm421, %v378, 0.0
      %v731 = vadd.f32 %v377, %v730
      %732 = vadd.xlane.f32.xlu0 %v731
      %v733 = vpop.xlane.xlu0 %732
      %v734 = vsel %vm421, %v380, 0.0
      %v735 = vadd.f32 %v379, %v734
      %736 = vadd.xlane.f32.xlu0 %v735
      %v737 = vpop.xlane.xlu0 %736
      %v738 = vsel %vm421, %v382, 0.0
      %v739 = vadd.f32 %v381, %v738
      %740 = vadd.xlane.f32.xlu0 %v739
      %v741 = vpop.xlane.xlu0 %740
      %v742 = vsel %vm421, %v384, 0.0
      %v743 = vadd.f32 %v383, %v742
      %744 = vadd.xlane.f32.xlu0 %v743
      %v745 = vpop.xlane.xlu0 %744
      %v746 = vsel %vm421, %v386, 0.0
      %v747 = vadd.f32 %v385, %v746
      %748 = vadd.xlane.f32.xlu0 %v747
      %v749 = vpop.xlane.xlu0 %748
      %v750 = vsel %vm421, %v388, 0.0
      %v751 = vadd.f32 %v387, %v750
      %752 = vadd.xlane.f32.xlu0 %v751
      %v753 = vpop.xlane.xlu0 %752
      %v754 = vsel %vm421, %v390, 0.0
      %v755 = vadd.f32 %v389, %v754
      %756 = vadd.xlane.f32.xlu0 %v755
      %v757 = vpop.xlane.xlu0 %756
      %v758 = vsel %vm421, %v392, 0.0
      %v759 = vadd.f32 %v391, %v758
      %760 = vadd.xlane.f32.xlu0 %v759
      %v761 = vpop.xlane.xlu0 %760
      %v762 = vsel %vm421, %v394, 0.0
      %v763 = vadd.f32 %v393, %v762
      %764 = vadd.xlane.f32.xlu0 %v763
      %v765 = vpop.xlane.xlu0 %764
      %v766 = vsel %vm421, %v396, 0.0
      %v767 = vadd.f32 %v395, %v766
      %768 = vadd.xlane.f32.xlu0 %v767
      %v769 = vpop.xlane.xlu0 %768
      %v770 = vsel %vm421, %v398, 0.0
      %v771 = vadd.f32 %v397, %v770
      %772 = vadd.xlane.f32.xlu0 %v771
      %v773 = vpop.xlane.xlu0 %772
      %v774 = vsel %vm421, %v400, 0.0
      %v775 = vadd.f32 %v399, %v774
      %776 = vadd.xlane.f32.xlu0 %v775
      %v777 = vpop.xlane.xlu0 %776
      %v778 = vsel %vm421, %v402, 0.0
      %v779 = vadd.f32 %v401, %v778
      %780 = vadd.xlane.f32.xlu0 %v779
      %v781 = vpop.xlane.xlu0 %780
      %v782 = vsel %vm421, %v404, 0.0
      %v783 = vadd.f32 %v403, %v782
      %784 = vadd.xlane.f32.xlu0 %v783
      %v785 = vpop.xlane.xlu0 %784
      %v786 = vsel %vm421, %v406, 0.0
      %v787 = vadd.f32 %v405, %v786
      %788 = vadd.xlane.f32.xlu0 %v787
      %v789 = vpop.xlane.xlu0 %788
      %v790 = vsel %vm421, %v408, 0.0
      %v791 = vadd.f32 %v407, %v790
      %792 = vadd.xlane.f32.xlu0 %v791
      %v793 = vpop.xlane.xlu0 %792
      %v794 = vsel %vm421, %v410, 0.0
      %v795 = vadd.f32 %v409, %v794
      %796 = vadd.xlane.f32.xlu0 %v795
      %v797 = vpop.xlane.xlu0 %796
      %v798 = vsel %vm421, %v412, 0.0
      %v799 = vadd.f32 %v411, %v798
      %800 = vadd.xlane.f32.xlu0 %v799
      %v801 = vpop.xlane.xlu0 %800
      %v802 = vsel %vm421, %v414, 0.0
      %v803 = vadd.f32 %v413, %v802
      %804 = vadd.xlane.f32.xlu0 %v803
      %v805 = vpop.xlane.xlu0 %804
      %v806 = vsel %vm421, %v416, 0.0
      %v807 = vadd.f32 %v415, %v806
      %808 = vadd.xlane.f32.xlu0 %v807
      %v809 = vpop.xlane.xlu0 %808
      %v810 = vsel %vm421, %v418, 0.0
      %v811 = vadd.f32 %v417, %v810
      %812 = vadd.xlane.f32.xlu0 %v811
      %v813 = vpop.xlane.xlu0 %812
      %v814 = vsel %vm421, %v420, 0.0
      %v815 = vadd.f32 %v419, %v814
      %816 = vadd.xlane.f32.xlu0 %v815
      %v817 = vpop.xlane.xlu0 %816
      %v818 = vmul.f32 %v223, %v223
      %v819 = vmul.f32 %v224, %v224
      %v820 = vmul.f32 %v225, %v225
      %v821 = vmul.f32 %v226, %v226
      %v822 = vmul.f32 %v227, %v227
      %v823 = vmul.f32 %v228, %v228
      %v824 = vmul.f32 %v229, %v229
      %v825 = vmul.f32 %v230, %v230
      %v826 = vmul.f32 %v231, %v231
      %v827 = vmul.f32 %v232, %v232
      %v828 = vmul.f32 %v233, %v233
      %v829 = vmul.f32 %v234, %v234
      %v830 = vmul.f32 %v235, %v235
      %v831 = vmul.f32 %v236, %v236
      %v832 = vmul.f32 %v237, %v237
      %v833 = vmul.f32 %v238, %v238
      %v834 = vmul.f32 %v239, %v239
      %v835 = vmul.f32 %v240, %v240
      %v836 = vmul.f32 %v241, %v241
      %v837 = vmul.f32 %v242, %v242
      %v838 = vmul.f32 %v243, %v243
      %v839 = vmul.f32 %v244, %v244
      %v840 = vmul.f32 %v245, %v245
      %v841 = vmul.f32 %v246, %v246
      %v842 = vmul.f32 %v247, %v247
      %v843 = vmul.f32 %v248, %v248
      %v844 = vmul.f32 %v249, %v249
      %v845 = vmul.f32 %v250, %v250
      %v846 = vmul.f32 %v251, %v251
      %v847 = vmul.f32 %v252, %v252
      %v848 = vmul.f32 %v253, %v253
      %v849 = vmul.f32 %v254, %v254
      %v850 = vmul.f32 %v255, %v255
      %v851 = vmul.f32 %v256, %v256
      %v852 = vmul.f32 %v257, %v257
      %v853 = vmul.f32 %v258, %v258
      %v854 = vmul.f32 %v259, %v259
      %v855 = vmul.f32 %v260, %v260
      %v856 = vmul.f32 %v261, %v261
      %v857 = vmul.f32 %v262, %v262
      %v858 = vmul.f32 %v263, %v263
      %v859 = vmul.f32 %v264, %v264
      %v860 = vmul.f32 %v265, %v265
      %v861 = vmul.f32 %v266, %v266
      %v862 = vmul.f32 %v267, %v267
      %v863 = vmul.f32 %v268, %v268
      %v864 = vmul.f32 %v269, %v269
      %v865 = vmul.f32 %v270, %v270
      %v866 = vmul.f32 %v271, %v271
      %v867 = vmul.f32 %v272, %v272
      %v868 = vmul.f32 %v273, %v273
      %v869 = vmul.f32 %v274, %v274
      %v870 = vmul.f32 %v275, %v275
      %v871 = vmul.f32 %v276, %v276
      %v872 = vmul.f32 %v277, %v277
      %v873 = vmul.f32 %v278, %v278
      %v874 = vmul.f32 %v279, %v279
      %v875 = vmul.f32 %v280, %v280
      %v876 = vmul.f32 %v281, %v281
      %v877 = vmul.f32 %v282, %v282
      %v878 = vmul.f32 %v283, %v283
      %v879 = vmul.f32 %v284, %v284
      %v880 = vmul.f32 %v285, %v285
      %v881 = vmul.f32 %v286, %v286
      %v882 = vmul.f32 %v287, %v287
      %v883 = vmul.f32 %v288, %v288
      %v884 = vmul.f32 %v289, %v289
      %v885 = vmul.f32 %v290, %v290
      %v886 = vmul.f32 %v291, %v291
      %v887 = vmul.f32 %v292, %v292
      %v888 = vmul.f32 %v293, %v293
      %v889 = vmul.f32 %v294, %v294
      %v890 = vmul.f32 %v295, %v295
      %v891 = vmul.f32 %v296, %v296
      %v892 = vmul.f32 %v297, %v297
      %v893 = vmul.f32 %v298, %v298
      %v894 = vmul.f32 %v299, %v299
      %v895 = vmul.f32 %v300, %v300
      %v896 = vmul.f32 %v301, %v301
      %v897 = vmul.f32 %v302, %v302
      %v898 = vmul.f32 %v303, %v303
      %v899 = vmul.f32 %v304, %v304
      %v900 = vmul.f32 %v305, %v305
      %v901 = vmul.f32 %v306, %v306
      %v902 = vmul.f32 %v307, %v307
      %v903 = vmul.f32 %v308, %v308
      %v904 = vmul.f32 %v309, %v309
      %v905 = vmul.f32 %v310, %v310
      %v906 = vmul.f32 %v311, %v311
      %v907 = vmul.f32 %v312, %v312
      %v908 = vmul.f32 %v313, %v313
      %v909 = vmul.f32 %v314, %v314
      %v910 = vmul.f32 %v315, %v315
      %v911 = vmul.f32 %v316, %v316
      %v912 = vmul.f32 %v317, %v317
      %v913 = vmul.f32 %v318, %v318
      %v914 = vmul.f32 %v319, %v319
      %v915 = vmul.f32 %v320, %v320
      %v916 = vmul.f32 %v321, %v321
      %v917 = vmul.f32 %v322, %v322
      %v918 = vmul.f32 %v323, %v323
      %v919 = vmul.f32 %v324, %v324
      %v920 = vmul.f32 %v325, %v325
      %v921 = vmul.f32 %v326, %v326
      %v922 = vmul.f32 %v327, %v327
      %v923 = vmul.f32 %v328, %v328
      %v924 = vmul.f32 %v329, %v329
      %v925 = vmul.f32 %v330, %v330
      %v926 = vmul.f32 %v331, %v331
      %v927 = vmul.f32 %v332, %v332
      %v928 = vmul.f32 %v333, %v333
      %v929 = vmul.f32 %v334, %v334
      %v930 = vmul.f32 %v335, %v335
      %v931 = vmul.f32 %v336, %v336
      %v932 = vmul.f32 %v337, %v337
      %v933 = vmul.f32 %v338, %v338
      %v934 = vmul.f32 %v339, %v339
      %v935 = vmul.f32 %v340, %v340
      %v936 = vmul.f32 %v341, %v341
      %v937 = vmul.f32 %v342, %v342
      %v938 = vmul.f32 %v343, %v343
      %v939 = vmul.f32 %v344, %v344
      %v940 = vmul.f32 %v345, %v345
      %v941 = vmul.f32 %v346, %v346
      %v942 = vmul.f32 %v347, %v347
      %v943 = vmul.f32 %v348, %v348
      %v944 = vmul.f32 %v349, %v349
      %v945 = vmul.f32 %v350, %v350
      %v946 = vmul.f32 %v351, %v351
      %v947 = vmul.f32 %v352, %v352
      %v948 = vmul.f32 %v353, %v353
      %v949 = vmul.f32 %v354, %v354
      %v950 = vmul.f32 %v355, %v355
      %v951 = vmul.f32 %v356, %v356
      %v952 = vmul.f32 %v357, %v357
      %v953 = vmul.f32 %v358, %v358
      %v954 = vmul.f32 %v359, %v359
      %v955 = vmul.f32 %v360, %v360
      %v956 = vmul.f32 %v361, %v361
      %v957 = vmul.f32 %v362, %v362
      %v958 = vmul.f32 %v363, %v363
      %v959 = vmul.f32 %v364, %v364
      %v960 = vmul.f32 %v365, %v365
      %v961 = vmul.f32 %v366, %v366
      %v962 = vmul.f32 %v367, %v367
      %v963 = vmul.f32 %v368, %v368
      %v964 = vmul.f32 %v369, %v369
      %v965 = vmul.f32 %v370, %v370
      %v966 = vmul.f32 %v371, %v371
      %v967 = vmul.f32 %v372, %v372
      %v968 = vmul.f32 %v373, %v373
      %v969 = vmul.f32 %v374, %v374
      %v970 = vmul.f32 %v375, %v375
      %v971 = vmul.f32 %v376, %v376
      %v972 = vmul.f32 %v377, %v377
      %v973 = vmul.f32 %v378, %v378
      %v974 = vmul.f32 %v379, %v379
      %v975 = vmul.f32 %v380, %v380
      %v976 = vmul.f32 %v381, %v381
      %v977 = vmul.f32 %v382, %v382
      %v978 = vmul.f32 %v383, %v383
      %v979 = vmul.f32 %v384, %v384
      %v980 = vmul.f32 %v385, %v385
      %v981 = vmul.f32 %v386, %v386
      %v982 = vmul.f32 %v387, %v387
      %v983 = vmul.f32 %v388, %v388
      %v984 = vmul.f32 %v389, %v389
      %v985 = vmul.f32 %v390, %v390
      %v986 = vmul.f32 %v391, %v391
      %v987 = vmul.f32 %v392, %v392
      %v988 = vmul.f32 %v393, %v393
      %v989 = vmul.f32 %v394, %v394
      %v990 = vmul.f32 %v395, %v395
      %v991 = vmul.f32 %v396, %v396
      %v992 = vmul.f32 %v397, %v397
      %v993 = vmul.f32 %v398, %v398
      %v994 = vmul.f32 %v399, %v399
      %v995 = vmul.f32 %v400, %v400
      %v996 = vmul.f32 %v401, %v401
      %v997 = vmul.f32 %v402, %v402
      %v998 = vmul.f32 %v403, %v403
      %v999 = vmul.f32 %v404, %v404
      %v1000 = vmul.f32 %v405, %v405
      %v1001 = vmul.f32 %v406, %v406
      %v1002 = vmul.f32 %v407, %v407
      %v1003 = vmul.f32 %v408, %v408
      %v1004 = vmul.f32 %v409, %v409
      %v1005 = vmul.f32 %v410, %v410
      %v1006 = vmul.f32 %v411, %v411
      %v1007 = vmul.f32 %v412, %v412
      %v1008 = vmul.f32 %v413, %v413
      %v1009 = vmul.f32 %v414, %v414
      %v1010 = vmul.f32 %v415, %v415
      %v1011 = vmul.f32 %v416, %v416
      %v1012 = vmul.f32 %v417, %v417
      %v1013 = vmul.f32 %v418, %v418
      %v1014 = vmul.f32 %v419, %v419
      %v1015 = vmul.f32 %v420, %v420
      %v1016 = vsel %vm421, %v819, 0.0
      %v1017 = vadd.f32 %v818, %v1016
      %1018 = vadd.xlane.f32.xlu0 %v1017
      %v1019 = vpop.xlane.xlu0 %1018
      %v1020 = vsel %vm421, %v821, 0.0
      %v1021 = vadd.f32 %v820, %v1020
      %1022 = vadd.xlane.f32.xlu0 %v1021
      %v1023 = vpop.xlane.xlu0 %1022
      %v1024 = vsel %vm421, %v823, 0.0
      %v1025 = vadd.f32 %v822, %v1024
      %1026 = vadd.xlane.f32.xlu0 %v1025
      %v1027 = vpop.xlane.xlu0 %1026
      %v1028 = vsel %vm421, %v825, 0.0
      %v1029 = vadd.f32 %v824, %v1028
      %1030 = vadd.xlane.f32.xlu0 %v1029
      %v1031 = vpop.xlane.xlu0 %1030
      %v1032 = vsel %vm421, %v827, 0.0
      %v1033 = vadd.f32 %v826, %v1032
      %1034 = vadd.xlane.f32.xlu0 %v1033
      %v1035 = vpop.xlane.xlu0 %1034
      %v1036 = vsel %vm421, %v829, 0.0
      %v1037 = vadd.f32 %v828, %v1036
      %1038 = vadd.xlane.f32.xlu0 %v1037
      %v1039 = vpop.xlane.xlu0 %1038
      %v1040 = vsel %vm421, %v831, 0.0
      %v1041 = vadd.f32 %v830, %v1040
      %1042 = vadd.xlane.f32.xlu0 %v1041
      %v1043 = vpop.xlane.xlu0 %1042
      %v1044 = vsel %vm421, %v833, 0.0
      %v1045 = vadd.f32 %v832, %v1044
      %1046 = vadd.xlane.f32.xlu0 %v1045
      %v1047 = vpop.xlane.xlu0 %1046
      %v1048 = vsel %vm421, %v835, 0.0
      %v1049 = vadd.f32 %v834, %v1048
      %1050 = vadd.xlane.f32.xlu0 %v1049
      %v1051 = vpop.xlane.xlu0 %1050
      %v1052 = vsel %vm421, %v837, 0.0
      %v1053 = vadd.f32 %v836, %v1052
      %1054 = vadd.xlane.f32.xlu0 %v1053
      %v1055 = vpop.xlane.xlu0 %1054
      %v1056 = vsel %vm421, %v839, 0.0
      %v1057 = vadd.f32 %v838, %v1056
      %1058 = vadd.xlane.f32.xlu0 %v1057
      %v1059 = vpop.xlane.xlu0 %1058
      %v1060 = vsel %vm421, %v841, 0.0
      %v1061 = vadd.f32 %v840, %v1060
      %1062 = vadd.xlane.f32.xlu0 %v1061
      %v1063 = vpop.xlane.xlu0 %1062
      %v1064 = vsel %vm421, %v843, 0.0
      %v1065 = vadd.f32 %v842, %v1064
      %1066 = vadd.xlane.f32.xlu0 %v1065
      %v1067 = vpop.xlane.xlu0 %1066
      %v1068 = vsel %vm421, %v845, 0.0
      %v1069 = vadd.f32 %v844, %v1068
      %1070 = vadd.xlane.f32.xlu0 %v1069
      %v1071 = vpop.xlane.xlu0 %1070
      %v1072 = vsel %vm421, %v847, 0.0
      %v1073 = vadd.f32 %v846, %v1072
      %1074 = vadd.xlane.f32.xlu0 %v1073
      %v1075 = vpop.xlane.xlu0 %1074
      %v1076 = vsel %vm421, %v849, 0.0
      %v1077 = vadd.f32 %v848, %v1076
      %1078 = vadd.xlane.f32.xlu0 %v1077
      %v1079 = vpop.xlane.xlu0 %1078
      %v1080 = vsel %vm421, %v851, 0.0
      %v1081 = vadd.f32 %v850, %v1080
      %1082 = vadd.xlane.f32.xlu0 %v1081
      %v1083 = vpop.xlane.xlu0 %1082
      %v1084 = vsel %vm421, %v853, 0.0
      %v1085 = vadd.f32 %v852, %v1084
      %1086 = vadd.xlane.f32.xlu0 %v1085
      %v1087 = vpop.xlane.xlu0 %1086
      %v1088 = vsel %vm421, %v855, 0.0
      %v1089 = vadd.f32 %v854, %v1088
      %1090 = vadd.xlane.f32.xlu0 %v1089
      %v1091 = vpop.xlane.xlu0 %1090
      %v1092 = vsel %vm421, %v857, 0.0
      %v1093 = vadd.f32 %v856, %v1092
      %1094 = vadd.xlane.f32.xlu0 %v1093
      %v1095 = vpop.xlane.xlu0 %1094
      %v1096 = vsel %vm421, %v859, 0.0
      %v1097 = vadd.f32 %v858, %v1096
      %1098 = vadd.xlane.f32.xlu0 %v1097
      %v1099 = vpop.xlane.xlu0 %1098
      %v1100 = vsel %vm421, %v861, 0.0
      %v1101 = vadd.f32 %v860, %v1100
      %1102 = vadd.xlane.f32.xlu0 %v1101
      %v1103 = vpop.xlane.xlu0 %1102
      %v1104 = vsel %vm421, %v863, 0.0
      %v1105 = vadd.f32 %v862, %v1104
      %1106 = vadd.xlane.f32.xlu0 %v1105
      %v1107 = vpop.xlane.xlu0 %1106
      %v1108 = vsel %vm421, %v865, 0.0
      %v1109 = vadd.f32 %v864, %v1108
      %1110 = vadd.xlane.f32.xlu0 %v1109
      %v1111 = vpop.xlane.xlu0 %1110
      %v1112 = vsel %vm421, %v867, 0.0
      %v1113 = vadd.f32 %v866, %v1112
      %1114 = vadd.xlane.f32.xlu0 %v1113
      %v1115 = vpop.xlane.xlu0 %1114
      %v1116 = vsel %vm421, %v869, 0.0
      %v1117 = vadd.f32 %v868, %v1116
      %1118 = vadd.xlane.f32.xlu0 %v1117
      %v1119 = vpop.xlane.xlu0 %1118
      %v1120 = vsel %vm421, %v871, 0.0
      %v1121 = vadd.f32 %v870, %v1120
      %1122 = vadd.xlane.f32.xlu0 %v1121
      %v1123 = vpop.xlane.xlu0 %1122
      %v1124 = vsel %vm421, %v873, 0.0
      %v1125 = vadd.f32 %v872, %v1124
      %1126 = vadd.xlane.f32.xlu0 %v1125
      %v1127 = vpop.xlane.xlu0 %1126
      %v1128 = vsel %vm421, %v875, 0.0
      %v1129 = vadd.f32 %v874, %v1128
      %1130 = vadd.xlane.f32.xlu0 %v1129
      %v1131 = vpop.xlane.xlu0 %1130
      %v1132 = vsel %vm421, %v877, 0.0
      %v1133 = vadd.f32 %v876, %v1132
      %1134 = vadd.xlane.f32.xlu0 %v1133
      %v1135 = vpop.xlane.xlu0 %1134
      %v1136 = vsel %vm421, %v879, 0.0
      %v1137 = vadd.f32 %v878, %v1136
      %1138 = vadd.xlane.f32.xlu0 %v1137
      %v1139 = vpop.xlane.xlu0 %1138
      %v1140 = vsel %vm421, %v881, 0.0
      %v1141 = vadd.f32 %v880, %v1140
      %1142 = vadd.xlane.f32.xlu0 %v1141
      %v1143 = vpop.xlane.xlu0 %1142
      %v1144 = vsel %vm421, %v883, 0.0
      %v1145 = vadd.f32 %v882, %v1144
      %1146 = vadd.xlane.f32.xlu0 %v1145
      %v1147 = vpop.xlane.xlu0 %1146
      %v1148 = vsel %vm421, %v885, 0.0
      %v1149 = vadd.f32 %v884, %v1148
      %1150 = vadd.xlane.f32.xlu0 %v1149
      %v1151 = vpop.xlane.xlu0 %1150
      %v1152 = vsel %vm421, %v887, 0.0
      %v1153 = vadd.f32 %v886, %v1152
      %1154 = vadd.xlane.f32.xlu0 %v1153
      %v1155 = vpop.xlane.xlu0 %1154
      %v1156 = vsel %vm421, %v889, 0.0
      %v1157 = vadd.f32 %v888, %v1156
      %1158 = vadd.xlane.f32.xlu0 %v1157
      %v1159 = vpop.xlane.xlu0 %1158
      %v1160 = vsel %vm421, %v891, 0.0
      %v1161 = vadd.f32 %v890, %v1160
      %1162 = vadd.xlane.f32.xlu0 %v1161
      %v1163 = vpop.xlane.xlu0 %1162
      %v1164 = vsel %vm421, %v893, 0.0
      %v1165 = vadd.f32 %v892, %v1164
      %1166 = vadd.xlane.f32.xlu0 %v1165
      %v1167 = vpop.xlane.xlu0 %1166
      %v1168 = vsel %vm421, %v895, 0.0
      %v1169 = vadd.f32 %v894, %v1168
      %1170 = vadd.xlane.f32.xlu0 %v1169
      %v1171 = vpop.xlane.xlu0 %1170
      %v1172 = vsel %vm421, %v897, 0.0
      %v1173 = vadd.f32 %v896, %v1172
      %1174 = vadd.xlane.f32.xlu0 %v1173
      %v1175 = vpop.xlane.xlu0 %1174
      %v1176 = vsel %vm421, %v899, 0.0
      %v1177 = vadd.f32 %v898, %v1176
      %1178 = vadd.xlane.f32.xlu0 %v1177
      %v1179 = vpop.xlane.xlu0 %1178
      %v1180 = vsel %vm421, %v901, 0.0
      %v1181 = vadd.f32 %v900, %v1180
      %1182 = vadd.xlane.f32.xlu0 %v1181
      %v1183 = vpop.xlane.xlu0 %1182
      %v1184 = vsel %vm421, %v903, 0.0
      %v1185 = vadd.f32 %v902, %v1184
      %1186 = vadd.xlane.f32.xlu0 %v1185
      %v1187 = vpop.xlane.xlu0 %1186
      %v1188 = vsel %vm421, %v905, 0.0
      %v1189 = vadd.f32 %v904, %v1188
      %1190 = vadd.xlane.f32.xlu0 %v1189
      %v1191 = vpop.xlane.xlu0 %1190
      %v1192 = vsel %vm421, %v907, 0.0
      %v1193 = vadd.f32 %v906, %v1192
      %1194 = vadd.xlane.f32.xlu0 %v1193
      %v1195 = vpop.xlane.xlu0 %1194
      %v1196 = vsel %vm421, %v909, 0.0
      %v1197 = vadd.f32 %v908, %v1196
      %1198 = vadd.xlane.f32.xlu0 %v1197
      %v1199 = vpop.xlane.xlu0 %1198
      %v1200 = vsel %vm421, %v911, 0.0
      %v1201 = vadd.f32 %v910, %v1200
      %1202 = vadd.xlane.f32.xlu0 %v1201
      %v1203 = vpop.xlane.xlu0 %1202
      %v1204 = vsel %vm421, %v913, 0.0
      %v1205 = vadd.f32 %v912, %v1204
      %1206 = vadd.xlane.f32.xlu0 %v1205
      %v1207 = vpop.xlane.xlu0 %1206
      %v1208 = vsel %vm421, %v915, 0.0
      %v1209 = vadd.f32 %v914, %v1208
      %1210 = vadd.xlane.f32.xlu0 %v1209
      %v1211 = vpop.xlane.xlu0 %1210
      %v1212 = vsel %vm421, %v917, 0.0
      %v1213 = vadd.f32 %v916, %v1212
      %1214 = vadd.xlane.f32.xlu0 %v1213
      %v1215 = vpop.xlane.xlu0 %1214
      %v1216 = vsel %vm421, %v919, 0.0
      %v1217 = vadd.f32 %v918, %v1216
      %1218 = vadd.xlane.f32.xlu0 %v1217
      %v1219 = vpop.xlane.xlu0 %1218
      %v1220 = vsel %vm421, %v921, 0.0
      %v1221 = vadd.f32 %v920, %v1220
      %1222 = vadd.xlane.f32.xlu0 %v1221
      %v1223 = vpop.xlane.xlu0 %1222
      %v1224 = vsel %vm421, %v923, 0.0
      %v1225 = vadd.f32 %v922, %v1224
      %1226 = vadd.xlane.f32.xlu0 %v1225
      %v1227 = vpop.xlane.xlu0 %1226
      %v1228 = vsel %vm421, %v925, 0.0
      %v1229 = vadd.f32 %v924, %v1228
      %1230 = vadd.xlane.f32.xlu0 %v1229
      %v1231 = vpop.xlane.xlu0 %1230
      %v1232 = vsel %vm421, %v927, 0.0
      %v1233 = vadd.f32 %v926, %v1232
      %1234 = vadd.xlane.f32.xlu0 %v1233
      %v1235 = vpop.xlane.xlu0 %1234
      %v1236 = vsel %vm421, %v929, 0.0
      %v1237 = vadd.f32 %v928, %v1236
      %1238 = vadd.xlane.f32.xlu0 %v1237
      %v1239 = vpop.xlane.xlu0 %1238
      %v1240 = vsel %vm421, %v931, 0.0
      %v1241 = vadd.f32 %v930, %v1240
      %1242 = vadd.xlane.f32.xlu0 %v1241
      %v1243 = vpop.xlane.xlu0 %1242
      %v1244 = vsel %vm421, %v933, 0.0
      %v1245 = vadd.f32 %v932, %v1244
      %1246 = vadd.xlane.f32.xlu0 %v1245
      %v1247 = vpop.xlane.xlu0 %1246
      %v1248 = vsel %vm421, %v935, 0.0
      %v1249 = vadd.f32 %v934, %v1248
      %1250 = vadd.xlane.f32.xlu0 %v1249
      %v1251 = vpop.xlane.xlu0 %1250
      %v1252 = vsel %vm421, %v937, 0.0
      %v1253 = vadd.f32 %v936, %v1252
      %1254 = vadd.xlane.f32.xlu0 %v1253
      %v1255 = vpop.xlane.xlu0 %1254
      %v1256 = vsel %vm421, %v939, 0.0
      %v1257 = vadd.f32 %v938, %v1256
      %1258 = vadd.xlane.f32.xlu0 %v1257
      %v1259 = vpop.xlane.xlu0 %1258
      %v1260 = vsel %vm421, %v941, 0.0
      %v1261 = vadd.f32 %v940, %v1260
      %1262 = vadd.xlane.f32.xlu0 %v1261
      %v1263 = vpop.xlane.xlu0 %1262
      %v1264 = vsel %vm421, %v943, 0.0
      %v1265 = vadd.f32 %v942, %v1264
      %1266 = vadd.xlane.f32.xlu0 %v1265
      %v1267 = vpop.xlane.xlu0 %1266
      %v1268 = vsel %vm421, %v945, 0.0
      %v1269 = vadd.f32 %v944, %v1268
      %1270 = vadd.xlane.f32.xlu0 %v1269
      %v1271 = vpop.xlane.xlu0 %1270
      %v1272 = vsel %vm421, %v947, 0.0
      %v1273 = vadd.f32 %v946, %v1272
      %1274 = vadd.xlane.f32.xlu0 %v1273
      %v1275 = vpop.xlane.xlu0 %1274
      %v1276 = vsel %vm421, %v949, 0.0
      %v1277 = vadd.f32 %v948, %v1276
      %1278 = vadd.xlane.f32.xlu0 %v1277
      %v1279 = vpop.xlane.xlu0 %1278
      %v1280 = vsel %vm421, %v951, 0.0
      %v1281 = vadd.f32 %v950, %v1280
      %1282 = vadd.xlane.f32.xlu0 %v1281
      %v1283 = vpop.xlane.xlu0 %1282
      %v1284 = vsel %vm421, %v953, 0.0
      %v1285 = vadd.f32 %v952, %v1284
      %1286 = vadd.xlane.f32.xlu0 %v1285
      %v1287 = vpop.xlane.xlu0 %1286
      %v1288 = vsel %vm421, %v955, 0.0
      %v1289 = vadd.f32 %v954, %v1288
      %1290 = vadd.xlane.f32.xlu0 %v1289
      %v1291 = vpop.xlane.xlu0 %1290
      %v1292 = vsel %vm421, %v957, 0.0
      %v1293 = vadd.f32 %v956, %v1292
      %1294 = vadd.xlane.f32.xlu0 %v1293
      %v1295 = vpop.xlane.xlu0 %1294
      %v1296 = vsel %vm421, %v959, 0.0
      %v1297 = vadd.f32 %v958, %v1296
      %1298 = vadd.xlane.f32.xlu0 %v1297
      %v1299 = vpop.xlane.xlu0 %1298
      %v1300 = vsel %vm421, %v961, 0.0
      %v1301 = vadd.f32 %v960, %v1300
      %1302 = vadd.xlane.f32.xlu0 %v1301
      %v1303 = vpop.xlane.xlu0 %1302
      %v1304 = vsel %vm421, %v963, 0.0
      %v1305 = vadd.f32 %v962, %v1304
      %1306 = vadd.xlane.f32.xlu0 %v1305
      %v1307 = vpop.xlane.xlu0 %1306
      %v1308 = vsel %vm421, %v965, 0.0
      %v1309 = vadd.f32 %v964, %v1308
      %1310 = vadd.xlane.f32.xlu0 %v1309
      %v1311 = vpop.xlane.xlu0 %1310
      %v1312 = vsel %vm421, %v967, 0.0
      %v1313 = vadd.f32 %v966, %v1312
      %1314 = vadd.xlane.f32.xlu0 %v1313
      %v1315 = vpop.xlane.xlu0 %1314
      %v1316 = vsel %vm421, %v969, 0.0
      %v1317 = vadd.f32 %v968, %v1316
      %1318 = vadd.xlane.f32.xlu0 %v1317
      %v1319 = vpop.xlane.xlu0 %1318
      %v1320 = vsel %vm421, %v971, 0.0
      %v1321 = vadd.f32 %v970, %v1320
      %1322 = vadd.xlane.f32.xlu0 %v1321
      %v1323 = vpop.xlane.xlu0 %1322
      %v1324 = vsel %vm421, %v973, 0.0
      %v1325 = vadd.f32 %v972, %v1324
      %1326 = vadd.xlane.f32.xlu0 %v1325
      %v1327 = vpop.xlane.xlu0 %1326
      %v1328 = vsel %vm421, %v975, 0.0
      %v1329 = vadd.f32 %v974, %v1328
      %1330 = vadd.xlane.f32.xlu0 %v1329
      %v1331 = vpop.xlane.xlu0 %1330
      %v1332 = vsel %vm421, %v977, 0.0
      %v1333 = vadd.f32 %v976, %v1332
      %1334 = vadd.xlane.f32.xlu0 %v1333
      %v1335 = vpop.xlane.xlu0 %1334
      %v1336 = vsel %vm421, %v979, 0.0
      %v1337 = vadd.f32 %v978, %v1336
      %1338 = vadd.xlane.f32.xlu0 %v1337
      %v1339 = vpop.xlane.xlu0 %1338
      %v1340 = vsel %vm421, %v981, 0.0
      %v1341 = vadd.f32 %v980, %v1340
      %1342 = vadd.xlane.f32.xlu0 %v1341
      %v1343 = vpop.xlane.xlu0 %1342
      %v1344 = vsel %vm421, %v983, 0.0
      %v1345 = vadd.f32 %v982, %v1344
      %1346 = vadd.xlane.f32.xlu0 %v1345
      %v1347 = vpop.xlane.xlu0 %1346
      %v1348 = vsel %vm421, %v985, 0.0
      %v1349 = vadd.f32 %v984, %v1348
      %1350 = vadd.xlane.f32.xlu0 %v1349
      %v1351 = vpop.xlane.xlu0 %1350
      %v1352 = vsel %vm421, %v987, 0.0
      %v1353 = vadd.f32 %v986, %v1352
      %1354 = vadd.xlane.f32.xlu0 %v1353
      %v1355 = vpop.xlane.xlu0 %1354
      %v1356 = vsel %vm421, %v989, 0.0
      %v1357 = vadd.f32 %v988, %v1356
      %1358 = vadd.xlane.f32.xlu0 %v1357
      %v1359 = vpop.xlane.xlu0 %1358
      %v1360 = vsel %vm421, %v991, 0.0
      %v1361 = vadd.f32 %v990, %v1360
      %1362 = vadd.xlane.f32.xlu0 %v1361
      %v1363 = vpop.xlane.xlu0 %1362
      %v1364 = vsel %vm421, %v993, 0.0
      %v1365 = vadd.f32 %v992, %v1364
      %1366 = vadd.xlane.f32.xlu0 %v1365
      %v1367 = vpop.xlane.xlu0 %1366
      %v1368 = vsel %vm421, %v995, 0.0
      %v1369 = vadd.f32 %v994, %v1368
      %1370 = vadd.xlane.f32.xlu0 %v1369
      %v1371 = vpop.xlane.xlu0 %1370
      %v1372 = vsel %vm421, %v997, 0.0
      %v1373 = vadd.f32 %v996, %v1372
      %1374 = vadd.xlane.f32.xlu0 %v1373
      %v1375 = vpop.xlane.xlu0 %1374
      %v1376 = vsel %vm421, %v999, 0.0
      %v1377 = vadd.f32 %v998, %v1376
      %1378 = vadd.xlane.f32.xlu0 %v1377
      %v1379 = vpop.xlane.xlu0 %1378
      %v1380 = vsel %vm421, %v1001, 0.0
      %v1381 = vadd.f32 %v1000, %v1380
      %1382 = vadd.xlane.f32.xlu0 %v1381
      %v1383 = vpop.xlane.xlu0 %1382
      %v1384 = vsel %vm421, %v1003, 0.0
      %v1385 = vadd.f32 %v1002, %v1384
      %1386 = vadd.xlane.f32.xlu0 %v1385
      %v1387 = vpop.xlane.xlu0 %1386
      %v1388 = vsel %vm421, %v1005, 0.0
      %v1389 = vadd.f32 %v1004, %v1388
      %1390 = vadd.xlane.f32.xlu0 %v1389
      %v1391 = vpop.xlane.xlu0 %1390
      %v1392 = vsel %vm421, %v1007, 0.0
      %v1393 = vadd.f32 %v1006, %v1392
      %1394 = vadd.xlane.f32.xlu0 %v1393
      %v1395 = vpop.xlane.xlu0 %1394
      %v1396 = vsel %vm421, %v1009, 0.0
      %v1397 = vadd.f32 %v1008, %v1396
      %1398 = vadd.xlane.f32.xlu0 %v1397
      %v1399 = vpop.xlane.xlu0 %1398
      %v1400 = vsel %vm421, %v1011, 0.0
      %v1401 = vadd.f32 %v1010, %v1400
      %1402 = vadd.xlane.f32.xlu0 %v1401
      %v1403 = vpop.xlane.xlu0 %1402
      %v1404 = vsel %vm421, %v1013, 0.0
      %v1405 = vadd.f32 %v1012, %v1404
      %1406 = vadd.xlane.f32.xlu0 %v1405
      %v1407 = vpop.xlane.xlu0 %1406
      %v1408 = vsel %vm421, %v1015, 0.0
      %v1409 = vadd.f32 %v1014, %v1408
      %1410 = vadd.xlane.f32.xlu0 %v1409
      %v1411 = vpop.xlane.xlu0 %1410
      %v1412 = vmul.f32 %v425, 0.0051020407
      %v1413 = vmul.f32 %v429, 0.0051020407
      %v1414 = vmul.f32 %v433, 0.0051020407
      %v1415 = vmul.f32 %v437, 0.0051020407
      %v1416 = vmul.f32 %v441, 0.0051020407
      %v1417 = vmul.f32 %v445, 0.0051020407
      %v1418 = vmul.f32 %v449, 0.0051020407
      %v1419 = vmul.f32 %v453, 0.0051020407
      %v1420 = vmul.f32 %v457, 0.0051020407
      %v1421 = vmul.f32 %v461, 0.0051020407
      %v1422 = vmul.f32 %v465, 0.0051020407
      %v1423 = vmul.f32 %v469, 0.0051020407
      %v1424 = vmul.f32 %v473, 0.0051020407
      %v1425 = vmul.f32 %v477, 0.0051020407
      %v1426 = vmul.f32 %v481, 0.0051020407
      %v1427 = vmul.f32 %v485, 0.0051020407
      %v1428 = vmul.f32 %v489, 0.0051020407
      %v1429 = vmul.f32 %v493, 0.0051020407
      %v1430 = vmul.f32 %v497, 0.0051020407
      %v1431 = vmul.f32 %v501, 0.0051020407
      %v1432 = vmul.f32 %v505, 0.0051020407
      %v1433 = vmul.f32 %v509, 0.0051020407
      %v1434 = vmul.f32 %v513, 0.0051020407
      %v1435 = vmul.f32 %v517, 0.0051020407
      %v1436 = vmul.f32 %v521, 0.0051020407
      %v1437 = vmul.f32 %v525, 0.0051020407
      %v1438 = vmul.f32 %v529, 0.0051020407
      %v1439 = vmul.f32 %v533, 0.0051020407
      %v1440 = vmul.f32 %v537, 0.0051020407
      %v1441 = vmul.f32 %v541, 0.0051020407
      %v1442 = vmul.f32 %v545, 0.0051020407
      %v1443 = vmul.f32 %v549, 0.0051020407
      %v1444 = vmul.f32 %v553, 0.0051020407
      %v1445 = vmul.f32 %v557, 0.0051020407
      %v1446 = vmul.f32 %v561, 0.0051020407
      %v1447 = vmul.f32 %v565, 0.0051020407
      %v1448 = vmul.f32 %v569, 0.0051020407
      %v1449 = vmul.f32 %v573, 0.0051020407
      %v1450 = vmul.f32 %v577, 0.0051020407
      %v1451 = vmul.f32 %v581, 0.0051020407
      %v1452 = vmul.f32 %v585, 0.0051020407
      %v1453 = vmul.f32 %v589, 0.0051020407
      %v1454 = vmul.f32 %v593, 0.0051020407
      %v1455 = vmul.f32 %v597, 0.0051020407
      %v1456 = vmul.f32 %v601, 0.0051020407
      %v1457 = vmul.f32 %v605, 0.0051020407
      %v1458 = vmul.f32 %v609, 0.0051020407
      %v1459 = vmul.f32 %v613, 0.0051020407
      %v1460 = vmul.f32 %v617, 0.0051020407
      %v1461 = vmul.f32 %v621, 0.0051020407
      %v1462 = vmul.f32 %v625, 0.0051020407
      %v1463 = vmul.f32 %v629, 0.0051020407
      %v1464 = vmul.f32 %v633, 0.0051020407
      %v1465 = vmul.f32 %v637, 0.0051020407
      %v1466 = vmul.f32 %v641, 0.0051020407
      %v1467 = vmul.f32 %v645, 0.0051020407
      %v1468 = vmul.f32 %v649, 0.0051020407
      %v1469 = vmul.f32 %v653, 0.0051020407
      %v1470 = vmul.f32 %v657, 0.0051020407
      %v1471 = vmul.f32 %v661, 0.0051020407
      %v1472 = vmul.f32 %v665, 0.0051020407
      %v1473 = vmul.f32 %v669, 0.0051020407
      %v1474 = vmul.f32 %v673, 0.0051020407
      %v1475 = vmul.f32 %v677, 0.0051020407
      %v1476 = vmul.f32 %v681, 0.0051020407
      %v1477 = vmul.f32 %v685, 0.0051020407
      %v1478 = vmul.f32 %v689, 0.0051020407
      %v1479 = vmul.f32 %v693, 0.0051020407
      %v1480 = vmul.f32 %v697, 0.0051020407
      %v1481 = vmul.f32 %v701, 0.0051020407
      %v1482 = vmul.f32 %v705, 0.0051020407
      %v1483 = vmul.f32 %v709, 0.0051020407
      %v1484 = vmul.f32 %v713, 0.0051020407
      %v1485 = vmul.f32 %v717, 0.0051020407
      %v1486 = vmul.f32 %v721, 0.0051020407
      %v1487 = vmul.f32 %v725, 0.0051020407
      %v1488 = vmul.f32 %v729, 0.0051020407
      %v1489 = vmul.f32 %v733, 0.0051020407
      %v1490 = vmul.f32 %v737, 0.0051020407
      %v1491 = vmul.f32 %v741, 0.0051020407
      %v1492 = vmul.f32 %v745, 0.0051020407
      %v1493 = vmul.f32 %v749, 0.0051020407
      %v1494 = vmul.f32 %v753, 0.0051020407
      %v1495 = vmul.f32 %v757, 0.0051020407
      %v1496 = vmul.f32 %v761, 0.0051020407
      %v1497 = vmul.f32 %v765, 0.0051020407
      %v1498 = vmul.f32 %v769, 0.0051020407
      %v1499 = vmul.f32 %v773, 0.0051020407
      %v1500 = vmul.f32 %v777, 0.0051020407
      %v1501 = vmul.f32 %v781, 0.0051020407
      %v1502 = vmul.f32 %v785, 0.0051020407
      %v1503 = vmul.f32 %v789, 0.0051020407
      %v1504 = vmul.f32 %v793, 0.0051020407
      %v1505 = vmul.f32 %v797, 0.0051020407
      %v1506 = vmul.f32 %v801, 0.0051020407
      %v1507 = vmul.f32 %v805, 0.0051020407
      %v1508 = vmul.f32 %v809, 0.0051020407
      %v1509 = vmul.f32 %v813, 0.0051020407
      %v1510 = vmul.f32 %v817, 0.0051020407
      %v1511 = vmul.f32 %v1019, 0.0051020407
      %v1512 = vmul.f32 %v1023, 0.0051020407
      %v1513 = vmul.f32 %v1027, 0.0051020407
      %v1514 = vmul.f32 %v1031, 0.0051020407
      %v1515 = vmul.f32 %v1035, 0.0051020407
      %v1516 = vmul.f32 %v1039, 0.0051020407
      %v1517 = vmul.f32 %v1043, 0.0051020407
      %v1518 = vmul.f32 %v1047, 0.0051020407
      %v1519 = vmul.f32 %v1051, 0.0051020407
      %v1520 = vmul.f32 %v1055, 0.0051020407
      %v1521 = vmul.f32 %v1059, 0.0051020407
      %v1522 = vmul.f32 %v1063, 0.0051020407
      %v1523 = vmul.f32 %v1067, 0.0051020407
      %v1524 = vmul.f32 %v1071, 0.0051020407
      %v1525 = vmul.f32 %v1075, 0.0051020407
      %v1526 = vmul.f32 %v1079, 0.0051020407
      %v1527 = vmul.f32 %v1083, 0.0051020407
      %v1528 = vmul.f32 %v1087, 0.0051020407
      %v1529 = vmul.f32 %v1091, 0.0051020407
      %v1530 = vmul.f32 %v1095, 0.0051020407
      %v1531 = vmul.f32 %v1099, 0.0051020407
      %v1532 = vmul.f32 %v1103, 0.0051020407
      %v1533 = vmul.f32 %v1107, 0.0051020407
      %v1534 = vmul.f32 %v1111, 0.0051020407
      %v1535 = vmul.f32 %v1115, 0.0051020407
      %v1536 = vmul.f32 %v1119, 0.0051020407
      %v1537 = vmul.f32 %v1123, 0.0051020407
      %v1538 = vmul.f32 %v1127, 0.0051020407
      %v1539 = vmul.f32 %v1131, 0.0051020407
      %v1540 = vmul.f32 %v1135, 0.0051020407
      %v1541 = vmul.f32 %v1139, 0.0051020407
      %v1542 = vmul.f32 %v1143, 0.0051020407
      %v1543 = vmul.f32 %v1147, 0.0051020407
      %v1544 = vmul.f32 %v1151, 0.0051020407
      %v1545 = vmul.f32 %v1155, 0.0051020407
      %v1546 = vmul.f32 %v1159, 0.0051020407
      %v1547 = vmul.f32 %v1163, 0.0051020407
      %v1548 = vmul.f32 %v1167, 0.0051020407
      %v1549 = vmul.f32 %v1171, 0.0051020407
      %v1550 = vmul.f32 %v1175, 0.0051020407
      %v1551 = vmul.f32 %v1179, 0.0051020407
      %v1552 = vmul.f32 %v1183, 0.0051020407
      %v1553 = vmul.f32 %v1187, 0.0051020407
      %v1554 = vmul.f32 %v1191, 0.0051020407
      %v1555 = vmul.f32 %v1195, 0.0051020407
      %v1556 = vmul.f32 %v1199, 0.0051020407
      %v1557 = vmul.f32 %v1203, 0.0051020407
      %v1558 = vmul.f32 %v1207, 0.0051020407
      %v1559 = vmul.f32 %v1211, 0.0051020407
      %v1560 = vmul.f32 %v1215, 0.0051020407
      %v1561 = vmul.f32 %v1219, 0.0051020407
      %v1562 = vmul.f32 %v1223, 0.0051020407
      %v1563 = vmul.f32 %v1227, 0.0051020407
      %v1564 = vmul.f32 %v1231, 0.0051020407
      %v1565 = vmul.f32 %v1235, 0.0051020407
      %v1566 = vmul.f32 %v1239, 0.0051020407
      %v1567 = vmul.f32 %v1243, 0.0051020407
      %v1568 = vmul.f32 %v1247, 0.0051020407
      %v1569 = vmul.f32 %v1251, 0.0051020407
      %v1570 = vmul.f32 %v1255, 0.0051020407
      %v1571 = vmul.f32 %v1259, 0.0051020407
      %v1572 = vmul.f32 %v1263, 0.0051020407
      %v1573 = vmul.f32 %v1267, 0.0051020407
      %v1574 = vmul.f32 %v1271, 0.0051020407
      %v1575 = vmul.f32 %v1275, 0.0051020407
      %v1576 = vmul.f32 %v1279, 0.0051020407
      %v1577 = vmul.f32 %v1283, 0.0051020407
      %v1578 = vmul.f32 %v1287, 0.0051020407
      %v1579 = vmul.f32 %v1291, 0.0051020407
      %v1580 = vmul.f32 %v1295, 0.0051020407
      %v1581 = vmul.f32 %v1299, 0.0051020407
      %v1582 = vmul.f32 %v1303, 0.0051020407
      %v1583 = vmul.f32 %v1307, 0.0051020407
      %v1584 = vmul.f32 %v1311, 0.0051020407
      %v1585 = vmul.f32 %v1315, 0.0051020407
      %v1586 = vmul.f32 %v1319, 0.0051020407
      %v1587 = vmul.f32 %v1323, 0.0051020407
      %v1588 = vmul.f32 %v1327, 0.0051020407
      %v1589 = vmul.f32 %v1331, 0.0051020407
      %v1590 = vmul.f32 %v1335, 0.0051020407
      %v1591 = vmul.f32 %v1339, 0.0051020407
      %v1592 = vmul.f32 %v1343, 0.0051020407
      %v1593 = vmul.f32 %v1347, 0.0051020407
      %v1594 = vmul.f32 %v1351, 0.0051020407
      %v1595 = vmul.f32 %v1355, 0.0051020407
      %v1596 = vmul.f32 %v1359, 0.0051020407
      %v1597 = vmul.f32 %v1363, 0.0051020407
      %v1598 = vmul.f32 %v1367, 0.0051020407
      %v1599 = vmul.f32 %v1371, 0.0051020407
      %v1600 = vmul.f32 %v1375, 0.0051020407
      %v1601 = vmul.f32 %v1379, 0.0051020407
      %v1602 = vmul.f32 %v1383, 0.0051020407
      %v1603 = vmul.f32 %v1387, 0.0051020407
      %v1604 = vmul.f32 %v1391, 0.0051020407
      %v1605 = vmul.f32 %v1395, 0.0051020407
      %v1606 = vmul.f32 %v1399, 0.0051020407
      %v1607 = vmul.f32 %v1403, 0.0051020407
      %v1608 = vmul.f32 %v1407, 0.0051020407
      %v1609 = vmul.f32 %v1411, 0.0051020407
      %v1610 = vmul.f32 %v1412, %v1412
      %v1611 = vmul.f32 %v1413, %v1413
      %v1612 = vmul.f32 %v1414, %v1414
      %v1613 = vmul.f32 %v1415, %v1415
      %v1614 = vmul.f32 %v1416, %v1416
      %v1615 = vmul.f32 %v1417, %v1417
      %v1616 = vmul.f32 %v1418, %v1418
      %v1617 = vmul.f32 %v1419, %v1419
      %v1618 = vmul.f32 %v1420, %v1420
      %v1619 = vmul.f32 %v1421, %v1421
      %v1620 = vmul.f32 %v1422, %v1422
      %v1621 = vmul.f32 %v1423, %v1423
      %v1622 = vmul.f32 %v1424, %v1424
      %v1623 = vmul.f32 %v1425, %v1425
      %v1624 = vmul.f32 %v1426, %v1426
      %v1625 = vmul.f32 %v1427, %v1427
      %v1626 = vmul.f32 %v1428, %v1428
      %v1627 = vmul.f32 %v1429, %v1429
      %v1628 = vmul.f32 %v1430, %v1430
      %v1629 = vmul.f32 %v1431, %v1431
      %v1630 = vmul.f32 %v1432, %v1432
      %v1631 = vmul.f32 %v1433, %v1433
      %v1632 = vmul.f32 %v1434, %v1434
      %v1633 = vmul.f32 %v1435, %v1435
      %v1634 = vmul.f32 %v1436, %v1436
      %v1635 = vmul.f32 %v1437, %v1437
      %v1636 = vmul.f32 %v1438, %v1438
      %v1637 = vmul.f32 %v1439, %v1439
      %v1638 = vmul.f32 %v1440, %v1440
      %v1639 = vmul.f32 %v1441, %v1441
      %v1640 = vmul.f32 %v1442, %v1442
      %v1641 = vmul.f32 %v1443, %v1443
      %v1642 = vmul.f32 %v1444, %v1444
      %v1643 = vmul.f32 %v1445, %v1445
      %v1644 = vmul.f32 %v1446, %v1446
      %v1645 = vmul.f32 %v1447, %v1447
      %v1646 = vmul.f32 %v1448, %v1448
      %v1647 = vmul.f32 %v1449, %v1449
      %v1648 = vmul.f32 %v1450, %v1450
      %v1649 = vmul.f32 %v1451, %v1451
      %v1650 = vmul.f32 %v1452, %v1452
      %v1651 = vmul.f32 %v1453, %v1453
      %v1652 = vmul.f32 %v1454, %v1454
      %v1653 = vmul.f32 %v1455, %v1455
      %v1654 = vmul.f32 %v1456, %v1456
      %v1655 = vmul.f32 %v1457, %v1457
      %v1656 = vmul.f32 %v1458, %v1458
      %v1657 = vmul.f32 %v1459, %v1459
      %v1658 = vmul.f32 %v1460, %v1460
      %v1659 = vmul.f32 %v1461, %v1461
      %v1660 = vmul.f32 %v1462, %v1462
      %v1661 = vmul.f32 %v1463, %v1463
      %v1662 = vmul.f32 %v1464, %v1464
      %v1663 = vmul.f32 %v1465, %v1465
      %v1664 = vmul.f32 %v1466, %v1466
      %v1665 = vmul.f32 %v1467, %v1467
      %v1666 = vmul.f32 %v1468, %v1468
      %v1667 = vmul.f32 %v1469, %v1469
      %v1668 = vmul.f32 %v1470, %v1470
      %v1669 = vmul.f32 %v1471, %v1471
      %v1670 = vmul.f32 %v1472, %v1472
      %v1671 = vmul.f32 %v1473, %v1473
      %v1672 = vmul.f32 %v1474, %v1474
      %v1673 = vmul.f32 %v1475, %v1475
      %v1674 = vmul.f32 %v1476, %v1476
      %v1675 = vmul.f32 %v1477, %v1477
      %v1676 = vmul.f32 %v1478, %v1478
      %v1677 = vmul.f32 %v1479, %v1479
      %v1678 = vmul.f32 %v1480, %v1480
      %v1679 = vmul.f32 %v1481, %v1481
      %v1680 = vmul.f32 %v1482, %v1482
      %v1681 = vmul.f32 %v1483, %v1483
      %v1682 = vmul.f32 %v1484, %v1484
      %v1683 = vmul.f32 %v1485, %v1485
      %v1684 = vmul.f32 %v1486, %v1486
      %v1685 = vmul.f32 %v1487, %v1487
      %v1686 = vmul.f32 %v1488, %v1488
      %v1687 = vmul.f32 %v1489, %v1489
      %v1688 = vmul.f32 %v1490, %v1490
      %v1689 = vmul.f32 %v1491, %v1491
      %v1690 = vmul.f32 %v1492, %v1492
      %v1691 = vmul.f32 %v1493, %v1493
      %v1692 = vmul.f32 %v1494, %v1494
      %v1693 = vmul.f32 %v1495, %v1495
      %v1694 = vmul.f32 %v1496, %v1496
      %v1695 = vmul.f32 %v1497, %v1497
      %v1696 = vmul.f32 %v1498, %v1498
      %v1697 = vmul.f32 %v1499, %v1499
      %v1698 = vmul.f32 %v1500, %v1500
      %v1699 = vmul.f32 %v1501, %v1501
      %v1700 = vmul.f32 %v1502, %v1502
      %v1701 = vmul.f32 %v1503, %v1503
      %v1702 = vmul.f32 %v1504, %v1504
      %v1703 = vmul.f32 %v1505, %v1505
      %v1704 = vmul.f32 %v1506, %v1506
      %v1705 = vmul.f32 %v1507, %v1507
      %v1706 = vmul.f32 %v1508, %v1508
      %v1707 = vmul.f32 %v1509, %v1509
      %v1708 = vmul.f32 %v1510, %v1510
      %v1709 = vsub.f32 %v1511, %v1610
      %v1710 = vsub.f32 %v1512, %v1611
      %v1711 = vsub.f32 %v1513, %v1612
      %v1712 = vsub.f32 %v1514, %v1613
      %v1713 = vsub.f32 %v1515, %v1614
      %v1714 = vsub.f32 %v1516, %v1615
      %v1715 = vsub.f32 %v1517, %v1616
      %v1716 = vsub.f32 %v1518, %v1617
      %v1717 = vsub.f32 %v1519, %v1618
      %v1718 = vsub.f32 %v1520, %v1619
      %v1719 = vsub.f32 %v1521, %v1620
      %v1720 = vsub.f32 %v1522, %v1621
      %v1721 = vsub.f32 %v1523, %v1622
      %v1722 = vsub.f32 %v1524, %v1623
      %v1723 = vsub.f32 %v1525, %v1624
      %v1724 = vsub.f32 %v1526, %v1625
      %v1725 = vsub.f32 %v1527, %v1626
      %v1726 = vsub.f32 %v1528, %v1627
      %v1727 = vsub.f32 %v1529, %v1628
      %v1728 = vsub.f32 %v1530, %v1629
      %v1729 = vsub.f32 %v1531, %v1630
      %v1730 = vsub.f32 %v1532, %v1631
      %v1731 = vsub.f32 %v1533, %v1632
      %v1732 = vsub.f32 %v1534, %v1633
      %v1733 = vsub.f32 %v1535, %v1634
      %v1734 = vsub.f32 %v1536, %v1635
      %v1735 = vsub.f32 %v1537, %v1636
      %v1736 = vsub.f32 %v1538, %v1637
      %v1737 = vsub.f32 %v1539, %v1638
      %v1738 = vsub.f32 %v1540, %v1639
      %v1739 = vsub.f32 %v1541, %v1640
      %v1740 = vsub.f32 %v1542, %v1641
      %v1741 = vsub.f32 %v1543, %v1642
      %v1742 = vsub.f32 %v1544, %v1643
      %v1743 = vsub.f32 %v1545, %v1644
      %v1744 = vsub.f32 %v1546, %v1645
      %v1745 = vsub.f32 %v1547, %v1646
      %v1746 = vsub.f32 %v1548, %v1647
      %v1747 = vsub.f32 %v1549, %v1648
      %v1748 = vsub.f32 %v1550, %v1649
      %v1749 = vsub.f32 %v1551, %v1650
      %v1750 = vsub.f32 %v1552, %v1651
      %v1751 = vsub.f32 %v1553, %v1652
      %v1752 = vsub.f32 %v1554, %v1653
      %v1753 = vsub.f32 %v1555, %v1654
      %v1754 = vsub.f32 %v1556, %v1655
      %v1755 = vsub.f32 %v1557, %v1656
      %v1756 = vsub.f32 %v1558, %v1657
      %v1757 = vsub.f32 %v1559, %v1658
      %v1758 = vsub.f32 %v1560, %v1659
      %v1759 = vsub.f32 %v1561, %v1660
      %v1760 = vsub.f32 %v1562, %v1661
      %v1761 = vsub.f32 %v1563, %v1662
      %v1762 = vsub.f32 %v1564, %v1663
      %v1763 = vsub.f32 %v1565, %v1664
      %v1764 = vsub.f32 %v1566, %v1665
      %v1765 = vsub.f32 %v1567, %v1666
      %v1766 = vsub.f32 %v1568, %v1667
      %v1767 = vsub.f32 %v1569, %v1668
      %v1768 = vsub.f32 %v1570, %v1669
      %v1769 = vsub.f32 %v1571, %v1670
      %v1770 = vsub.f32 %v1572, %v1671
      %v1771 = vsub.f32 %v1573, %v1672
      %v1772 = vsub.f32 %v1574, %v1673
      %v1773 = vsub.f32 %v1575, %v1674
      %v1774 = vsub.f32 %v1576, %v1675
      %v1775 = vsub.f32 %v1577, %v1676
      %v1776 = vsub.f32 %v1578, %v1677
      %v1777 = vsub.f32 %v1579, %v1678
      %v1778 = vsub.f32 %v1580, %v1679
      %v1779 = vsub.f32 %v1581, %v1680
      %v1780 = vsub.f32 %v1582, %v1681
      %v1781 = vsub.f32 %v1583, %v1682
      %v1782 = vsub.f32 %v1584, %v1683
      %v1783 = vsub.f32 %v1585, %v1684
      %v1784 = vsub.f32 %v1586, %v1685
      %v1785 = vsub.f32 %v1587, %v1686
      %v1786 = vsub.f32 %v1588, %v1687
      %v1787 = vsub.f32 %v1589, %v1688
      %v1788 = vsub.f32 %v1590, %v1689
      %v1789 = vsub.f32 %v1591, %v1690
      %v1790 = vsub.f32 %v1592, %v1691
      %v1791 = vsub.f32 %v1593, %v1692
      %v1792 = vsub.f32 %v1594, %v1693
      %v1793 = vsub.f32 %v1595, %v1694
      %v1794 = vsub.f32 %v1596, %v1695
      %v1795 = vsub.f32 %v1597, %v1696
      %v1796 = vsub.f32 %v1598, %v1697
      %v1797 = vsub.f32 %v1599, %v1698
      %v1798 = vsub.f32 %v1600, %v1699
      %v1799 = vsub.f32 %v1601, %v1700
      %v1800 = vsub.f32 %v1602, %v1701
      %v1801 = vsub.f32 %v1603, %v1702
      %v1802 = vsub.f32 %v1604, %v1703
      %v1803 = vsub.f32 %v1605, %v1704
      %v1804 = vsub.f32 %v1606, %v1705
      %v1805 = vsub.f32 %v1607, %v1706
      %v1806 = vsub.f32 %v1608, %v1707
      %v1807 = vsub.f32 %v1609, %v1708
      %v1808 = vmax.f32 %v1709, 0.0
      %v1809 = vmax.f32 %v1710, 0.0
      %v1810 = vmax.f32 %v1711, 0.0
      %v1811 = vmax.f32 %v1712, 0.0
      %v1812 = vmax.f32 %v1713, 0.0
      %v1813 = vmax.f32 %v1714, 0.0
      %v1814 = vmax.f32 %v1715, 0.0
      %v1815 = vmax.f32 %v1716, 0.0
      %v1816 = vmax.f32 %v1717, 0.0
      %v1817 = vmax.f32 %v1718, 0.0
      %v1818 = vmax.f32 %v1719, 0.0
      %v1819 = vmax.f32 %v1720, 0.0
      %v1820 = vmax.f32 %v1721, 0.0
      %v1821 = vmax.f32 %v1722, 0.0
      %v1822 = vmax.f32 %v1723, 0.0
      %v1823 = vmax.f32 %v1724, 0.0
      %v1824 = vmax.f32 %v1725, 0.0
      %v1825 = vmax.f32 %v1726, 0.0
      %v1826 = vmax.f32 %v1727, 0.0
      %v1827 = vmax.f32 %v1728, 0.0
      %v1828 = vmax.f32 %v1729, 0.0
      %v1829 = vmax.f32 %v1730, 0.0
      %v1830 = vmax.f32 %v1731, 0.0
      %v1831 = vmax.f32 %v1732, 0.0
      %v1832 = vmax.f32 %v1733, 0.0
      %v1833 = vmax.f32 %v1734, 0.0
      %v1834 = vmax.f32 %v1735, 0.0
      %v1835 = vmax.f32 %v1736, 0.0
      %v1836 = vmax.f32 %v1737, 0.0
      %v1837 = vmax.f32 %v1738, 0.0
      %v1838 = vmax.f32 %v1739, 0.0
      %v1839 = vmax.f32 %v1740, 0.0
      %v1840 = vmax.f32 %v1741, 0.0
      %v1841 = vmax.f32 %v1742, 0.0
      %v1842 = vmax.f32 %v1743, 0.0
      %v1843 = vmax.f32 %v1744, 0.0
      %v1844 = vmax.f32 %v1745, 0.0
      %v1845 = vmax.f32 %v1746, 0.0
      %v1846 = vmax.f32 %v1747, 0.0
      %v1847 = vmax.f32 %v1748, 0.0
      %v1848 = vmax.f32 %v1749, 0.0
      %v1849 = vmax.f32 %v1750, 0.0
      %v1850 = vmax.f32 %v1751, 0.0
      %v1851 = vmax.f32 %v1752, 0.0
      %v1852 = vmax.f32 %v1753, 0.0
      %v1853 = vmax.f32 %v1754, 0.0
      %v1854 = vmax.f32 %v1755, 0.0
      %v1855 = vmax.f32 %v1756, 0.0
      %v1856 = vmax.f32 %v1757, 0.0
      %v1857 = vmax.f32 %v1758, 0.0
      %v1858 = vmax.f32 %v1759, 0.0
      %v1859 = vmax.f32 %v1760, 0.0
      %v1860 = vmax.f32 %v1761, 0.0
      %v1861 = vmax.f32 %v1762, 0.0
      %v1862 = vmax.f32 %v1763, 0.0
      %v1863 = vmax.f32 %v1764, 0.0
      %v1864 = vmax.f32 %v1765, 0.0
      %v1865 = vmax.f32 %v1766, 0.0
      %v1866 = vmax.f32 %v1767, 0.0
      %v1867 = vmax.f32 %v1768, 0.0
      %v1868 = vmax.f32 %v1769, 0.0
      %v1869 = vmax.f32 %v1770, 0.0
      %v1870 = vmax.f32 %v1771, 0.0
      %v1871 = vmax.f32 %v1772, 0.0
      %v1872 = vmax.f32 %v1773, 0.0
      %v1873 = vmax.f32 %v1774, 0.0
      %v1874 = vmax.f32 %v1775, 0.0
      %v1875 = vmax.f32 %v1776, 0.0
      %v1876 = vmax.f32 %v1777, 0.0
      %v1877 = vmax.f32 %v1778, 0.0
      %v1878 = vmax.f32 %v1779, 0.0
      %v1879 = vmax.f32 %v1780, 0.0
      %v1880 = vmax.f32 %v1781, 0.0
      %v1881 = vmax.f32 %v1782, 0.0
      %v1882 = vmax.f32 %v1783, 0.0
      %v1883 = vmax.f32 %v1784, 0.0
      %v1884 = vmax.f32 %v1785, 0.0
      %v1885 = vmax.f32 %v1786, 0.0
      %v1886 = vmax.f32 %v1787, 0.0
      %v1887 = vmax.f32 %v1788, 0.0
      %v1888 = vmax.f32 %v1789, 0.0
      %v1889 = vmax.f32 %v1790, 0.0
      %v1890 = vmax.f32 %v1791, 0.0
      %v1891 = vmax.f32 %v1792, 0.0
      %v1892 = vmax.f32 %v1793, 0.0
      %v1893 = vmax.f32 %v1794, 0.0
      %v1894 = vmax.f32 %v1795, 0.0
      %v1895 = vmax.f32 %v1796, 0.0
      %v1896 = vmax.f32 %v1797, 0.0
      %v1897 = vmax.f32 %v1798, 0.0
      %v1898 = vmax.f32 %v1799, 0.0
      %v1899 = vmax.f32 %v1800, 0.0
      %v1900 = vmax.f32 %v1801, 0.0
      %v1901 = vmax.f32 %v1802, 0.0
      %v1902 = vmax.f32 %v1803, 0.0
      %v1903 = vmax.f32 %v1804, 0.0
      %v1904 = vmax.f32 %v1805, 0.0
      %v1905 = vmax.f32 %v1806, 0.0
      %v1906 = vmax.f32 %v1807, 0.0
      %v1907 = vadd.f32 %v1808, 1e-05
      %v1908 = vadd.f32 %v1809, 1e-05
      %v1909 = vadd.f32 %v1810, 1e-05
      %v1910 = vadd.f32 %v1811, 1e-05
      %v1911 = vadd.f32 %v1812, 1e-05
      %v1912 = vadd.f32 %v1813, 1e-05
      %v1913 = vadd.f32 %v1814, 1e-05
      %v1914 = vadd.f32 %v1815, 1e-05
      %v1915 = vadd.f32 %v1816, 1e-05
      %v1916 = vadd.f32 %v1817, 1e-05
      %v1917 = vadd.f32 %v1818, 1e-05
      %v1918 = vadd.f32 %v1819, 1e-05
      %v1919 = vadd.f32 %v1820, 1e-05
      %v1920 = vadd.f32 %v1821, 1e-05
      %v1921 = vadd.f32 %v1822, 1e-05
      %v1922 = vadd.f32 %v1823, 1e-05
      %v1923 = vadd.f32 %v1824, 1e-05
      %v1924 = vadd.f32 %v1825, 1e-05
      %v1925 = vadd.f32 %v1826, 1e-05
      %v1926 = vadd.f32 %v1827, 1e-05
      %v1927 = vadd.f32 %v1828, 1e-05
      %v1928 = vadd.f32 %v1829, 1e-05
      %v1929 = vadd.f32 %v1830, 1e-05
      %v1930 = vadd.f32 %v1831, 1e-05
      %v1931 = vadd.f32 %v1832, 1e-05
      %v1932 = vadd.f32 %v1833, 1e-05
      %v1933 = vadd.f32 %v1834, 1e-05
      %v1934 = vadd.f32 %v1835, 1e-05
      %v1935 = vadd.f32 %v1836, 1e-05
      %v1936 = vadd.f32 %v1837, 1e-05
      %v1937 = vadd.f32 %v1838, 1e-05
      %v1938 = vadd.f32 %v1839, 1e-05
      %v1939 = vadd.f32 %v1840, 1e-05
      %v1940 = vadd.f32 %v1841, 1e-05
      %v1941 = vadd.f32 %v1842, 1e-05
      %v1942 = vadd.f32 %v1843, 1e-05
      %v1943 = vadd.f32 %v1844, 1e-05
      %v1944 = vadd.f32 %v1845, 1e-05
      %v1945 = vadd.f32 %v1846, 1e-05
      %v1946 = vadd.f32 %v1847, 1e-05
      %v1947 = vadd.f32 %v1848, 1e-05
      %v1948 = vadd.f32 %v1849, 1e-05
      %v1949 = vadd.f32 %v1850, 1e-05
      %v1950 = vadd.f32 %v1851, 1e-05
      %v1951 = vadd.f32 %v1852, 1e-05
      %v1952 = vadd.f32 %v1853, 1e-05
      %v1953 = vadd.f32 %v1854, 1e-05
      %v1954 = vadd.f32 %v1855, 1e-05
      %v1955 = vadd.f32 %v1856, 1e-05
      %v1956 = vadd.f32 %v1857, 1e-05
      %v1957 = vadd.f32 %v1858, 1e-05
      %v1958 = vadd.f32 %v1859, 1e-05
      %v1959 = vadd.f32 %v1860, 1e-05
      %v1960 = vadd.f32 %v1861, 1e-05
      %v1961 = vadd.f32 %v1862, 1e-05
      %v1962 = vadd.f32 %v1863, 1e-05
      %v1963 = vadd.f32 %v1864, 1e-05
      %v1964 = vadd.f32 %v1865, 1e-05
      %v1965 = vadd.f32 %v1866, 1e-05
      %v1966 = vadd.f32 %v1867, 1e-05
      %v1967 = vadd.f32 %v1868, 1e-05
      %v1968 = vadd.f32 %v1869, 1e-05
      %v1969 = vadd.f32 %v1870, 1e-05
      %v1970 = vadd.f32 %v1871, 1e-05
      %v1971 = vadd.f32 %v1872, 1e-05
      %v1972 = vadd.f32 %v1873, 1e-05
      %v1973 = vadd.f32 %v1874, 1e-05
      %v1974 = vadd.f32 %v1875, 1e-05
      %v1975 = vadd.f32 %v1876, 1e-05
      %v1976 = vadd.f32 %v1877, 1e-05
      %v1977 = vadd.f32 %v1878, 1e-05
      %v1978 = vadd.f32 %v1879, 1e-05
      %v1979 = vadd.f32 %v1880, 1e-05
      %v1980 = vadd.f32 %v1881, 1e-05
      %v1981 = vadd.f32 %v1882, 1e-05
      %v1982 = vadd.f32 %v1883, 1e-05
      %v1983 = vadd.f32 %v1884, 1e-05
      %v1984 = vadd.f32 %v1885, 1e-05
      %v1985 = vadd.f32 %v1886, 1e-05
      %v1986 = vadd.f32 %v1887, 1e-05
      %v1987 = vadd.f32 %v1888, 1e-05
      %v1988 = vadd.f32 %v1889, 1e-05
      %v1989 = vadd.f32 %v1890, 1e-05
      %v1990 = vadd.f32 %v1891, 1e-05
      %v1991 = vadd.f32 %v1892, 1e-05
      %v1992 = vadd.f32 %v1893, 1e-05
      %v1993 = vadd.f32 %v1894, 1e-05
      %v1994 = vadd.f32 %v1895, 1e-05
      %v1995 = vadd.f32 %v1896, 1e-05
      %v1996 = vadd.f32 %v1897, 1e-05
      %v1997 = vadd.f32 %v1898, 1e-05
      %v1998 = vadd.f32 %v1899, 1e-05
      %v1999 = vadd.f32 %v1900, 1e-05
      %v2000 = vadd.f32 %v1901, 1e-05
      %v2001 = vadd.f32 %v1902, 1e-05
      %v2002 = vadd.f32 %v1903, 1e-05
      %v2003 = vadd.f32 %v1904, 1e-05
      %v2004 = vadd.f32 %v1905, 1e-05
      %v2005 = vadd.f32 %v1906, 1e-05
      %v2006 = vrsqrt.pop %v1907
      %v2007 = vrsqrt.pop %v1908
      %v2008 = vrsqrt.pop %v1909
      %v2009 = vrsqrt.pop %v1910
      %v2010 = vrsqrt.pop %v1911
      %v2011 = vrsqrt.pop %v1912
      %v2012 = vrsqrt.pop %v1913
      %v2013 = vrsqrt.pop %v1914
      %v2014 = vrsqrt.pop %v1915
      %v2015 = vrsqrt.pop %v1916
      %v2016 = vrsqrt.pop %v1917
      %v2017 = vrsqrt.pop %v1918
      %v2018 = vrsqrt.pop %v1919
      %v2019 = vrsqrt.pop %v1920
      %v2020 = vrsqrt.pop %v1921
      %v2021 = vrsqrt.pop %v1922
      %v2022 = vrsqrt.pop %v1923
      %v2023 = vrsqrt.pop %v1924
      %v2024 = vrsqrt.pop %v1925
      %v2025 = vrsqrt.pop %v1926
      %v2026 = vrsqrt.pop %v1927
      %v2027 = vrsqrt.pop %v1928
      %v2028 = vrsqrt.pop %v1929
      %v2029 = vrsqrt.pop %v1930
      %v2030 = vrsqrt.pop %v1931
      %v2031 = vrsqrt.pop %v1932
      %v2032 = vrsqrt.pop %v1933
      %v2033 = vrsqrt.pop %v1934
      %v2034 = vrsqrt.pop %v1935
      %v2035 = vrsqrt.pop %v1936
      %v2036 = vrsqrt.pop %v1937
      %v2037 = vrsqrt.pop %v1938
      %v2038 = vrsqrt.pop %v1939
      %v2039 = vrsqrt.pop %v1940
      %v2040 = vrsqrt.pop %v1941
      %v2041 = vrsqrt.pop %v1942
      %v2042 = vrsqrt.pop %v1943
      %v2043 = vrsqrt.pop %v1944
      %v2044 = vrsqrt.pop %v1945
      %v2045 = vrsqrt.pop %v1946
      %v2046 = vrsqrt.pop %v1947
      %v2047 = vrsqrt.pop %v1948
      %v2048 = vrsqrt.pop %v1949
      %v2049 = vrsqrt.pop %v1950
      %v2050 = vrsqrt.pop %v1951
      %v2051 = vrsqrt.pop %v1952
      %v2052 = vrsqrt.pop %v1953
      %v2053 = vrsqrt.pop %v1954
      %v2054 = vrsqrt.pop %v1955
      %v2055 = vrsqrt.pop %v1956
      %v2056 = vrsqrt.pop %v1957
      %v2057 = vrsqrt.pop %v1958
      %v2058 = vrsqrt.pop %v1959
      %v2059 = vrsqrt.pop %v1960
      %v2060 = vrsqrt.pop %v1961
      %v2061 = vrsqrt.pop %v1962
      %v2062 = vrsqrt.pop %v1963
      %v2063 = vrsqrt.pop %v1964
      %v2064 = vrsqrt.pop %v1965
      %v2065 = vrsqrt.pop %v1966
      %v2066 = vrsqrt.pop %v1967
      %v2067 = vrsqrt.pop %v1968
      %v2068 = vrsqrt.pop %v1969
      %v2069 = vrsqrt.pop %v1970
      %v2070 = vrsqrt.pop %v1971
      %v2071 = vrsqrt.pop %v1972
      %v2072 = vrsqrt.pop %v1973
      %v2073 = vrsqrt.pop %v1974
      %v2074 = vrsqrt.pop %v1975
      %v2075 = vrsqrt.pop %v1976
      %v2076 = vrsqrt.pop %v1977
      %v2077 = vrsqrt.pop %v1978
      %v2078 = vrsqrt.pop %v1979
      %v2079 = vrsqrt.pop %v1980
      %v2080 = vrsqrt.pop %v1981
      %v2081 = vrsqrt.pop %v1982
      %v2082 = vrsqrt.pop %v1983
      %v2083 = vrsqrt.pop %v1984
      %v2084 = vrsqrt.pop %v1985
      %v2085 = vrsqrt.pop %v1986
      %v2086 = vrsqrt.pop %v1987
      %v2087 = vrsqrt.pop %v1988
      %v2088 = vrsqrt.pop %v1989
      %v2089 = vrsqrt.pop %v1990
      %v2090 = vrsqrt.pop %v1991
      %v2091 = vrsqrt.pop %v1992
      %v2092 = vrsqrt.pop %v1993
      %v2093 = vrsqrt.pop %v1994
      %v2094 = vrsqrt.pop %v1995
      %v2095 = vrsqrt.pop %v1996
      %v2096 = vrsqrt.pop %v1997
      %v2097 = vrsqrt.pop %v1998
      %v2098 = vrsqrt.pop %v1999
      %v2099 = vrsqrt.pop %v2000
      %v2100 = vrsqrt.pop %v2001
      %v2101 = vrsqrt.pop %v2002
      %v2102 = vrsqrt.pop %v2003
      %v2103 = vrsqrt.pop %v2004
      %v2104 = vrsqrt.pop %v2005
      %v2105 = vld [vmem:[%s208] sm:$0xff]
      %v2106 = vld [vmem:[%s208 + $0x8] sm:$0xff]
      %v2107 = vld [vmem:[%s208 + $0x10] sm:$0xff]
      %v2108 = vld [vmem:[%s208 + $0x18] sm:$0xff]
      %v2109 = vld [vmem:[%s208 + $0x20] sm:$0xff]
      %v2110 = vld [vmem:[%s208 + $0x28] sm:$0xff]
      %v2111 = vld [vmem:[%s208 + $0x30] sm:$0xff]
      %v2112 = vld [vmem:[%s208 + $0x38] sm:$0xff]
      %v2113 = vld [vmem:[%s208 + $0x40] sm:$0xff]
      %v2114 = vld [vmem:[%s208 + $0x48] sm:$0xff]
      %v2115 = vld [vmem:[%s208 + $0x50] sm:$0xff]
      %v2116 = vld [vmem:[%s208 + $0x58] sm:$0xff]
      %v2117 = vld [vmem:[%s208 + $0x60] sm:$0xff]
      %v2118 = vld [vmem:[%s208 + $0x68] sm:$0xff]
      %v2119 = vld [vmem:[%s208 + $0x70] sm:$0xff]
      %v2120 = vld [vmem:[%s208 + $0x78] sm:$0xff]
      %v2121 = vld [vmem:[%s208 + $0x80] sm:$0xff]
      %v2122 = vld [vmem:[%s208 + $0x88] sm:$0xff]
      %v2123 = vld [vmem:[%s208 + $0x90] sm:$0xff]
      %v2124 = vld [vmem:[%s208 + $0x98] sm:$0xff]
      %v2125 = vld [vmem:[%s208 + $0xa0] sm:$0xff]
      %v2126 = vld [vmem:[%s208 + $0xa8] sm:$0xff]
      %v2127 = vld [vmem:[%s208 + $0xb0] sm:$0xff]
      %v2128 = vld [vmem:[%s208 + $0xb8] sm:$0xff]
      %v2129 = vld [vmem:[%s208 + $0xc0] sm:$0xff]
      %v2130 = vld [vmem:[%s208 + $0xc8] sm:$0xff]
      %v2131 = vld [vmem:[%s208 + $0xd0] sm:$0xff]
      %v2132 = vld [vmem:[%s208 + $0xd8] sm:$0xff]
      %v2133 = vld [vmem:[%s208 + $0xe0] sm:$0xff]
      %v2134 = vld [vmem:[%s208 + $0xe8] sm:$0xff]
      %v2135 = vld [vmem:[%s208 + $0xf0] sm:$0xff]
      %v2136 = vld [vmem:[%s208 + $0xf8] sm:$0xff]
      %v2137 = vld [vmem:[%s208 + $0x100] sm:$0xff]
      %v2138 = vld [vmem:[%s208 + $0x108] sm:$0xff]
      %v2139 = vld [vmem:[%s208 + $0x110] sm:$0xff]
      %v2140 = vld [vmem:[%s208 + $0x118] sm:$0xff]
      %v2141 = vld [vmem:[%s208 + $0x120] sm:$0xff]
      %v2142 = vld [vmem:[%s208 + $0x128] sm:$0xff]
      %v2143 = vld [vmem:[%s208 + $0x130] sm:$0xff]
      %v2144 = vld [vmem:[%s208 + $0x138] sm:$0xff]
      %v2145 = vld [vmem:[%s208 + $0x140] sm:$0xff]
      %v2146 = vld [vmem:[%s208 + $0x148] sm:$0xff]
      %v2147 = vld [vmem:[%s208 + $0x150] sm:$0xff]
      %v2148 = vld [vmem:[%s208 + $0x158] sm:$0xff]
      %v2149 = vld [vmem:[%s208 + $0x160] sm:$0xff]
      %v2150 = vld [vmem:[%s208 + $0x168] sm:$0xff]
      %v2151 = vld [vmem:[%s208 + $0x170] sm:$0xff]
      %v2152 = vld [vmem:[%s208 + $0x178] sm:$0xff]
      %v2153 = vld [vmem:[%s208 + $0x180] sm:$0xff]
      %v2154 = vld [vmem:[%s208 + $0x188] sm:$0xff]
      %v2155 = vld [vmem:[%s208 + $0x190] sm:$0xff]
      %v2156 = vld [vmem:[%s208 + $0x198] sm:$0xff]
      %v2157 = vld [vmem:[%s208 + $0x1a0] sm:$0xff]
      %v2158 = vld [vmem:[%s208 + $0x1a8] sm:$0xff]
      %v2159 = vld [vmem:[%s208 + $0x1b0] sm:$0xff]
      %v2160 = vld [vmem:[%s208 + $0x1b8] sm:$0xff]
      %v2161 = vld [vmem:[%s208 + $0x1c0] sm:$0xff]
      %v2162 = vld [vmem:[%s208 + $0x1c8] sm:$0xff]
      %v2163 = vld [vmem:[%s208 + $0x1d0] sm:$0xff]
      %v2164 = vld [vmem:[%s208 + $0x1d8] sm:$0xff]
      %v2165 = vld [vmem:[%s208 + $0x1e0] sm:$0xff]
      %v2166 = vld [vmem:[%s208 + $0x1e8] sm:$0xff]
      %v2167 = vld [vmem:[%s208 + $0x1f0] sm:$0xff]
      %v2168 = vld [vmem:[%s208 + $0x1f8] sm:$0xff]
      %v2169 = vld [vmem:[%s208 + $0x200] sm:$0xff]
      %v2170 = vld [vmem:[%s208 + $0x208] sm:$0xff]
      %v2171 = vld [vmem:[%s208 + $0x210] sm:$0xff]
      %v2172 = vld [vmem:[%s208 + $0x218] sm:$0xff]
      %v2173 = vld [vmem:[%s208 + $0x220] sm:$0xff]
      %v2174 = vld [vmem:[%s208 + $0x228] sm:$0xff]
      %v2175 = vld [vmem:[%s208 + $0x230] sm:$0xff]
      %v2176 = vld [vmem:[%s208 + $0x238] sm:$0xff]
      %v2177 = vld [vmem:[%s208 + $0x240] sm:$0xff]
      %v2178 = vld [vmem:[%s208 + $0x248] sm:$0xff]
      %v2179 = vld [vmem:[%s208 + $0x250] sm:$0xff]
      %v2180 = vld [vmem:[%s208 + $0x258] sm:$0xff]
      %v2181 = vld [vmem:[%s208 + $0x260] sm:$0xff]
      %v2182 = vld [vmem:[%s208 + $0x268] sm:$0xff]
      %v2183 = vld [vmem:[%s208 + $0x270] sm:$0xff]
      %v2184 = vld [vmem:[%s208 + $0x278] sm:$0xff]
      %v2185 = vld [vmem:[%s208 + $0x280] sm:$0xff]
      %v2186 = vld [vmem:[%s208 + $0x288] sm:$0xff]
      %v2187 = vld [vmem:[%s208 + $0x290] sm:$0xff]
      %v2188 = vld [vmem:[%s208 + $0x298] sm:$0xff]
      %v2189 = vld [vmem:[%s208 + $0x2a0] sm:$0xff]
      %v2190 = vld [vmem:[%s208 + $0x2a8] sm:$0xff]
      %v2191 = vld [vmem:[%s208 + $0x2b0] sm:$0xff]
      %v2192 = vld [vmem:[%s208 + $0x2b8] sm:$0xff]
      %v2193 = vld [vmem:[%s208 + $0x2c0] sm:$0xff]
      %v2194 = vld [vmem:[%s208 + $0x2c8] sm:$0xff]
      %v2195 = vld [vmem:[%s208 + $0x2d0] sm:$0xff]
      %v2196 = vld [vmem:[%s208 + $0x2d8] sm:$0xff]
      %v2197 = vld [vmem:[%s208 + $0x2e0] sm:$0xff]
      %v2198 = vld [vmem:[%s208 + $0x2e8] sm:$0xff]
      %v2199 = vld [vmem:[%s208 + $0x2f0] sm:$0xff]
      %v2200 = vld [vmem:[%s208 + $0x2f8] sm:$0xff]
      %v2201 = vld [vmem:[%s208 + $0x300] sm:$0xff]
      %v2202 = vld [vmem:[%s208 + $0x308] sm:$0xff]
      %v2203 = vld [vmem:[%s208 + $0x310] sm:$0xff]
      %v2204 = vmul.f32 %v2105, %v2006
      %v2205 = vmul.f32 %v2106, %v2007
      %v2206 = vmul.f32 %v2107, %v2008
      %v2207 = vmul.f32 %v2108, %v2009
      %v2208 = vmul.f32 %v2109, %v2010
      %v2209 = vmul.f32 %v2110, %v2011
      %v2210 = vmul.f32 %v2111, %v2012
      %v2211 = vmul.f32 %v2112, %v2013
      %v2212 = vmul.f32 %v2113, %v2014
      %v2213 = vmul.f32 %v2114, %v2015
      %v2214 = vmul.f32 %v2115, %v2016
      %v2215 = vmul.f32 %v2116, %v2017
      %v2216 = vmul.f32 %v2117, %v2018
      %v2217 = vmul.f32 %v2118, %v2019
      %v2218 = vmul.f32 %v2119, %v2020
      %v2219 = vmul.f32 %v2120, %v2021
      %v2220 = vmul.f32 %v2121, %v2022
      %v2221 = vmul.f32 %v2122, %v2023
      %v2222 = vmul.f32 %v2123, %v2024
      %v2223 = vmul.f32 %v2124, %v2025
      %v2224 = vmul.f32 %v2125, %v2026
      %v2225 = vmul.f32 %v2126, %v2027
      %v2226 = vmul.f32 %v2127, %v2028
      %v2227 = vmul.f32 %v2128, %v2029
      %v2228 = vmul.f32 %v2129, %v2030
      %v2229 = vmul.f32 %v2130, %v2031
      %v2230 = vmul.f32 %v2131, %v2032
      %v2231 = vmul.f32 %v2132, %v2033
      %v2232 = vmul.f32 %v2133, %v2034
      %v2233 = vmul.f32 %v2134, %v2035
      %v2234 = vmul.f32 %v2135, %v2036
      %v2235 = vmul.f32 %v2136, %v2037
      %v2236 = vmul.f32 %v2137, %v2038
      %v2237 = vmul.f32 %v2138, %v2039
      %v2238 = vmul.f32 %v2139, %v2040
      %v2239 = vmul.f32 %v2140, %v2041
      %v2240 = vmul.f32 %v2141, %v2042
      %v2241 = vmul.f32 %v2142, %v2043
      %v2242 = vmul.f32 %v2143, %v2044
      %v2243 = vmul.f32 %v2144, %v2045
      %v2244 = vmul.f32 %v2145, %v2046
      %v2245 = vmul.f32 %v2146, %v2047
      %v2246 = vmul.f32 %v2147, %v2048
      %v2247 = vmul.f32 %v2148, %v2049
      %v2248 = vmul.f32 %v2149, %v2050
      %v2249 = vmul.f32 %v2150, %v2051
      %v2250 = vmul.f32 %v2151, %v2052
      %v2251 = vmul.f32 %v2152, %v2053
      %v2252 = vmul.f32 %v2153, %v2054
      %v2253 = vmul.f32 %v2154, %v2055
      %v2254 = vmul.f32 %v2155, %v2056
      %v2255 = vmul.f32 %v2156, %v2057
      %v2256 = vmul.f32 %v2157, %v2058
      %v2257 = vmul.f32 %v2158, %v2059
      %v2258 = vmul.f32 %v2159, %v2060
      %v2259 = vmul.f32 %v2160, %v2061
      %v2260 = vmul.f32 %v2161, %v2062
      %v2261 = vmul.f32 %v2162, %v2063
      %v2262 = vmul.f32 %v2163, %v2064
      %v2263 = vmul.f32 %v2164, %v2065
      %v2264 = vmul.f32 %v2165, %v2066
      %v2265 = vmul.f32 %v2166, %v2067
      %v2266 = vmul.f32 %v2167, %v2068
      %v2267 = vmul.f32 %v2168, %v2069
      %v2268 = vmul.f32 %v2169, %v2070
      %v2269 = vmul.f32 %v2170, %v2071
      %v2270 = vmul.f32 %v2171, %v2072
      %v2271 = vmul.f32 %v2172, %v2073
      %v2272 = vmul.f32 %v2173, %v2074
      %v2273 = vmul.f32 %v2174, %v2075
      %v2274 = vmul.f32 %v2175, %v2076
      %v2275 = vmul.f32 %v2176, %v2077
      %v2276 = vmul.f32 %v2177, %v2078
      %v2277 = vmul.f32 %v2178, %v2079
      %v2278 = vmul.f32 %v2179, %v2080
      %v2279 = vmul.f32 %v2180, %v2081
      %v2280 = vmul.f32 %v2181, %v2082
      %v2281 = vmul.f32 %v2182, %v2083
      %v2282 = vmul.f32 %v2183, %v2084
      %v2283 = vmul.f32 %v2184, %v2085
      %v2284 = vmul.f32 %v2185, %v2086
      %v2285 = vmul.f32 %v2186, %v2087
      %v2286 = vmul.f32 %v2187, %v2088
      %v2287 = vmul.f32 %v2188, %v2089
      %v2288 = vmul.f32 %v2189, %v2090
      %v2289 = vmul.f32 %v2190, %v2091
      %v2290 = vmul.f32 %v2191, %v2092
      %v2291 = vmul.f32 %v2192, %v2093
      %v2292 = vmul.f32 %v2193, %v2094
      %v2293 = vmul.f32 %v2194, %v2095
      %v2294 = vmul.f32 %v2195, %v2096
      %v2295 = vmul.f32 %v2196, %v2097
      %v2296 = vmul.f32 %v2197, %v2098
      %v2297 = vmul.f32 %v2198, %v2099
      %v2298 = vmul.f32 %v2199, %v2100
      %v2299 = vmul.f32 %v2200, %v2101
      %v2300 = vmul.f32 %v2201, %v2102
      %v2301 = vmul.f32 %v2202, %v2103
      %v2302 = vmul.f32 %v2203, %v2104
      %v2303 = vld [vmem:[%s214] sm:$0xff]
      %v2304 = vld [vmem:[%s214 + $0x8] sm:$0xff]
      %v2305 = vld [vmem:[%s214 + $0x10] sm:$0xff]
      %v2306 = vld [vmem:[%s214 + $0x18] sm:$0xff]
      %v2307 = vld [vmem:[%s214 + $0x20] sm:$0xff]
      %v2308 = vld [vmem:[%s214 + $0x28] sm:$0xff]
      %v2309 = vld [vmem:[%s214 + $0x30] sm:$0xff]
      %v2310 = vld [vmem:[%s214 + $0x38] sm:$0xff]
      %v2311 = vld [vmem:[%s214 + $0x40] sm:$0xff]
      %v2312 = vld [vmem:[%s214 + $0x48] sm:$0xff]
      %v2313 = vld [vmem:[%s214 + $0x50] sm:$0xff]
      %v2314 = vld [vmem:[%s214 + $0x58] sm:$0xff]
      %v2315 = vld [vmem:[%s214 + $0x60] sm:$0xff]
      %v2316 = vld [vmem:[%s214 + $0x68] sm:$0xff]
      %v2317 = vld [vmem:[%s214 + $0x70] sm:$0xff]
      %v2318 = vld [vmem:[%s214 + $0x78] sm:$0xff]
      %v2319 = vld [vmem:[%s214 + $0x80] sm:$0xff]
      %v2320 = vld [vmem:[%s214 + $0x88] sm:$0xff]
      %v2321 = vld [vmem:[%s214 + $0x90] sm:$0xff]
      %v2322 = vld [vmem:[%s214 + $0x98] sm:$0xff]
      %v2323 = vld [vmem:[%s214 + $0xa0] sm:$0xff]
      %v2324 = vld [vmem:[%s214 + $0xa8] sm:$0xff]
      %v2325 = vld [vmem:[%s214 + $0xb0] sm:$0xff]
      %v2326 = vld [vmem:[%s214 + $0xb8] sm:$0xff]
      %v2327 = vld [vmem:[%s214 + $0xc0] sm:$0xff]
      %v2328 = vld [vmem:[%s214 + $0xc8] sm:$0xff]
      %v2329 = vld [vmem:[%s214 + $0xd0] sm:$0xff]
      %v2330 = vld [vmem:[%s214 + $0xd8] sm:$0xff]
      %v2331 = vld [vmem:[%s214 + $0xe0] sm:$0xff]
      %v2332 = vld [vmem:[%s214 + $0xe8] sm:$0xff]
      %v2333 = vld [vmem:[%s214 + $0xf0] sm:$0xff]
      %v2334 = vld [vmem:[%s214 + $0xf8] sm:$0xff]
      %v2335 = vld [vmem:[%s214 + $0x100] sm:$0xff]
      %v2336 = vld [vmem:[%s214 + $0x108] sm:$0xff]
      %v2337 = vld [vmem:[%s214 + $0x110] sm:$0xff]
      %v2338 = vld [vmem:[%s214 + $0x118] sm:$0xff]
      %v2339 = vld [vmem:[%s214 + $0x120] sm:$0xff]
      %v2340 = vld [vmem:[%s214 + $0x128] sm:$0xff]
      %v2341 = vld [vmem:[%s214 + $0x130] sm:$0xff]
      %v2342 = vld [vmem:[%s214 + $0x138] sm:$0xff]
      %v2343 = vld [vmem:[%s214 + $0x140] sm:$0xff]
      %v2344 = vld [vmem:[%s214 + $0x148] sm:$0xff]
      %v2345 = vld [vmem:[%s214 + $0x150] sm:$0xff]
      %v2346 = vld [vmem:[%s214 + $0x158] sm:$0xff]
      %v2347 = vld [vmem:[%s214 + $0x160] sm:$0xff]
      %v2348 = vld [vmem:[%s214 + $0x168] sm:$0xff]
      %v2349 = vld [vmem:[%s214 + $0x170] sm:$0xff]
      %v2350 = vld [vmem:[%s214 + $0x178] sm:$0xff]
      %v2351 = vld [vmem:[%s214 + $0x180] sm:$0xff]
      %v2352 = vld [vmem:[%s214 + $0x188] sm:$0xff]
      %v2353 = vld [vmem:[%s214 + $0x190] sm:$0xff]
      %v2354 = vld [vmem:[%s214 + $0x198] sm:$0xff]
      %v2355 = vld [vmem:[%s214 + $0x1a0] sm:$0xff]
      %v2356 = vld [vmem:[%s214 + $0x1a8] sm:$0xff]
      %v2357 = vld [vmem:[%s214 + $0x1b0] sm:$0xff]
      %v2358 = vld [vmem:[%s214 + $0x1b8] sm:$0xff]
      %v2359 = vld [vmem:[%s214 + $0x1c0] sm:$0xff]
      %v2360 = vld [vmem:[%s214 + $0x1c8] sm:$0xff]
      %v2361 = vld [vmem:[%s214 + $0x1d0] sm:$0xff]
      %v2362 = vld [vmem:[%s214 + $0x1d8] sm:$0xff]
      %v2363 = vld [vmem:[%s214 + $0x1e0] sm:$0xff]
      %v2364 = vld [vmem:[%s214 + $0x1e8] sm:$0xff]
      %v2365 = vld [vmem:[%s214 + $0x1f0] sm:$0xff]
      %v2366 = vld [vmem:[%s214 + $0x1f8] sm:$0xff]
      %v2367 = vld [vmem:[%s214 + $0x200] sm:$0xff]
      %v2368 = vld [vmem:[%s214 + $0x208] sm:$0xff]
      %v2369 = vld [vmem:[%s214 + $0x210] sm:$0xff]
      %v2370 = vld [vmem:[%s214 + $0x218] sm:$0xff]
      %v2371 = vld [vmem:[%s214 + $0x220] sm:$0xff]
      %v2372 = vld [vmem:[%s214 + $0x228] sm:$0xff]
      %v2373 = vld [vmem:[%s214 + $0x230] sm:$0xff]
      %v2374 = vld [vmem:[%s214 + $0x238] sm:$0xff]
      %v2375 = vld [vmem:[%s214 + $0x240] sm:$0xff]
      %v2376 = vld [vmem:[%s214 + $0x248] sm:$0xff]
      %v2377 = vld [vmem:[%s214 + $0x250] sm:$0xff]
      %v2378 = vld [vmem:[%s214 + $0x258] sm:$0xff]
      %v2379 = vld [vmem:[%s214 + $0x260] sm:$0xff]
      %v2380 = vld [vmem:[%s214 + $0x268] sm:$0xff]
      %v2381 = vld [vmem:[%s214 + $0x270] sm:$0xff]
      %v2382 = vld [vmem:[%s214 + $0x278] sm:$0xff]
      %v2383 = vld [vmem:[%s214 + $0x280] sm:$0xff]
      %v2384 = vld [vmem:[%s214 + $0x288] sm:$0xff]
      %v2385 = vld [vmem:[%s214 + $0x290] sm:$0xff]
      %v2386 = vld [vmem:[%s214 + $0x298] sm:$0xff]
      %v2387 = vld [vmem:[%s214 + $0x2a0] sm:$0xff]
      %v2388 = vld [vmem:[%s214 + $0x2a8] sm:$0xff]
      %v2389 = vld [vmem:[%s214 + $0x2b0] sm:$0xff]
      %v2390 = vld [vmem:[%s214 + $0x2b8] sm:$0xff]
      %v2391 = vld [vmem:[%s214 + $0x2c0] sm:$0xff]
      %v2392 = vld [vmem:[%s214 + $0x2c8] sm:$0xff]
      %v2393 = vld [vmem:[%s214 + $0x2d0] sm:$0xff]
      %v2394 = vld [vmem:[%s214 + $0x2d8] sm:$0xff]
      %v2395 = vld [vmem:[%s214 + $0x2e0] sm:$0xff]
      %v2396 = vld [vmem:[%s214 + $0x2e8] sm:$0xff]
      %v2397 = vld [vmem:[%s214 + $0x2f0] sm:$0xff]
      %v2398 = vld [vmem:[%s214 + $0x2f8] sm:$0xff]
      %v2399 = vld [vmem:[%s214 + $0x300] sm:$0xff]
      %v2400 = vld [vmem:[%s214 + $0x308] sm:$0xff]
      %v2401 = vld [vmem:[%s214 + $0x310] sm:$0xff]
      %v2402 = vmul.f32 %v1412, %v2204
      %v2403 = vmul.f32 %v1413, %v2205
      %v2404 = vmul.f32 %v1414, %v2206
      %v2405 = vmul.f32 %v1415, %v2207
      %v2406 = vmul.f32 %v1416, %v2208
      %v2407 = vmul.f32 %v1417, %v2209
      %v2408 = vmul.f32 %v1418, %v2210
      %v2409 = vmul.f32 %v1419, %v2211
      %v2410 = vmul.f32 %v1420, %v2212
      %v2411 = vmul.f32 %v1421, %v2213
      %v2412 = vmul.f32 %v1422, %v2214
      %v2413 = vmul.f32 %v1423, %v2215
      %v2414 = vmul.f32 %v1424, %v2216
      %v2415 = vmul.f32 %v1425, %v2217
      %v2416 = vmul.f32 %v1426, %v2218
      %v2417 = vmul.f32 %v1427, %v2219
      %v2418 = vmul.f32 %v1428, %v2220
      %v2419 = vmul.f32 %v1429, %v2221
      %v2420 = vmul.f32 %v1430, %v2222
      %v2421 = vmul.f32 %v1431, %v2223
      %v2422 = vmul.f32 %v1432, %v2224
      %v2423 = vmul.f32 %v1433, %v2225
      %v2424 = vmul.f32 %v1434, %v2226
      %v2425 = vmul.f32 %v1435, %v2227
      %v2426 = vmul.f32 %v1436, %v2228
      %v2427 = vmul.f32 %v1437, %v2229
      %v2428 = vmul.f32 %v1438, %v2230
      %v2429 = vmul.f32 %v1439, %v2231
      %v2430 = vmul.f32 %v1440, %v2232
      %v2431 = vmul.f32 %v1441, %v2233
      %v2432 = vmul.f32 %v1442, %v2234
      %v2433 = vmul.f32 %v1443, %v2235
      %v2434 = vmul.f32 %v1444, %v2236
      %v2435 = vmul.f32 %v1445, %v2237
      %v2436 = vmul.f32 %v1446, %v2238
      %v2437 = vmul.f32 %v1447, %v2239
      %v2438 = vmul.f32 %v1448, %v2240
      %v2439 = vmul.f32 %v1449, %v2241
      %v2440 = vmul.f32 %v1450, %v2242
      %v2441 = vmul.f32 %v1451, %v2243
      %v2442 = vmul.f32 %v1452, %v2244
      %v2443 = vmul.f32 %v1453, %v2245
      %v2444 = vmul.f32 %v1454, %v2246
      %v2445 = vmul.f32 %v1455, %v2247
      %v2446 = vmul.f32 %v1456, %v2248
      %v2447 = vmul.f32 %v1457, %v2249
      %v2448 = vmul.f32 %v1458, %v2250
      %v2449 = vmul.f32 %v1459, %v2251
      %v2450 = vmul.f32 %v1460, %v2252
      %v2451 = vmul.f32 %v1461, %v2253
      %v2452 = vmul.f32 %v1462, %v2254
      %v2453 = vmul.f32 %v1463, %v2255
      %v2454 = vmul.f32 %v1464, %v2256
      %v2455 = vmul.f32 %v1465, %v2257
      %v2456 = vmul.f32 %v1466, %v2258
      %v2457 = vmul.f32 %v1467, %v2259
      %v2458 = vmul.f32 %v1468, %v2260
      %v2459 = vmul.f32 %v1469, %v2261
      %v2460 = vmul.f32 %v1470, %v2262
      %v2461 = vmul.f32 %v1471, %v2263
      %v2462 = vmul.f32 %v1472, %v2264
      %v2463 = vmul.f32 %v1473, %v2265
      %v2464 = vmul.f32 %v1474, %v2266
      %v2465 = vmul.f32 %v1475, %v2267
      %v2466 = vmul.f32 %v1476, %v2268
      %v2467 = vmul.f32 %v1477, %v2269
      %v2468 = vmul.f32 %v1478, %v2270
      %v2469 = vmul.f32 %v1479, %v2271
      %v2470 = vmul.f32 %v1480, %v2272
      %v2471 = vmul.f32 %v1481, %v2273
      %v2472 = vmul.f32 %v1482, %v2274
      %v2473 = vmul.f32 %v1483, %v2275
      %v2474 = vmul.f32 %v1484, %v2276
      %v2475 = vmul.f32 %v1485, %v2277
      %v2476 = vmul.f32 %v1486, %v2278
      %v2477 = vmul.f32 %v1487, %v2279
      %v2478 = vmul.f32 %v1488, %v2280
      %v2479 = vmul.f32 %v1489, %v2281
      %v2480 = vmul.f32 %v1490, %v2282
      %v2481 = vmul.f32 %v1491, %v2283
      %v2482 = vmul.f32 %v1492, %v2284
      %v2483 = vmul.f32 %v1493, %v2285
      %v2484 = vmul.f32 %v1494, %v2286
      %v2485 = vmul.f32 %v1495, %v2287
      %v2486 = vmul.f32 %v1496, %v2288
      %v2487 = vmul.f32 %v1497, %v2289
      %v2488 = vmul.f32 %v1498, %v2290
      %v2489 = vmul.f32 %v1499, %v2291
      %v2490 = vmul.f32 %v1500, %v2292
      %v2491 = vmul.f32 %v1501, %v2293
      %v2492 = vmul.f32 %v1502, %v2294
      %v2493 = vmul.f32 %v1503, %v2295
      %v2494 = vmul.f32 %v1504, %v2296
      %v2495 = vmul.f32 %v1505, %v2297
      %v2496 = vmul.f32 %v1506, %v2298
      %v2497 = vmul.f32 %v1507, %v2299
      %v2498 = vmul.f32 %v1508, %v2300
      %v2499 = vmul.f32 %v1509, %v2301
      %v2500 = vmul.f32 %v1510, %v2302
      %v2501 = vsub.f32 %v2303, %v2402
      %v2502 = vsub.f32 %v2304, %v2403
      %v2503 = vsub.f32 %v2305, %v2404
      %v2504 = vsub.f32 %v2306, %v2405
      %v2505 = vsub.f32 %v2307, %v2406
      %v2506 = vsub.f32 %v2308, %v2407
      %v2507 = vsub.f32 %v2309, %v2408
      %v2508 = vsub.f32 %v2310, %v2409
      %v2509 = vsub.f32 %v2311, %v2410
      %v2510 = vsub.f32 %v2312, %v2411
      %v2511 = vsub.f32 %v2313, %v2412
      %v2512 = vsub.f32 %v2314, %v2413
      %v2513 = vsub.f32 %v2315, %v2414
      %v2514 = vsub.f32 %v2316, %v2415
      %v2515 = vsub.f32 %v2317, %v2416
      %v2516 = vsub.f32 %v2318, %v2417
      %v2517 = vsub.f32 %v2319, %v2418
      %v2518 = vsub.f32 %v2320, %v2419
      %v2519 = vsub.f32 %v2321, %v2420
      %v2520 = vsub.f32 %v2322, %v2421
      %v2521 = vsub.f32 %v2323, %v2422
      %v2522 = vsub.f32 %v2324, %v2423
      %v2523 = vsub.f32 %v2325, %v2424
      %v2524 = vsub.f32 %v2326, %v2425
      %v2525 = vsub.f32 %v2327, %v2426
      %v2526 = vsub.f32 %v2328, %v2427
      %v2527 = vsub.f32 %v2329, %v2428
      %v2528 = vsub.f32 %v2330, %v2429
      %v2529 = vsub.f32 %v2331, %v2430
      %v2530 = vsub.f32 %v2332, %v2431
      %v2531 = vsub.f32 %v2333, %v2432
      %v2532 = vsub.f32 %v2334, %v2433
      %v2533 = vsub.f32 %v2335, %v2434
      %v2534 = vsub.f32 %v2336, %v2435
      %v2535 = vsub.f32 %v2337, %v2436
      %v2536 = vsub.f32 %v2338, %v2437
      %v2537 = vsub.f32 %v2339, %v2438
      %v2538 = vsub.f32 %v2340, %v2439
      %v2539 = vsub.f32 %v2341, %v2440
      %v2540 = vsub.f32 %v2342, %v2441
      %v2541 = vsub.f32 %v2343, %v2442
      %v2542 = vsub.f32 %v2344, %v2443
      %v2543 = vsub.f32 %v2345, %v2444
      %v2544 = vsub.f32 %v2346, %v2445
      %v2545 = vsub.f32 %v2347, %v2446
      %v2546 = vsub.f32 %v2348, %v2447
      %v2547 = vsub.f32 %v2349, %v2448
      %v2548 = vsub.f32 %v2350, %v2449
      %v2549 = vsub.f32 %v2351, %v2450
      %v2550 = vsub.f32 %v2352, %v2451
      %v2551 = vsub.f32 %v2353, %v2452
      %v2552 = vsub.f32 %v2354, %v2453
      %v2553 = vsub.f32 %v2355, %v2454
      %v2554 = vsub.f32 %v2356, %v2455
      %v2555 = vsub.f32 %v2357, %v2456
      %v2556 = vsub.f32 %v2358, %v2457
      %v2557 = vsub.f32 %v2359, %v2458
      %v2558 = vsub.f32 %v2360, %v2459
      %v2559 = vsub.f32 %v2361, %v2460
      %v2560 = vsub.f32 %v2362, %v2461
      %v2561 = vsub.f32 %v2363, %v2462
      %v2562 = vsub.f32 %v2364, %v2463
      %v2563 = vsub.f32 %v2365, %v2464
      %v2564 = vsub.f32 %v2366, %v2465
      %v2565 = vsub.f32 %v2367, %v2466
      %v2566 = vsub.f32 %v2368, %v2467
      %v2567 = vsub.f32 %v2369, %v2468
      %v2568 = vsub.f32 %v2370, %v2469
      %v2569 = vsub.f32 %v2371, %v2470
      %v2570 = vsub.f32 %v2372, %v2471
      %v2571 = vsub.f32 %v2373, %v2472
      %v2572 = vsub.f32 %v2374, %v2473
      %v2573 = vsub.f32 %v2375, %v2474
      %v2574 = vsub.f32 %v2376, %v2475
      %v2575 = vsub.f32 %v2377, %v2476
      %v2576 = vsub.f32 %v2378, %v2477
      %v2577 = vsub.f32 %v2379, %v2478
      %v2578 = vsub.f32 %v2380, %v2479
      %v2579 = vsub.f32 %v2381, %v2480
      %v2580 = vsub.f32 %v2382, %v2481
      %v2581 = vsub.f32 %v2383, %v2482
      %v2582 = vsub.f32 %v2384, %v2483
      %v2583 = vsub.f32 %v2385, %v2484
      %v2584 = vsub.f32 %v2386, %v2485
      %v2585 = vsub.f32 %v2387, %v2486
      %v2586 = vsub.f32 %v2388, %v2487
      %v2587 = vsub.f32 %v2389, %v2488
      %v2588 = vsub.f32 %v2390, %v2489
      %v2589 = vsub.f32 %v2391, %v2490
      %v2590 = vsub.f32 %v2392, %v2491
      %v2591 = vsub.f32 %v2393, %v2492
      %v2592 = vsub.f32 %v2394, %v2493
      %v2593 = vsub.f32 %v2395, %v2494
      %v2594 = vsub.f32 %v2396, %v2495
      %v2595 = vsub.f32 %v2397, %v2496
      %v2596 = vsub.f32 %v2398, %v2497
      %v2597 = vsub.f32 %v2399, %v2498
      %v2598 = vsub.f32 %v2400, %v2499
      %v2599 = vsub.f32 %v2401, %v2500
      %2601 = vset.pattern.permute.xlu0 0
      %2602 = vperm.xlu0 %2601, %v2204
      %v2603 = vpop.permute.xlu0 %2602
      %2606 = vset.pattern.permute.xlu0 0
      %2607 = vperm.xlu0 %2606, %v2205
      %v2608 = vpop.permute.xlu0 %2607
      %2611 = vset.pattern.permute.xlu0 0
      %2612 = vperm.xlu0 %2611, %v2206
      %v2613 = vpop.permute.xlu0 %2612
      %2616 = vset.pattern.permute.xlu0 0
      %2617 = vperm.xlu0 %2616, %v2207
      %v2618 = vpop.permute.xlu0 %2617
      %2621 = vset.pattern.permute.xlu0 0
      %2622 = vperm.xlu0 %2621, %v2208
      %v2623 = vpop.permute.xlu0 %2622
      %2626 = vset.pattern.permute.xlu0 0
      %2627 = vperm.xlu0 %2626, %v2209
      %v2628 = vpop.permute.xlu0 %2627
      %2631 = vset.pattern.permute.xlu0 0
      %2632 = vperm.xlu0 %2631, %v2210
      %v2633 = vpop.permute.xlu0 %2632
      %2636 = vset.pattern.permute.xlu0 0
      %2637 = vperm.xlu0 %2636, %v2211
      %v2638 = vpop.permute.xlu0 %2637
      %2641 = vset.pattern.permute.xlu0 0
      %2642 = vperm.xlu0 %2641, %v2212
      %v2643 = vpop.permute.xlu0 %2642
      %2646 = vset.pattern.permute.xlu0 0
      %2647 = vperm.xlu0 %2646, %v2213
      %v2648 = vpop.permute.xlu0 %2647
      %2651 = vset.pattern.permute.xlu0 0
      %2652 = vperm.xlu0 %2651, %v2214
      %v2653 = vpop.permute.xlu0 %2652
      %2656 = vset.pattern.permute.xlu0 0
      %2657 = vperm.xlu0 %2656, %v2215
      %v2658 = vpop.permute.xlu0 %2657
      %2661 = vset.pattern.permute.xlu0 0
      %2662 = vperm.xlu0 %2661, %v2216
      %v2663 = vpop.permute.xlu0 %2662
      %2666 = vset.pattern.permute.xlu0 0
      %2667 = vperm.xlu0 %2666, %v2217
      %v2668 = vpop.permute.xlu0 %2667
      %2671 = vset.pattern.permute.xlu0 0
      %2672 = vperm.xlu0 %2671, %v2218
      %v2673 = vpop.permute.xlu0 %2672
      %2676 = vset.pattern.permute.xlu0 0
      %2677 = vperm.xlu0 %2676, %v2219
      %v2678 = vpop.permute.xlu0 %2677
      %2681 = vset.pattern.permute.xlu0 0
      %2682 = vperm.xlu0 %2681, %v2220
      %v2683 = vpop.permute.xlu0 %2682
      %2686 = vset.pattern.permute.xlu0 0
      %2687 = vperm.xlu0 %2686, %v2221
      %v2688 = vpop.permute.xlu0 %2687
      %2691 = vset.pattern.permute.xlu0 0
      %2692 = vperm.xlu0 %2691, %v2222
      %v2693 = vpop.permute.xlu0 %2692
      %2696 = vset.pattern.permute.xlu0 0
      %2697 = vperm.xlu0 %2696, %v2223
      %v2698 = vpop.permute.xlu0 %2697
      %2701 = vset.pattern.permute.xlu0 0
      %2702 = vperm.xlu0 %2701, %v2224
      %v2703 = vpop.permute.xlu0 %2702
      %2706 = vset.pattern.permute.xlu0 0
      %2707 = vperm.xlu0 %2706, %v2225
      %v2708 = vpop.permute.xlu0 %2707
      %2711 = vset.pattern.permute.xlu0 0
      %2712 = vperm.xlu0 %2711, %v2226
      %v2713 = vpop.permute.xlu0 %2712
      %2716 = vset.pattern.permute.xlu0 0
      %2717 = vperm.xlu0 %2716, %v2227
      %v2718 = vpop.permute.xlu0 %2717
      %2721 = vset.pattern.permute.xlu0 0
      %2722 = vperm.xlu0 %2721, %v2228
      %v2723 = vpop.permute.xlu0 %2722
      %2726 = vset.pattern.permute.xlu0 0
      %2727 = vperm.xlu0 %2726, %v2229
      %v2728 = vpop.permute.xlu0 %2727
      %2731 = vset.pattern.permute.xlu0 0
      %2732 = vperm.xlu0 %2731, %v2230
      %v2733 = vpop.permute.xlu0 %2732
      %2736 = vset.pattern.permute.xlu0 0
      %2737 = vperm.xlu0 %2736, %v2231
      %v2738 = vpop.permute.xlu0 %2737
      %2741 = vset.pattern.permute.xlu0 0
      %2742 = vperm.xlu0 %2741, %v2232
      %v2743 = vpop.permute.xlu0 %2742
      %2746 = vset.pattern.permute.xlu0 0
      %2747 = vperm.xlu0 %2746, %v2233
      %v2748 = vpop.permute.xlu0 %2747
      %2751 = vset.pattern.permute.xlu0 0
      %2752 = vperm.xlu0 %2751, %v2234
      %v2753 = vpop.permute.xlu0 %2752
      %2756 = vset.pattern.permute.xlu0 0
      %2757 = vperm.xlu0 %2756, %v2235
      %v2758 = vpop.permute.xlu0 %2757
      %2761 = vset.pattern.permute.xlu0 0
      %2762 = vperm.xlu0 %2761, %v2236
      %v2763 = vpop.permute.xlu0 %2762
      %2766 = vset.pattern.permute.xlu0 0
      %2767 = vperm.xlu0 %2766, %v2237
      %v2768 = vpop.permute.xlu0 %2767
      %2771 = vset.pattern.permute.xlu0 0
      %2772 = vperm.xlu0 %2771, %v2238
      %v2773 = vpop.permute.xlu0 %2772
      %2776 = vset.pattern.permute.xlu0 0
      %2777 = vperm.xlu0 %2776, %v2239
      %v2778 = vpop.permute.xlu0 %2777
      %2781 = vset.pattern.permute.xlu0 0
      %2782 = vperm.xlu0 %2781, %v2240
      %v2783 = vpop.permute.xlu0 %2782
      %2786 = vset.pattern.permute.xlu0 0
      %2787 = vperm.xlu0 %2786, %v2241
      %v2788 = vpop.permute.xlu0 %2787
      %2791 = vset.pattern.permute.xlu0 0
      %2792 = vperm.xlu0 %2791, %v2242
      %v2793 = vpop.permute.xlu0 %2792
      %2796 = vset.pattern.permute.xlu0 0
      %2797 = vperm.xlu0 %2796, %v2243
      %v2798 = vpop.permute.xlu0 %2797
      %2801 = vset.pattern.permute.xlu0 0
      %2802 = vperm.xlu0 %2801, %v2244
      %v2803 = vpop.permute.xlu0 %2802
      %2806 = vset.pattern.permute.xlu0 0
      %2807 = vperm.xlu0 %2806, %v2245
      %v2808 = vpop.permute.xlu0 %2807
      %2811 = vset.pattern.permute.xlu0 0
      %2812 = vperm.xlu0 %2811, %v2246
      %v2813 = vpop.permute.xlu0 %2812
      %2816 = vset.pattern.permute.xlu0 0
      %2817 = vperm.xlu0 %2816, %v2247
      %v2818 = vpop.permute.xlu0 %2817
      %2821 = vset.pattern.permute.xlu0 0
      %2822 = vperm.xlu0 %2821, %v2248
      %v2823 = vpop.permute.xlu0 %2822
      %2826 = vset.pattern.permute.xlu0 0
      %2827 = vperm.xlu0 %2826, %v2249
      %v2828 = vpop.permute.xlu0 %2827
      %2831 = vset.pattern.permute.xlu0 0
      %2832 = vperm.xlu0 %2831, %v2250
      %v2833 = vpop.permute.xlu0 %2832
      %2836 = vset.pattern.permute.xlu0 0
      %2837 = vperm.xlu0 %2836, %v2251
      %v2838 = vpop.permute.xlu0 %2837
      %2841 = vset.pattern.permute.xlu0 0
      %2842 = vperm.xlu0 %2841, %v2252
      %v2843 = vpop.permute.xlu0 %2842
      %2846 = vset.pattern.permute.xlu0 0
      %2847 = vperm.xlu0 %2846, %v2253
      %v2848 = vpop.permute.xlu0 %2847
      %2851 = vset.pattern.permute.xlu0 0
      %2852 = vperm.xlu0 %2851, %v2254
      %v2853 = vpop.permute.xlu0 %2852
      %2856 = vset.pattern.permute.xlu0 0
      %2857 = vperm.xlu0 %2856, %v2255
      %v2858 = vpop.permute.xlu0 %2857
      %2861 = vset.pattern.permute.xlu0 0
      %2862 = vperm.xlu0 %2861, %v2256
      %v2863 = vpop.permute.xlu0 %2862
      %2866 = vset.pattern.permute.xlu0 0
      %2867 = vperm.xlu0 %2866, %v2257
      %v2868 = vpop.permute.xlu0 %2867
      %2871 = vset.pattern.permute.xlu0 0
      %2872 = vperm.xlu0 %2871, %v2258
      %v2873 = vpop.permute.xlu0 %2872
      %2876 = vset.pattern.permute.xlu0 0
      %2877 = vperm.xlu0 %2876, %v2259
      %v2878 = vpop.permute.xlu0 %2877
      %2881 = vset.pattern.permute.xlu0 0
      %2882 = vperm.xlu0 %2881, %v2260
      %v2883 = vpop.permute.xlu0 %2882
      %2886 = vset.pattern.permute.xlu0 0
      %2887 = vperm.xlu0 %2886, %v2261
      %v2888 = vpop.permute.xlu0 %2887
      %2891 = vset.pattern.permute.xlu0 0
      %2892 = vperm.xlu0 %2891, %v2262
      %v2893 = vpop.permute.xlu0 %2892
      %2896 = vset.pattern.permute.xlu0 0
      %2897 = vperm.xlu0 %2896, %v2263
      %v2898 = vpop.permute.xlu0 %2897
      %2901 = vset.pattern.permute.xlu0 0
      %2902 = vperm.xlu0 %2901, %v2264
      %v2903 = vpop.permute.xlu0 %2902
      %2906 = vset.pattern.permute.xlu0 0
      %2907 = vperm.xlu0 %2906, %v2265
      %v2908 = vpop.permute.xlu0 %2907
      %2911 = vset.pattern.permute.xlu0 0
      %2912 = vperm.xlu0 %2911, %v2266
      %v2913 = vpop.permute.xlu0 %2912
      %2916 = vset.pattern.permute.xlu0 0
      %2917 = vperm.xlu0 %2916, %v2267
      %v2918 = vpop.permute.xlu0 %2917
      %2921 = vset.pattern.permute.xlu0 0
      %2922 = vperm.xlu0 %2921, %v2268
      %v2923 = vpop.permute.xlu0 %2922
      %2926 = vset.pattern.permute.xlu0 0
      %2927 = vperm.xlu0 %2926, %v2269
      %v2928 = vpop.permute.xlu0 %2927
      %2931 = vset.pattern.permute.xlu0 0
      %2932 = vperm.xlu0 %2931, %v2270
      %v2933 = vpop.permute.xlu0 %2932
      %2936 = vset.pattern.permute.xlu0 0
      %2937 = vperm.xlu0 %2936, %v2271
      %v2938 = vpop.permute.xlu0 %2937
      %2941 = vset.pattern.permute.xlu0 0
      %2942 = vperm.xlu0 %2941, %v2272
      %v2943 = vpop.permute.xlu0 %2942
      %2946 = vset.pattern.permute.xlu0 0
      %2947 = vperm.xlu0 %2946, %v2273
      %v2948 = vpop.permute.xlu0 %2947
      %2951 = vset.pattern.permute.xlu0 0
      %2952 = vperm.xlu0 %2951, %v2274
      %v2953 = vpop.permute.xlu0 %2952
      %2956 = vset.pattern.permute.xlu0 0
      %2957 = vperm.xlu0 %2956, %v2275
      %v2958 = vpop.permute.xlu0 %2957
      %2961 = vset.pattern.permute.xlu0 0
      %2962 = vperm.xlu0 %2961, %v2276
      %v2963 = vpop.permute.xlu0 %2962
      %2966 = vset.pattern.permute.xlu0 0
      %2967 = vperm.xlu0 %2966, %v2277
      %v2968 = vpop.permute.xlu0 %2967
      %2971 = vset.pattern.permute.xlu0 0
      %2972 = vperm.xlu0 %2971, %v2278
      %v2973 = vpop.permute.xlu0 %2972
      %2976 = vset.pattern.permute.xlu0 0
      %2977 = vperm.xlu0 %2976, %v2279
      %v2978 = vpop.permute.xlu0 %2977
      %2981 = vset.pattern.permute.xlu0 0
      %2982 = vperm.xlu0 %2981, %v2280
      %v2983 = vpop.permute.xlu0 %2982
      %2986 = vset.pattern.permute.xlu0 0
      %2987 = vperm.xlu0 %2986, %v2281
      %v2988 = vpop.permute.xlu0 %2987
      %2991 = vset.pattern.permute.xlu0 0
      %2992 = vperm.xlu0 %2991, %v2282
      %v2993 = vpop.permute.xlu0 %2992
      %2996 = vset.pattern.permute.xlu0 0
      %2997 = vperm.xlu0 %2996, %v2283
      %v2998 = vpop.permute.xlu0 %2997
      %3001 = vset.pattern.permute.xlu0 0
      %3002 = vperm.xlu0 %3001, %v2284
      %v3003 = vpop.permute.xlu0 %3002
      %3006 = vset.pattern.permute.xlu0 0
      %3007 = vperm.xlu0 %3006, %v2285
      %v3008 = vpop.permute.xlu0 %3007
      %3011 = vset.pattern.permute.xlu0 0
      %3012 = vperm.xlu0 %3011, %v2286
      %v3013 = vpop.permute.xlu0 %3012
      %3016 = vset.pattern.permute.xlu0 0
      %3017 = vperm.xlu0 %3016, %v2287
      %v3018 = vpop.permute.xlu0 %3017
      %3021 = vset.pattern.permute.xlu0 0
      %3022 = vperm.xlu0 %3021, %v2288
      %v3023 = vpop.permute.xlu0 %3022
      %3026 = vset.pattern.permute.xlu0 0
      %3027 = vperm.xlu0 %3026, %v2289
      %v3028 = vpop.permute.xlu0 %3027
      %3031 = vset.pattern.permute.xlu0 0
      %3032 = vperm.xlu0 %3031, %v2290
      %v3033 = vpop.permute.xlu0 %3032
      %3036 = vset.pattern.permute.xlu0 0
      %3037 = vperm.xlu0 %3036, %v2291
      %v3038 = vpop.permute.xlu0 %3037
      %3041 = vset.pattern.permute.xlu0 0
      %3042 = vperm.xlu0 %3041, %v2292
      %v3043 = vpop.permute.xlu0 %3042
      %3046 = vset.pattern.permute.xlu0 0
      %3047 = vperm.xlu0 %3046, %v2293
      %v3048 = vpop.permute.xlu0 %3047
      %3051 = vset.pattern.permute.xlu0 0
      %3052 = vperm.xlu0 %3051, %v2294
      %v3053 = vpop.permute.xlu0 %3052
      %3056 = vset.pattern.permute.xlu0 0
      %3057 = vperm.xlu0 %3056, %v2295
      %v3058 = vpop.permute.xlu0 %3057
      %3061 = vset.pattern.permute.xlu0 0
      %3062 = vperm.xlu0 %3061, %v2296
      %v3063 = vpop.permute.xlu0 %3062
      %3066 = vset.pattern.permute.xlu0 0
      %3067 = vperm.xlu0 %3066, %v2297
      %v3068 = vpop.permute.xlu0 %3067
      %3071 = vset.pattern.permute.xlu0 0
      %3072 = vperm.xlu0 %3071, %v2298
      %v3073 = vpop.permute.xlu0 %3072
      %3076 = vset.pattern.permute.xlu0 0
      %3077 = vperm.xlu0 %3076, %v2299
      %v3078 = vpop.permute.xlu0 %3077
      %3081 = vset.pattern.permute.xlu0 0
      %3082 = vperm.xlu0 %3081, %v2300
      %v3083 = vpop.permute.xlu0 %3082
      %3086 = vset.pattern.permute.xlu0 0
      %3087 = vperm.xlu0 %3086, %v2301
      %v3088 = vpop.permute.xlu0 %3087
      %3091 = vset.pattern.permute.xlu0 0
      %3092 = vperm.xlu0 %3091, %v2302
      %v3093 = vpop.permute.xlu0 %3092
      %v3095 = vmul.f32 %v223, %v2603
      %v3096 = vmul.f32 %v224, %v2603
      %v3097 = vmul.f32 %v225, %v2608
      %v3098 = vmul.f32 %v226, %v2608
      %v3099 = vmul.f32 %v227, %v2613
      %v3100 = vmul.f32 %v228, %v2613
      %v3101 = vmul.f32 %v229, %v2618
      %v3102 = vmul.f32 %v230, %v2618
      %v3103 = vmul.f32 %v231, %v2623
      %v3104 = vmul.f32 %v232, %v2623
      %v3105 = vmul.f32 %v233, %v2628
      %v3106 = vmul.f32 %v234, %v2628
      %v3107 = vmul.f32 %v235, %v2633
      %v3108 = vmul.f32 %v236, %v2633
      %v3109 = vmul.f32 %v237, %v2638
      %v3110 = vmul.f32 %v238, %v2638
      %v3111 = vmul.f32 %v239, %v2643
      %v3112 = vmul.f32 %v240, %v2643
      %v3113 = vmul.f32 %v241, %v2648
      %v3114 = vmul.f32 %v242, %v2648
      %v3115 = vmul.f32 %v243, %v2653
      %v3116 = vmul.f32 %v244, %v2653
      %v3117 = vmul.f32 %v245, %v2658
      %v3118 = vmul.f32 %v246, %v2658
      %v3119 = vmul.f32 %v247, %v2663
      %v3120 = vmul.f32 %v248, %v2663
      %v3121 = vmul.f32 %v249, %v2668
      %v3122 = vmul.f32 %v250, %v2668
      %v3123 = vmul.f32 %v251, %v2673
      %v3124 = vmul.f32 %v252, %v2673
      %v3125 = vmul.f32 %v253, %v2678
      %v3126 = vmul.f32 %v254, %v2678
      %v3127 = vmul.f32 %v255, %v2683
      %v3128 = vmul.f32 %v256, %v2683
      %v3129 = vmul.f32 %v257, %v2688
      %v3130 = vmul.f32 %v258, %v2688
      %v3131 = vmul.f32 %v259, %v2693
      %v3132 = vmul.f32 %v260, %v2693
      %v3133 = vmul.f32 %v261, %v2698
      %v3134 = vmul.f32 %v262, %v2698
      %v3135 = vmul.f32 %v263, %v2703
      %v3136 = vmul.f32 %v264, %v2703
      %v3137 = vmul.f32 %v265, %v2708
      %v3138 = vmul.f32 %v266, %v2708
      %v3139 = vmul.f32 %v267, %v2713
      %v3140 = vmul.f32 %v268, %v2713
      %v3141 = vmul.f32 %v269, %v2718
      %v3142 = vmul.f32 %v270, %v2718
      %v3143 = vmul.f32 %v271, %v2723
      %v3144 = vmul.f32 %v272, %v2723
      %v3145 = vmul.f32 %v273, %v2728
      %v3146 = vmul.f32 %v274, %v2728
      %v3147 = vmul.f32 %v275, %v2733
      %v3148 = vmul.f32 %v276, %v2733
      %v3149 = vmul.f32 %v277, %v2738
      %v3150 = vmul.f32 %v278, %v2738
      %v3151 = vmul.f32 %v279, %v2743
      %v3152 = vmul.f32 %v280, %v2743
      %v3153 = vmul.f32 %v281, %v2748
      %v3154 = vmul.f32 %v282, %v2748
      %v3155 = vmul.f32 %v283, %v2753
      %v3156 = vmul.f32 %v284, %v2753
      %v3157 = vmul.f32 %v285, %v2758
      %v3158 = vmul.f32 %v286, %v2758
      %v3159 = vmul.f32 %v287, %v2763
      %v3160 = vmul.f32 %v288, %v2763
      %v3161 = vmul.f32 %v289, %v2768
      %v3162 = vmul.f32 %v290, %v2768
      %v3163 = vmul.f32 %v291, %v2773
      %v3164 = vmul.f32 %v292, %v2773
      %v3165 = vmul.f32 %v293, %v2778
      %v3166 = vmul.f32 %v294, %v2778
      %v3167 = vmul.f32 %v295, %v2783
      %v3168 = vmul.f32 %v296, %v2783
      %v3169 = vmul.f32 %v297, %v2788
      %v3170 = vmul.f32 %v298, %v2788
      %v3171 = vmul.f32 %v299, %v2793
      %v3172 = vmul.f32 %v300, %v2793
      %v3173 = vmul.f32 %v301, %v2798
      %v3174 = vmul.f32 %v302, %v2798
      %v3175 = vmul.f32 %v303, %v2803
      %v3176 = vmul.f32 %v304, %v2803
      %v3177 = vmul.f32 %v305, %v2808
      %v3178 = vmul.f32 %v306, %v2808
      %v3179 = vmul.f32 %v307, %v2813
      %v3180 = vmul.f32 %v308, %v2813
      %v3181 = vmul.f32 %v309, %v2818
      %v3182 = vmul.f32 %v310, %v2818
      %v3183 = vmul.f32 %v311, %v2823
      %v3184 = vmul.f32 %v312, %v2823
      %v3185 = vmul.f32 %v313, %v2828
      %v3186 = vmul.f32 %v314, %v2828
      %v3187 = vmul.f32 %v315, %v2833
      %v3188 = vmul.f32 %v316, %v2833
      %v3189 = vmul.f32 %v317, %v2838
      %v3190 = vmul.f32 %v318, %v2838
      %v3191 = vmul.f32 %v319, %v2843
      %v3192 = vmul.f32 %v320, %v2843
      %v3193 = vmul.f32 %v321, %v2848
      %v3194 = vmul.f32 %v322, %v2848
      %v3195 = vmul.f32 %v323, %v2853
      %v3196 = vmul.f32 %v324, %v2853
      %v3197 = vmul.f32 %v325, %v2858
      %v3198 = vmul.f32 %v326, %v2858
      %v3199 = vmul.f32 %v327, %v2863
      %v3200 = vmul.f32 %v328, %v2863
      %v3201 = vmul.f32 %v329, %v2868
      %v3202 = vmul.f32 %v330, %v2868
      %v3203 = vmul.f32 %v331, %v2873
      %v3204 = vmul.f32 %v332, %v2873
      %v3205 = vmul.f32 %v333, %v2878
      %v3206 = vmul.f32 %v334, %v2878
      %v3207 = vmul.f32 %v335, %v2883
      %v3208 = vmul.f32 %v336, %v2883
      %v3209 = vmul.f32 %v337, %v2888
      %v3210 = vmul.f32 %v338, %v2888
      %v3211 = vmul.f32 %v339, %v2893
      %v3212 = vmul.f32 %v340, %v2893
      %v3213 = vmul.f32 %v341, %v2898
      %v3214 = vmul.f32 %v342, %v2898
      %v3215 = vmul.f32 %v343, %v2903
      %v3216 = vmul.f32 %v344, %v2903
      %v3217 = vmul.f32 %v345, %v2908
      %v3218 = vmul.f32 %v346, %v2908
      %v3219 = vmul.f32 %v347, %v2913
      %v3220 = vmul.f32 %v348, %v2913
      %v3221 = vmul.f32 %v349, %v2918
      %v3222 = vmul.f32 %v350, %v2918
      %v3223 = vmul.f32 %v351, %v2923
      %v3224 = vmul.f32 %v352, %v2923
      %v3225 = vmul.f32 %v353, %v2928
      %v3226 = vmul.f32 %v354, %v2928
      %v3227 = vmul.f32 %v355, %v2933
      %v3228 = vmul.f32 %v356, %v2933
      %v3229 = vmul.f32 %v357, %v2938
      %v3230 = vmul.f32 %v358, %v2938
      %v3231 = vmul.f32 %v359, %v2943
      %v3232 = vmul.f32 %v360, %v2943
      %v3233 = vmul.f32 %v361, %v2948
      %v3234 = vmul.f32 %v362, %v2948
      %v3235 = vmul.f32 %v363, %v2953
      %v3236 = vmul.f32 %v364, %v2953
      %v3237 = vmul.f32 %v365, %v2958
      %v3238 = vmul.f32 %v366, %v2958
      %v3239 = vmul.f32 %v367, %v2963
      %v3240 = vmul.f32 %v368, %v2963
      %v3241 = vmul.f32 %v369, %v2968
      %v3242 = vmul.f32 %v370, %v2968
      %v3243 = vmul.f32 %v371, %v2973
      %v3244 = vmul.f32 %v372, %v2973
      %v3245 = vmul.f32 %v373, %v2978
      %v3246 = vmul.f32 %v374, %v2978
      %v3247 = vmul.f32 %v375, %v2983
      %v3248 = vmul.f32 %v376, %v2983
      %v3249 = vmul.f32 %v377, %v2988
      %v3250 = vmul.f32 %v378, %v2988
      %v3251 = vmul.f32 %v379, %v2993
      %v3252 = vmul.f32 %v380, %v2993
      %v3253 = vmul.f32 %v381, %v2998
      %v3254 = vmul.f32 %v382, %v2998
      %v3255 = vmul.f32 %v383, %v3003
      %v3256 = vmul.f32 %v384, %v3003
      %v3257 = vmul.f32 %v385, %v3008
      %v3258 = vmul.f32 %v386, %v3008
      %v3259 = vmul.f32 %v387, %v3013
      %v3260 = vmul.f32 %v388, %v3013
      %v3261 = vmul.f32 %v389, %v3018
      %v3262 = vmul.f32 %v390, %v3018
      %v3263 = vmul.f32 %v391, %v3023
      %v3264 = vmul.f32 %v392, %v3023
      %v3265 = vmul.f32 %v393, %v3028
      %v3266 = vmul.f32 %v394, %v3028
      %v3267 = vmul.f32 %v395, %v3033
      %v3268 = vmul.f32 %v396, %v3033
      %v3269 = vmul.f32 %v397, %v3038
      %v3270 = vmul.f32 %v398, %v3038
      %v3271 = vmul.f32 %v399, %v3043
      %v3272 = vmul.f32 %v400, %v3043
      %v3273 = vmul.f32 %v401, %v3048
      %v3274 = vmul.f32 %v402, %v3048
      %v3275 = vmul.f32 %v403, %v3053
      %v3276 = vmul.f32 %v404, %v3053
      %v3277 = vmul.f32 %v405, %v3058
      %v3278 = vmul.f32 %v406, %v3058
      %v3279 = vmul.f32 %v407, %v3063
      %v3280 = vmul.f32 %v408, %v3063
      %v3281 = vmul.f32 %v409, %v3068
      %v3282 = vmul.f32 %v410, %v3068
      %v3283 = vmul.f32 %v411, %v3073
      %v3284 = vmul.f32 %v412, %v3073
      %v3285 = vmul.f32 %v413, %v3078
      %v3286 = vmul.f32 %v414, %v3078
      %v3287 = vmul.f32 %v415, %v3083
      %v3288 = vmul.f32 %v416, %v3083
      %v3289 = vmul.f32 %v417, %v3088
      %v3290 = vmul.f32 %v418, %v3088
      %v3291 = vmul.f32 %v419, %v3093
      %v3292 = vmul.f32 %v420, %v3093
      %3294 = vset.pattern.permute.xlu0 0
      %3295 = vperm.xlu0 %3294, %v2501
      %v3296 = vpop.permute.xlu0 %3295
      %3299 = vset.pattern.permute.xlu0 0
      %3300 = vperm.xlu0 %3299, %v2502
      %v3301 = vpop.permute.xlu0 %3300
      %3304 = vset.pattern.permute.xlu0 0
      %3305 = vperm.xlu0 %3304, %v2503
      %v3306 = vpop.permute.xlu0 %3305
      %3309 = vset.pattern.permute.xlu0 0
      %3310 = vperm.xlu0 %3309, %v2504
      %v3311 = vpop.permute.xlu0 %3310
      %3314 = vset.pattern.permute.xlu0 0
      %3315 = vperm.xlu0 %3314, %v2505
      %v3316 = vpop.permute.xlu0 %3315
      %3319 = vset.pattern.permute.xlu0 0
      %3320 = vperm.xlu0 %3319, %v2506
      %v3321 = vpop.permute.xlu0 %3320
      %3324 = vset.pattern.permute.xlu0 0
      %3325 = vperm.xlu0 %3324, %v2507
      %v3326 = vpop.permute.xlu0 %3325
      %3329 = vset.pattern.permute.xlu0 0
      %3330 = vperm.xlu0 %3329, %v2508
      %v3331 = vpop.permute.xlu0 %3330
      %3334 = vset.pattern.permute.xlu0 0
      %3335 = vperm.xlu0 %3334, %v2509
      %v3336 = vpop.permute.xlu0 %3335
      %3339 = vset.pattern.permute.xlu0 0
      %3340 = vperm.xlu0 %3339, %v2510
      %v3341 = vpop.permute.xlu0 %3340
      %3344 = vset.pattern.permute.xlu0 0
      %3345 = vperm.xlu0 %3344, %v2511
      %v3346 = vpop.permute.xlu0 %3345
      %3349 = vset.pattern.permute.xlu0 0
      %3350 = vperm.xlu0 %3349, %v2512
      %v3351 = vpop.permute.xlu0 %3350
      %3354 = vset.pattern.permute.xlu0 0
      %3355 = vperm.xlu0 %3354, %v2513
      %v3356 = vpop.permute.xlu0 %3355
      %3359 = vset.pattern.permute.xlu0 0
      %3360 = vperm.xlu0 %3359, %v2514
      %v3361 = vpop.permute.xlu0 %3360
      %3364 = vset.pattern.permute.xlu0 0
      %3365 = vperm.xlu0 %3364, %v2515
      %v3366 = vpop.permute.xlu0 %3365
      %3369 = vset.pattern.permute.xlu0 0
      %3370 = vperm.xlu0 %3369, %v2516
      %v3371 = vpop.permute.xlu0 %3370
      %3374 = vset.pattern.permute.xlu0 0
      %3375 = vperm.xlu0 %3374, %v2517
      %v3376 = vpop.permute.xlu0 %3375
      %3379 = vset.pattern.permute.xlu0 0
      %3380 = vperm.xlu0 %3379, %v2518
      %v3381 = vpop.permute.xlu0 %3380
      %3384 = vset.pattern.permute.xlu0 0
      %3385 = vperm.xlu0 %3384, %v2519
      %v3386 = vpop.permute.xlu0 %3385
      %3389 = vset.pattern.permute.xlu0 0
      %3390 = vperm.xlu0 %3389, %v2520
      %v3391 = vpop.permute.xlu0 %3390
      %3394 = vset.pattern.permute.xlu0 0
      %3395 = vperm.xlu0 %3394, %v2521
      %v3396 = vpop.permute.xlu0 %3395
      %3399 = vset.pattern.permute.xlu0 0
      %3400 = vperm.xlu0 %3399, %v2522
      %v3401 = vpop.permute.xlu0 %3400
      %3404 = vset.pattern.permute.xlu0 0
      %3405 = vperm.xlu0 %3404, %v2523
      %v3406 = vpop.permute.xlu0 %3405
      %3409 = vset.pattern.permute.xlu0 0
      %3410 = vperm.xlu0 %3409, %v2524
      %v3411 = vpop.permute.xlu0 %3410
      %3414 = vset.pattern.permute.xlu0 0
      %3415 = vperm.xlu0 %3414, %v2525
      %v3416 = vpop.permute.xlu0 %3415
      %3419 = vset.pattern.permute.xlu0 0
      %3420 = vperm.xlu0 %3419, %v2526
      %v3421 = vpop.permute.xlu0 %3420
      %3424 = vset.pattern.permute.xlu0 0
      %3425 = vperm.xlu0 %3424, %v2527
      %v3426 = vpop.permute.xlu0 %3425
      %3429 = vset.pattern.permute.xlu0 0
      %3430 = vperm.xlu0 %3429, %v2528
      %v3431 = vpop.permute.xlu0 %3430
      %3434 = vset.pattern.permute.xlu0 0
      %3435 = vperm.xlu0 %3434, %v2529
      %v3436 = vpop.permute.xlu0 %3435
      %3439 = vset.pattern.permute.xlu0 0
      %3440 = vperm.xlu0 %3439, %v2530
      %v3441 = vpop.permute.xlu0 %3440
      %3444 = vset.pattern.permute.xlu0 0
      %3445 = vperm.xlu0 %3444, %v2531
      %v3446 = vpop.permute.xlu0 %3445
      %3449 = vset.pattern.permute.xlu0 0
      %3450 = vperm.xlu0 %3449, %v2532
      %v3451 = vpop.permute.xlu0 %3450
      %3454 = vset.pattern.permute.xlu0 0
      %3455 = vperm.xlu0 %3454, %v2533
      %v3456 = vpop.permute.xlu0 %3455
      %3459 = vset.pattern.permute.xlu0 0
      %3460 = vperm.xlu0 %3459, %v2534
      %v3461 = vpop.permute.xlu0 %3460
      %3464 = vset.pattern.permute.xlu0 0
      %3465 = vperm.xlu0 %3464, %v2535
      %v3466 = vpop.permute.xlu0 %3465
      %3469 = vset.pattern.permute.xlu0 0
      %3470 = vperm.xlu0 %3469, %v2536
      %v3471 = vpop.permute.xlu0 %3470
      %3474 = vset.pattern.permute.xlu0 0
      %3475 = vperm.xlu0 %3474, %v2537
      %v3476 = vpop.permute.xlu0 %3475
      %3479 = vset.pattern.permute.xlu0 0
      %3480 = vperm.xlu0 %3479, %v2538
      %v3481 = vpop.permute.xlu0 %3480
      %3484 = vset.pattern.permute.xlu0 0
      %3485 = vperm.xlu0 %3484, %v2539
      %v3486 = vpop.permute.xlu0 %3485
      %3489 = vset.pattern.permute.xlu0 0
      %3490 = vperm.xlu0 %3489, %v2540
      %v3491 = vpop.permute.xlu0 %3490
      %3494 = vset.pattern.permute.xlu0 0
      %3495 = vperm.xlu0 %3494, %v2541
      %v3496 = vpop.permute.xlu0 %3495
      %3499 = vset.pattern.permute.xlu0 0
      %3500 = vperm.xlu0 %3499, %v2542
      %v3501 = vpop.permute.xlu0 %3500
      %3504 = vset.pattern.permute.xlu0 0
      %3505 = vperm.xlu0 %3504, %v2543
      %v3506 = vpop.permute.xlu0 %3505
      %3509 = vset.pattern.permute.xlu0 0
      %3510 = vperm.xlu0 %3509, %v2544
      %v3511 = vpop.permute.xlu0 %3510
      %3514 = vset.pattern.permute.xlu0 0
      %3515 = vperm.xlu0 %3514, %v2545
      %v3516 = vpop.permute.xlu0 %3515
      %3519 = vset.pattern.permute.xlu0 0
      %3520 = vperm.xlu0 %3519, %v2546
      %v3521 = vpop.permute.xlu0 %3520
      %3524 = vset.pattern.permute.xlu0 0
      %3525 = vperm.xlu0 %3524, %v2547
      %v3526 = vpop.permute.xlu0 %3525
      %3529 = vset.pattern.permute.xlu0 0
      %3530 = vperm.xlu0 %3529, %v2548
      %v3531 = vpop.permute.xlu0 %3530
      %3534 = vset.pattern.permute.xlu0 0
      %3535 = vperm.xlu0 %3534, %v2549
      %v3536 = vpop.permute.xlu0 %3535
      %3539 = vset.pattern.permute.xlu0 0
      %3540 = vperm.xlu0 %3539, %v2550
      %v3541 = vpop.permute.xlu0 %3540
      %3544 = vset.pattern.permute.xlu0 0
      %3545 = vperm.xlu0 %3544, %v2551
      %v3546 = vpop.permute.xlu0 %3545
      %3549 = vset.pattern.permute.xlu0 0
      %3550 = vperm.xlu0 %3549, %v2552
      %v3551 = vpop.permute.xlu0 %3550
      %3554 = vset.pattern.permute.xlu0 0
      %3555 = vperm.xlu0 %3554, %v2553
      %v3556 = vpop.permute.xlu0 %3555
      %3559 = vset.pattern.permute.xlu0 0
      %3560 = vperm.xlu0 %3559, %v2554
      %v3561 = vpop.permute.xlu0 %3560
      %3564 = vset.pattern.permute.xlu0 0
      %3565 = vperm.xlu0 %3564, %v2555
      %v3566 = vpop.permute.xlu0 %3565
      %3569 = vset.pattern.permute.xlu0 0
      %3570 = vperm.xlu0 %3569, %v2556
      %v3571 = vpop.permute.xlu0 %3570
      %3574 = vset.pattern.permute.xlu0 0
      %3575 = vperm.xlu0 %3574, %v2557
      %v3576 = vpop.permute.xlu0 %3575
      %3579 = vset.pattern.permute.xlu0 0
      %3580 = vperm.xlu0 %3579, %v2558
      %v3581 = vpop.permute.xlu0 %3580
      %3584 = vset.pattern.permute.xlu0 0
      %3585 = vperm.xlu0 %3584, %v2559
      %v3586 = vpop.permute.xlu0 %3585
      %3589 = vset.pattern.permute.xlu0 0
      %3590 = vperm.xlu0 %3589, %v2560
      %v3591 = vpop.permute.xlu0 %3590
      %3594 = vset.pattern.permute.xlu0 0
      %3595 = vperm.xlu0 %3594, %v2561
      %v3596 = vpop.permute.xlu0 %3595
      %3599 = vset.pattern.permute.xlu0 0
      %3600 = vperm.xlu0 %3599, %v2562
      %v3601 = vpop.permute.xlu0 %3600
      %3604 = vset.pattern.permute.xlu0 0
      %3605 = vperm.xlu0 %3604, %v2563
      %v3606 = vpop.permute.xlu0 %3605
      %3609 = vset.pattern.permute.xlu0 0
      %3610 = vperm.xlu0 %3609, %v2564
      %v3611 = vpop.permute.xlu0 %3610
      %3614 = vset.pattern.permute.xlu0 0
      %3615 = vperm.xlu0 %3614, %v2565
      %v3616 = vpop.permute.xlu0 %3615
      %3619 = vset.pattern.permute.xlu0 0
      %3620 = vperm.xlu0 %3619, %v2566
      %v3621 = vpop.permute.xlu0 %3620
      %3624 = vset.pattern.permute.xlu0 0
      %3625 = vperm.xlu0 %3624, %v2567
      %v3626 = vpop.permute.xlu0 %3625
      %3629 = vset.pattern.permute.xlu0 0
      %3630 = vperm.xlu0 %3629, %v2568
      %v3631 = vpop.permute.xlu0 %3630
      %3634 = vset.pattern.permute.xlu0 0
      %3635 = vperm.xlu0 %3634, %v2569
      %v3636 = vpop.permute.xlu0 %3635
      %3639 = vset.pattern.permute.xlu0 0
      %3640 = vperm.xlu0 %3639, %v2570
      %v3641 = vpop.permute.xlu0 %3640
      %3644 = vset.pattern.permute.xlu0 0
      %3645 = vperm.xlu0 %3644, %v2571
      %v3646 = vpop.permute.xlu0 %3645
      %3649 = vset.pattern.permute.xlu0 0
      %3650 = vperm.xlu0 %3649, %v2572
      %v3651 = vpop.permute.xlu0 %3650
      %3654 = vset.pattern.permute.xlu0 0
      %3655 = vperm.xlu0 %3654, %v2573
      %v3656 = vpop.permute.xlu0 %3655
      %3659 = vset.pattern.permute.xlu0 0
      %3660 = vperm.xlu0 %3659, %v2574
      %v3661 = vpop.permute.xlu0 %3660
      %3664 = vset.pattern.permute.xlu0 0
      %3665 = vperm.xlu0 %3664, %v2575
      %v3666 = vpop.permute.xlu0 %3665
      %3669 = vset.pattern.permute.xlu0 0
      %3670 = vperm.xlu0 %3669, %v2576
      %v3671 = vpop.permute.xlu0 %3670
      %3674 = vset.pattern.permute.xlu0 0
      %3675 = vperm.xlu0 %3674, %v2577
      %v3676 = vpop.permute.xlu0 %3675
      %3679 = vset.pattern.permute.xlu0 0
      %3680 = vperm.xlu0 %3679, %v2578
      %v3681 = vpop.permute.xlu0 %3680
      %3684 = vset.pattern.permute.xlu0 0
      %3685 = vperm.xlu0 %3684, %v2579
      %v3686 = vpop.permute.xlu0 %3685
      %3689 = vset.pattern.permute.xlu0 0
      %3690 = vperm.xlu0 %3689, %v2580
      %v3691 = vpop.permute.xlu0 %3690
      %3694 = vset.pattern.permute.xlu0 0
      %3695 = vperm.xlu0 %3694, %v2581
      %v3696 = vpop.permute.xlu0 %3695
      %3699 = vset.pattern.permute.xlu0 0
      %3700 = vperm.xlu0 %3699, %v2582
      %v3701 = vpop.permute.xlu0 %3700
      %3704 = vset.pattern.permute.xlu0 0
      %3705 = vperm.xlu0 %3704, %v2583
      %v3706 = vpop.permute.xlu0 %3705
      %3709 = vset.pattern.permute.xlu0 0
      %3710 = vperm.xlu0 %3709, %v2584
      %v3711 = vpop.permute.xlu0 %3710
      %3714 = vset.pattern.permute.xlu0 0
      %3715 = vperm.xlu0 %3714, %v2585
      %v3716 = vpop.permute.xlu0 %3715
      %3719 = vset.pattern.permute.xlu0 0
      %3720 = vperm.xlu0 %3719, %v2586
      %v3721 = vpop.permute.xlu0 %3720
      %3724 = vset.pattern.permute.xlu0 0
      %3725 = vperm.xlu0 %3724, %v2587
      %v3726 = vpop.permute.xlu0 %3725
      %3729 = vset.pattern.permute.xlu0 0
      %3730 = vperm.xlu0 %3729, %v2588
      %v3731 = vpop.permute.xlu0 %3730
      %3734 = vset.pattern.permute.xlu0 0
      %3735 = vperm.xlu0 %3734, %v2589
      %v3736 = vpop.permute.xlu0 %3735
      %3739 = vset.pattern.permute.xlu0 0
      %3740 = vperm.xlu0 %3739, %v2590
      %v3741 = vpop.permute.xlu0 %3740
      %3744 = vset.pattern.permute.xlu0 0
      %3745 = vperm.xlu0 %3744, %v2591
      %v3746 = vpop.permute.xlu0 %3745
      %3749 = vset.pattern.permute.xlu0 0
      %3750 = vperm.xlu0 %3749, %v2592
      %v3751 = vpop.permute.xlu0 %3750
      %3754 = vset.pattern.permute.xlu0 0
      %3755 = vperm.xlu0 %3754, %v2593
      %v3756 = vpop.permute.xlu0 %3755
      %3759 = vset.pattern.permute.xlu0 0
      %3760 = vperm.xlu0 %3759, %v2594
      %v3761 = vpop.permute.xlu0 %3760
      %3764 = vset.pattern.permute.xlu0 0
      %3765 = vperm.xlu0 %3764, %v2595
      %v3766 = vpop.permute.xlu0 %3765
      %3769 = vset.pattern.permute.xlu0 0
      %3770 = vperm.xlu0 %3769, %v2596
      %v3771 = vpop.permute.xlu0 %3770
      %3774 = vset.pattern.permute.xlu0 0
      %3775 = vperm.xlu0 %3774, %v2597
      %v3776 = vpop.permute.xlu0 %3775
      %3779 = vset.pattern.permute.xlu0 0
      %3780 = vperm.xlu0 %3779, %v2598
      %v3781 = vpop.permute.xlu0 %3780
      %3784 = vset.pattern.permute.xlu0 0
      %3785 = vperm.xlu0 %3784, %v2599
      %v3786 = vpop.permute.xlu0 %3785
      %v3788 = vadd.f32 %v3095, %v3296
      %v3789 = vadd.f32 %v3096, %v3296
      %v3790 = vadd.f32 %v3097, %v3301
      %v3791 = vadd.f32 %v3098, %v3301
      %v3792 = vadd.f32 %v3099, %v3306
      %v3793 = vadd.f32 %v3100, %v3306
      %v3794 = vadd.f32 %v3101, %v3311
      %v3795 = vadd.f32 %v3102, %v3311
      %v3796 = vadd.f32 %v3103, %v3316
      %v3797 = vadd.f32 %v3104, %v3316
      %v3798 = vadd.f32 %v3105, %v3321
      %v3799 = vadd.f32 %v3106, %v3321
      %v3800 = vadd.f32 %v3107, %v3326
      %v3801 = vadd.f32 %v3108, %v3326
      %v3802 = vadd.f32 %v3109, %v3331
      %v3803 = vadd.f32 %v3110, %v3331
      %v3804 = vadd.f32 %v3111, %v3336
      %v3805 = vadd.f32 %v3112, %v3336
      %v3806 = vadd.f32 %v3113, %v3341
      %v3807 = vadd.f32 %v3114, %v3341
      %v3808 = vadd.f32 %v3115, %v3346
      %v3809 = vadd.f32 %v3116, %v3346
      %v3810 = vadd.f32 %v3117, %v3351
      %v3811 = vadd.f32 %v3118, %v3351
      %v3812 = vadd.f32 %v3119, %v3356
      %v3813 = vadd.f32 %v3120, %v3356
      %v3814 = vadd.f32 %v3121, %v3361
      %v3815 = vadd.f32 %v3122, %v3361
      %v3816 = vadd.f32 %v3123, %v3366
      %v3817 = vadd.f32 %v3124, %v3366
      %v3818 = vadd.f32 %v3125, %v3371
      %v3819 = vadd.f32 %v3126, %v3371
      %v3820 = vadd.f32 %v3127, %v3376
      %v3821 = vadd.f32 %v3128, %v3376
      %v3822 = vadd.f32 %v3129, %v3381
      %v3823 = vadd.f32 %v3130, %v3381
      %v3824 = vadd.f32 %v3131, %v3386
      %v3825 = vadd.f32 %v3132, %v3386
      %v3826 = vadd.f32 %v3133, %v3391
      %v3827 = vadd.f32 %v3134, %v3391
      %v3828 = vadd.f32 %v3135, %v3396
      %v3829 = vadd.f32 %v3136, %v3396
      %v3830 = vadd.f32 %v3137, %v3401
      %v3831 = vadd.f32 %v3138, %v3401
      %v3832 = vadd.f32 %v3139, %v3406
      %v3833 = vadd.f32 %v3140, %v3406
      %v3834 = vadd.f32 %v3141, %v3411
      %v3835 = vadd.f32 %v3142, %v3411
      %v3836 = vadd.f32 %v3143, %v3416
      %v3837 = vadd.f32 %v3144, %v3416
      %v3838 = vadd.f32 %v3145, %v3421
      %v3839 = vadd.f32 %v3146, %v3421
      %v3840 = vadd.f32 %v3147, %v3426
      %v3841 = vadd.f32 %v3148, %v3426
      %v3842 = vadd.f32 %v3149, %v3431
      %v3843 = vadd.f32 %v3150, %v3431
      %v3844 = vadd.f32 %v3151, %v3436
      %v3845 = vadd.f32 %v3152, %v3436
      %v3846 = vadd.f32 %v3153, %v3441
      %v3847 = vadd.f32 %v3154, %v3441
      %v3848 = vadd.f32 %v3155, %v3446
      %v3849 = vadd.f32 %v3156, %v3446
      %v3850 = vadd.f32 %v3157, %v3451
      %v3851 = vadd.f32 %v3158, %v3451
      %v3852 = vadd.f32 %v3159, %v3456
      %v3853 = vadd.f32 %v3160, %v3456
      %v3854 = vadd.f32 %v3161, %v3461
      %v3855 = vadd.f32 %v3162, %v3461
      %v3856 = vadd.f32 %v3163, %v3466
      %v3857 = vadd.f32 %v3164, %v3466
      %v3858 = vadd.f32 %v3165, %v3471
      %v3859 = vadd.f32 %v3166, %v3471
      %v3860 = vadd.f32 %v3167, %v3476
      %v3861 = vadd.f32 %v3168, %v3476
      %v3862 = vadd.f32 %v3169, %v3481
      %v3863 = vadd.f32 %v3170, %v3481
      %v3864 = vadd.f32 %v3171, %v3486
      %v3865 = vadd.f32 %v3172, %v3486
      %v3866 = vadd.f32 %v3173, %v3491
      %v3867 = vadd.f32 %v3174, %v3491
      %v3868 = vadd.f32 %v3175, %v3496
      %v3869 = vadd.f32 %v3176, %v3496
      %v3870 = vadd.f32 %v3177, %v3501
      %v3871 = vadd.f32 %v3178, %v3501
      %v3872 = vadd.f32 %v3179, %v3506
      %v3873 = vadd.f32 %v3180, %v3506
      %v3874 = vadd.f32 %v3181, %v3511
      %v3875 = vadd.f32 %v3182, %v3511
      %v3876 = vadd.f32 %v3183, %v3516
      %v3877 = vadd.f32 %v3184, %v3516
      %v3878 = vadd.f32 %v3185, %v3521
      %v3879 = vadd.f32 %v3186, %v3521
      %v3880 = vadd.f32 %v3187, %v3526
      %v3881 = vadd.f32 %v3188, %v3526
      %v3882 = vadd.f32 %v3189, %v3531
      %v3883 = vadd.f32 %v3190, %v3531
      %v3884 = vadd.f32 %v3191, %v3536
      %v3885 = vadd.f32 %v3192, %v3536
      %v3886 = vadd.f32 %v3193, %v3541
      %v3887 = vadd.f32 %v3194, %v3541
      %v3888 = vadd.f32 %v3195, %v3546
      %v3889 = vadd.f32 %v3196, %v3546
      %v3890 = vadd.f32 %v3197, %v3551
      %v3891 = vadd.f32 %v3198, %v3551
      %v3892 = vadd.f32 %v3199, %v3556
      %v3893 = vadd.f32 %v3200, %v3556
      %v3894 = vadd.f32 %v3201, %v3561
      %v3895 = vadd.f32 %v3202, %v3561
      %v3896 = vadd.f32 %v3203, %v3566
      %v3897 = vadd.f32 %v3204, %v3566
      %v3898 = vadd.f32 %v3205, %v3571
      %v3899 = vadd.f32 %v3206, %v3571
      %v3900 = vadd.f32 %v3207, %v3576
      %v3901 = vadd.f32 %v3208, %v3576
      %v3902 = vadd.f32 %v3209, %v3581
      %v3903 = vadd.f32 %v3210, %v3581
      %v3904 = vadd.f32 %v3211, %v3586
      %v3905 = vadd.f32 %v3212, %v3586
      %v3906 = vadd.f32 %v3213, %v3591
      %v3907 = vadd.f32 %v3214, %v3591
      %v3908 = vadd.f32 %v3215, %v3596
      %v3909 = vadd.f32 %v3216, %v3596
      %v3910 = vadd.f32 %v3217, %v3601
      %v3911 = vadd.f32 %v3218, %v3601
      %v3912 = vadd.f32 %v3219, %v3606
      %v3913 = vadd.f32 %v3220, %v3606
      %v3914 = vadd.f32 %v3221, %v3611
      %v3915 = vadd.f32 %v3222, %v3611
      %v3916 = vadd.f32 %v3223, %v3616
      %v3917 = vadd.f32 %v3224, %v3616
      %v3918 = vadd.f32 %v3225, %v3621
      %v3919 = vadd.f32 %v3226, %v3621
      %v3920 = vadd.f32 %v3227, %v3626
      %v3921 = vadd.f32 %v3228, %v3626
      %v3922 = vadd.f32 %v3229, %v3631
      %v3923 = vadd.f32 %v3230, %v3631
      %v3924 = vadd.f32 %v3231, %v3636
      %v3925 = vadd.f32 %v3232, %v3636
      %v3926 = vadd.f32 %v3233, %v3641
      %v3927 = vadd.f32 %v3234, %v3641
      %v3928 = vadd.f32 %v3235, %v3646
      %v3929 = vadd.f32 %v3236, %v3646
      %v3930 = vadd.f32 %v3237, %v3651
      %v3931 = vadd.f32 %v3238, %v3651
      %v3932 = vadd.f32 %v3239, %v3656
      %v3933 = vadd.f32 %v3240, %v3656
      %v3934 = vadd.f32 %v3241, %v3661
      %v3935 = vadd.f32 %v3242, %v3661
      %v3936 = vadd.f32 %v3243, %v3666
      %v3937 = vadd.f32 %v3244, %v3666
      %v3938 = vadd.f32 %v3245, %v3671
      %v3939 = vadd.f32 %v3246, %v3671
      %v3940 = vadd.f32 %v3247, %v3676
      %v3941 = vadd.f32 %v3248, %v3676
      %v3942 = vadd.f32 %v3249, %v3681
      %v3943 = vadd.f32 %v3250, %v3681
      %v3944 = vadd.f32 %v3251, %v3686
      %v3945 = vadd.f32 %v3252, %v3686
      %v3946 = vadd.f32 %v3253, %v3691
      %v3947 = vadd.f32 %v3254, %v3691
      %v3948 = vadd.f32 %v3255, %v3696
      %v3949 = vadd.f32 %v3256, %v3696
      %v3950 = vadd.f32 %v3257, %v3701
      %v3951 = vadd.f32 %v3258, %v3701
      %v3952 = vadd.f32 %v3259, %v3706
      %v3953 = vadd.f32 %v3260, %v3706
      %v3954 = vadd.f32 %v3261, %v3711
      %v3955 = vadd.f32 %v3262, %v3711
      %v3956 = vadd.f32 %v3263, %v3716
      %v3957 = vadd.f32 %v3264, %v3716
      %v3958 = vadd.f32 %v3265, %v3721
      %v3959 = vadd.f32 %v3266, %v3721
      %v3960 = vadd.f32 %v3267, %v3726
      %v3961 = vadd.f32 %v3268, %v3726
      %v3962 = vadd.f32 %v3269, %v3731
      %v3963 = vadd.f32 %v3270, %v3731
      %v3964 = vadd.f32 %v3271, %v3736
      %v3965 = vadd.f32 %v3272, %v3736
      %v3966 = vadd.f32 %v3273, %v3741
      %v3967 = vadd.f32 %v3274, %v3741
      %v3968 = vadd.f32 %v3275, %v3746
      %v3969 = vadd.f32 %v3276, %v3746
      %v3970 = vadd.f32 %v3277, %v3751
      %v3971 = vadd.f32 %v3278, %v3751
      %v3972 = vadd.f32 %v3279, %v3756
      %v3973 = vadd.f32 %v3280, %v3756
      %v3974 = vadd.f32 %v3281, %v3761
      %v3975 = vadd.f32 %v3282, %v3761
      %v3976 = vadd.f32 %v3283, %v3766
      %v3977 = vadd.f32 %v3284, %v3766
      %v3978 = vadd.f32 %v3285, %v3771
      %v3979 = vadd.f32 %v3286, %v3771
      %v3980 = vadd.f32 %v3287, %v3776
      %v3981 = vadd.f32 %v3288, %v3776
      %v3982 = vadd.f32 %v3289, %v3781
      %v3983 = vadd.f32 %v3290, %v3781
      %v3984 = vadd.f32 %v3291, %v3786
      %v3985 = vadd.f32 %v3292, %v3786
      %3986 = vst [vmem:[%s221] sm:$0xff] %v3788
      %3987 = vst.msk [vmem:[%s221 + $0x8] sm:$0xff] %vm421, %v3789
      %3988 = vst [vmem:[%s221 + $0x10] sm:$0xff] %v3790
      %3989 = vst.msk [vmem:[%s221 + $0x18] sm:$0xff] %vm421, %v3791
      %3990 = vst [vmem:[%s221 + $0x20] sm:$0xff] %v3792
      %3991 = vst.msk [vmem:[%s221 + $0x28] sm:$0xff] %vm421, %v3793
      %3992 = vst [vmem:[%s221 + $0x30] sm:$0xff] %v3794
      %3993 = vst.msk [vmem:[%s221 + $0x38] sm:$0xff] %vm421, %v3795
      %3994 = vst [vmem:[%s221 + $0x40] sm:$0xff] %v3796
      %3995 = vst.msk [vmem:[%s221 + $0x48] sm:$0xff] %vm421, %v3797
      %3996 = vst [vmem:[%s221 + $0x50] sm:$0xff] %v3798
      %3997 = vst.msk [vmem:[%s221 + $0x58] sm:$0xff] %vm421, %v3799
      %3998 = vst [vmem:[%s221 + $0x60] sm:$0xff] %v3800
      %3999 = vst.msk [vmem:[%s221 + $0x68] sm:$0xff] %vm421, %v3801
      %4000 = vst [vmem:[%s221 + $0x70] sm:$0xff] %v3802
      %4001 = vst.msk [vmem:[%s221 + $0x78] sm:$0xff] %vm421, %v3803
      %4002 = vst [vmem:[%s221 + $0x80] sm:$0xff] %v3804
      %4003 = vst.msk [vmem:[%s221 + $0x88] sm:$0xff] %vm421, %v3805
      %4004 = vst [vmem:[%s221 + $0x90] sm:$0xff] %v3806
      %4005 = vst.msk [vmem:[%s221 + $0x98] sm:$0xff] %vm421, %v3807
      %4006 = vst [vmem:[%s221 + $0xa0] sm:$0xff] %v3808
      %4007 = vst.msk [vmem:[%s221 + $0xa8] sm:$0xff] %vm421, %v3809
      %4008 = vst [vmem:[%s221 + $0xb0] sm:$0xff] %v3810
      %4009 = vst.msk [vmem:[%s221 + $0xb8] sm:$0xff] %vm421, %v3811
      %4010 = vst [vmem:[%s221 + $0xc0] sm:$0xff] %v3812
      %4011 = vst.msk [vmem:[%s221 + $0xc8] sm:$0xff] %vm421, %v3813
      %4012 = vst [vmem:[%s221 + $0xd0] sm:$0xff] %v3814
      %4013 = vst.msk [vmem:[%s221 + $0xd8] sm:$0xff] %vm421, %v3815
      %4014 = vst [vmem:[%s221 + $0xe0] sm:$0xff] %v3816
      %4015 = vst.msk [vmem:[%s221 + $0xe8] sm:$0xff] %vm421, %v3817
      %4016 = vst [vmem:[%s221 + $0xf0] sm:$0xff] %v3818
      %4017 = vst.msk [vmem:[%s221 + $0xf8] sm:$0xff] %vm421, %v3819
      %4018 = vst [vmem:[%s221 + $0x100] sm:$0xff] %v3820
      %4019 = vst.msk [vmem:[%s221 + $0x108] sm:$0xff] %vm421, %v3821
      %4020 = vst [vmem:[%s221 + $0x110] sm:$0xff] %v3822
      %4021 = vst.msk [vmem:[%s221 + $0x118] sm:$0xff] %vm421, %v3823
      %4022 = vst [vmem:[%s221 + $0x120] sm:$0xff] %v3824
      %4023 = vst.msk [vmem:[%s221 + $0x128] sm:$0xff] %vm421, %v3825
      %4024 = vst [vmem:[%s221 + $0x130] sm:$0xff] %v3826
      %4025 = vst.msk [vmem:[%s221 + $0x138] sm:$0xff] %vm421, %v3827
      %4026 = vst [vmem:[%s221 + $0x140] sm:$0xff] %v3828
      %4027 = vst.msk [vmem:[%s221 + $0x148] sm:$0xff] %vm421, %v3829
      %4028 = vst [vmem:[%s221 + $0x150] sm:$0xff] %v3830
      %4029 = vst.msk [vmem:[%s221 + $0x158] sm:$0xff] %vm421, %v3831
      %4030 = vst [vmem:[%s221 + $0x160] sm:$0xff] %v3832
      %4031 = vst.msk [vmem:[%s221 + $0x168] sm:$0xff] %vm421, %v3833
      %4032 = vst [vmem:[%s221 + $0x170] sm:$0xff] %v3834
      %4033 = vst.msk [vmem:[%s221 + $0x178] sm:$0xff] %vm421, %v3835
      %4034 = vst [vmem:[%s221 + $0x180] sm:$0xff] %v3836
      %4035 = vst.msk [vmem:[%s221 + $0x188] sm:$0xff] %vm421, %v3837
      %4036 = vst [vmem:[%s221 + $0x190] sm:$0xff] %v3838
      %4037 = vst.msk [vmem:[%s221 + $0x198] sm:$0xff] %vm421, %v3839
      %4038 = vst [vmem:[%s221 + $0x1a0] sm:$0xff] %v3840
      %4039 = vst.msk [vmem:[%s221 + $0x1a8] sm:$0xff] %vm421, %v3841
      %4040 = vst [vmem:[%s221 + $0x1b0] sm:$0xff] %v3842
      %4041 = vst.msk [vmem:[%s221 + $0x1b8] sm:$0xff] %vm421, %v3843
      %4042 = vst [vmem:[%s221 + $0x1c0] sm:$0xff] %v3844
      %4043 = vst.msk [vmem:[%s221 + $0x1c8] sm:$0xff] %vm421, %v3845
      %4044 = vst [vmem:[%s221 + $0x1d0] sm:$0xff] %v3846
      %4045 = vst.msk [vmem:[%s221 + $0x1d8] sm:$0xff] %vm421, %v3847
      %4046 = vst [vmem:[%s221 + $0x1e0] sm:$0xff] %v3848
      %4047 = vst.msk [vmem:[%s221 + $0x1e8] sm:$0xff] %vm421, %v3849
      %4048 = vst [vmem:[%s221 + $0x1f0] sm:$0xff] %v3850
      %4049 = vst.msk [vmem:[%s221 + $0x1f8] sm:$0xff] %vm421, %v3851
      %4050 = vst [vmem:[%s221 + $0x200] sm:$0xff] %v3852
      %4051 = vst.msk [vmem:[%s221 + $0x208] sm:$0xff] %vm421, %v3853
      %4052 = vst [vmem:[%s221 + $0x210] sm:$0xff] %v3854
      %4053 = vst.msk [vmem:[%s221 + $0x218] sm:$0xff] %vm421, %v3855
      %4054 = vst [vmem:[%s221 + $0x220] sm:$0xff] %v3856
      %4055 = vst.msk [vmem:[%s221 + $0x228] sm:$0xff] %vm421, %v3857
      %4056 = vst [vmem:[%s221 + $0x230] sm:$0xff] %v3858
      %4057 = vst.msk [vmem:[%s221 + $0x238] sm:$0xff] %vm421, %v3859
      %4058 = vst [vmem:[%s221 + $0x240] sm:$0xff] %v3860
      %4059 = vst.msk [vmem:[%s221 + $0x248] sm:$0xff] %vm421, %v3861
      %4060 = vst [vmem:[%s221 + $0x250] sm:$0xff] %v3862
      %4061 = vst.msk [vmem:[%s221 + $0x258] sm:$0xff] %vm421, %v3863
      %4062 = vst [vmem:[%s221 + $0x260] sm:$0xff] %v3864
      %4063 = vst.msk [vmem:[%s221 + $0x268] sm:$0xff] %vm421, %v3865
      %4064 = vst [vmem:[%s221 + $0x270] sm:$0xff] %v3866
      %4065 = vst.msk [vmem:[%s221 + $0x278] sm:$0xff] %vm421, %v3867
      %4066 = vst [vmem:[%s221 + $0x280] sm:$0xff] %v3868
      %4067 = vst.msk [vmem:[%s221 + $0x288] sm:$0xff] %vm421, %v3869
      %4068 = vst [vmem:[%s221 + $0x290] sm:$0xff] %v3870
      %4069 = vst.msk [vmem:[%s221 + $0x298] sm:$0xff] %vm421, %v3871
      %4070 = vst [vmem:[%s221 + $0x2a0] sm:$0xff] %v3872
      %4071 = vst.msk [vmem:[%s221 + $0x2a8] sm:$0xff] %vm421, %v3873
      %4072 = vst [vmem:[%s221 + $0x2b0] sm:$0xff] %v3874
      %4073 = vst.msk [vmem:[%s221 + $0x2b8] sm:$0xff] %vm421, %v3875
      %4074 = vst [vmem:[%s221 + $0x2c0] sm:$0xff] %v3876
      %4075 = vst.msk [vmem:[%s221 + $0x2c8] sm:$0xff] %vm421, %v3877
      %4076 = vst [vmem:[%s221 + $0x2d0] sm:$0xff] %v3878
      %4077 = vst.msk [vmem:[%s221 + $0x2d8] sm:$0xff] %vm421, %v3879
      %4078 = vst [vmem:[%s221 + $0x2e0] sm:$0xff] %v3880
      %4079 = vst.msk [vmem:[%s221 + $0x2e8] sm:$0xff] %vm421, %v3881
      %4080 = vst [vmem:[%s221 + $0x2f0] sm:$0xff] %v3882
      %4081 = vst.msk [vmem:[%s221 + $0x2f8] sm:$0xff] %vm421, %v3883
      %4082 = vst [vmem:[%s221 + $0x300] sm:$0xff] %v3884
      %4083 = vst.msk [vmem:[%s221 + $0x308] sm:$0xff] %vm421, %v3885
      %4084 = vst [vmem:[%s221 + $0x310] sm:$0xff] %v3886
      %4085 = vst.msk [vmem:[%s221 + $0x318] sm:$0xff] %vm421, %v3887
      %4086 = vst [vmem:[%s221 + $0x320] sm:$0xff] %v3888
      %4087 = vst.msk [vmem:[%s221 + $0x328] sm:$0xff] %vm421, %v3889
      %4088 = vst [vmem:[%s221 + $0x330] sm:$0xff] %v3890
      %4089 = vst.msk [vmem:[%s221 + $0x338] sm:$0xff] %vm421, %v3891
      %4090 = vst [vmem:[%s221 + $0x340] sm:$0xff] %v3892
      %4091 = vst.msk [vmem:[%s221 + $0x348] sm:$0xff] %vm421, %v3893
      %4092 = vst [vmem:[%s221 + $0x350] sm:$0xff] %v3894
      %4093 = vst.msk [vmem:[%s221 + $0x358] sm:$0xff] %vm421, %v3895
      %4094 = vst [vmem:[%s221 + $0x360] sm:$0xff] %v3896
      %4095 = vst.msk [vmem:[%s221 + $0x368] sm:$0xff] %vm421, %v3897
      %4096 = vst [vmem:[%s221 + $0x370] sm:$0xff] %v3898
      %4097 = vst.msk [vmem:[%s221 + $0x378] sm:$0xff] %vm421, %v3899
      %4098 = vst [vmem:[%s221 + $0x380] sm:$0xff] %v3900
      %4099 = vst.msk [vmem:[%s221 + $0x388] sm:$0xff] %vm421, %v3901
      %4100 = vst [vmem:[%s221 + $0x390] sm:$0xff] %v3902
      %4101 = vst.msk [vmem:[%s221 + $0x398] sm:$0xff] %vm421, %v3903
      %4102 = vst [vmem:[%s221 + $0x3a0] sm:$0xff] %v3904
      %4103 = vst.msk [vmem:[%s221 + $0x3a8] sm:$0xff] %vm421, %v3905
      %4104 = vst [vmem:[%s221 + $0x3b0] sm:$0xff] %v3906
      %4105 = vst.msk [vmem:[%s221 + $0x3b8] sm:$0xff] %vm421, %v3907
      %4106 = vst [vmem:[%s221 + $0x3c0] sm:$0xff] %v3908
      %4107 = vst.msk [vmem:[%s221 + $0x3c8] sm:$0xff] %vm421, %v3909
      %4108 = vst [vmem:[%s221 + $0x3d0] sm:$0xff] %v3910
      %4109 = vst.msk [vmem:[%s221 + $0x3d8] sm:$0xff] %vm421, %v3911
      %4110 = vst [vmem:[%s221 + $0x3e0] sm:$0xff] %v3912
      %4111 = vst.msk [vmem:[%s221 + $0x3e8] sm:$0xff] %vm421, %v3913
      %4112 = vst [vmem:[%s221 + $0x3f0] sm:$0xff] %v3914
      %4113 = vst.msk [vmem:[%s221 + $0x3f8] sm:$0xff] %vm421, %v3915
      %4114 = vst [vmem:[%s221 + $0x400] sm:$0xff] %v3916
      %4115 = vst.msk [vmem:[%s221 + $0x408] sm:$0xff] %vm421, %v3917
      %4116 = vst [vmem:[%s221 + $0x410] sm:$0xff] %v3918
      %4117 = vst.msk [vmem:[%s221 + $0x418] sm:$0xff] %vm421, %v3919
      %4118 = vst [vmem:[%s221 + $0x420] sm:$0xff] %v3920
      %4119 = vst.msk [vmem:[%s221 + $0x428] sm:$0xff] %vm421, %v3921
      %4120 = vst [vmem:[%s221 + $0x430] sm:$0xff] %v3922
      %4121 = vst.msk [vmem:[%s221 + $0x438] sm:$0xff] %vm421, %v3923
      %4122 = vst [vmem:[%s221 + $0x440] sm:$0xff] %v3924
      %4123 = vst.msk [vmem:[%s221 + $0x448] sm:$0xff] %vm421, %v3925
      %4124 = vst [vmem:[%s221 + $0x450] sm:$0xff] %v3926
      %4125 = vst.msk [vmem:[%s221 + $0x458] sm:$0xff] %vm421, %v3927
      %4126 = vst [vmem:[%s221 + $0x460] sm:$0xff] %v3928
      %4127 = vst.msk [vmem:[%s221 + $0x468] sm:$0xff] %vm421, %v3929
      %4128 = vst [vmem:[%s221 + $0x470] sm:$0xff] %v3930
      %4129 = vst.msk [vmem:[%s221 + $0x478] sm:$0xff] %vm421, %v3931
      %4130 = vst [vmem:[%s221 + $0x480] sm:$0xff] %v3932
      %4131 = vst.msk [vmem:[%s221 + $0x488] sm:$0xff] %vm421, %v3933
      %4132 = vst [vmem:[%s221 + $0x490] sm:$0xff] %v3934
      %4133 = vst.msk [vmem:[%s221 + $0x498] sm:$0xff] %vm421, %v3935
      %4134 = vst [vmem:[%s221 + $0x4a0] sm:$0xff] %v3936
      %4135 = vst.msk [vmem:[%s221 + $0x4a8] sm:$0xff] %vm421, %v3937
      %4136 = vst [vmem:[%s221 + $0x4b0] sm:$0xff] %v3938
      %4137 = vst.msk [vmem:[%s221 + $0x4b8] sm:$0xff] %vm421, %v3939
      %4138 = vst [vmem:[%s221 + $0x4c0] sm:$0xff] %v3940
      %4139 = vst.msk [vmem:[%s221 + $0x4c8] sm:$0xff] %vm421, %v3941
      %4140 = vst [vmem:[%s221 + $0x4d0] sm:$0xff] %v3942
      %4141 = vst.msk [vmem:[%s221 + $0x4d8] sm:$0xff] %vm421, %v3943
      %4142 = vst [vmem:[%s221 + $0x4e0] sm:$0xff] %v3944
      %4143 = vst.msk [vmem:[%s221 + $0x4e8] sm:$0xff] %vm421, %v3945
      %4144 = vst [vmem:[%s221 + $0x4f0] sm:$0xff] %v3946
      %4145 = vst.msk [vmem:[%s221 + $0x4f8] sm:$0xff] %vm421, %v3947
      %4146 = vst [vmem:[%s221 + $0x500] sm:$0xff] %v3948
      %4147 = vst.msk [vmem:[%s221 + $0x508] sm:$0xff] %vm421, %v3949
      %4148 = vst [vmem:[%s221 + $0x510] sm:$0xff] %v3950
      %4149 = vst.msk [vmem:[%s221 + $0x518] sm:$0xff] %vm421, %v3951
      %4150 = vst [vmem:[%s221 + $0x520] sm:$0xff] %v3952
      %4151 = vst.msk [vmem:[%s221 + $0x528] sm:$0xff] %vm421, %v3953
      %4152 = vst [vmem:[%s221 + $0x530] sm:$0xff] %v3954
      %4153 = vst.msk [vmem:[%s221 + $0x538] sm:$0xff] %vm421, %v3955
      %4154 = vst [vmem:[%s221 + $0x540] sm:$0xff] %v3956
      %4155 = vst.msk [vmem:[%s221 + $0x548] sm:$0xff] %vm421, %v3957
      %4156 = vst [vmem:[%s221 + $0x550] sm:$0xff] %v3958
      %4157 = vst.msk [vmem:[%s221 + $0x558] sm:$0xff] %vm421, %v3959
      %4158 = vst [vmem:[%s221 + $0x560] sm:$0xff] %v3960
      %4159 = vst.msk [vmem:[%s221 + $0x568] sm:$0xff] %vm421, %v3961
      %4160 = vst [vmem:[%s221 + $0x570] sm:$0xff] %v3962
      %4161 = vst.msk [vmem:[%s221 + $0x578] sm:$0xff] %vm421, %v3963
      %4162 = vst [vmem:[%s221 + $0x580] sm:$0xff] %v3964
      %4163 = vst.msk [vmem:[%s221 + $0x588] sm:$0xff] %vm421, %v3965
      %4164 = vst [vmem:[%s221 + $0x590] sm:$0xff] %v3966
      %4165 = vst.msk [vmem:[%s221 + $0x598] sm:$0xff] %vm421, %v3967
      %4166 = vst [vmem:[%s221 + $0x5a0] sm:$0xff] %v3968
      %4167 = vst.msk [vmem:[%s221 + $0x5a8] sm:$0xff] %vm421, %v3969
      %4168 = vst [vmem:[%s221 + $0x5b0] sm:$0xff] %v3970
      %4169 = vst.msk [vmem:[%s221 + $0x5b8] sm:$0xff] %vm421, %v3971
      %4170 = vst [vmem:[%s221 + $0x5c0] sm:$0xff] %v3972
      %4171 = vst.msk [vmem:[%s221 + $0x5c8] sm:$0xff] %vm421, %v3973
      %4172 = vst [vmem:[%s221 + $0x5d0] sm:$0xff] %v3974
      %4173 = vst.msk [vmem:[%s221 + $0x5d8] sm:$0xff] %vm421, %v3975
      %4174 = vst [vmem:[%s221 + $0x5e0] sm:$0xff] %v3976
      %4175 = vst.msk [vmem:[%s221 + $0x5e8] sm:$0xff] %vm421, %v3977
      %4176 = vst [vmem:[%s221 + $0x5f0] sm:$0xff] %v3978
      %4177 = vst.msk [vmem:[%s221 + $0x5f8] sm:$0xff] %vm421, %v3979
      %4178 = vst [vmem:[%s221 + $0x600] sm:$0xff] %v3980
      %4179 = vst.msk [vmem:[%s221 + $0x608] sm:$0xff] %vm421, %v3981
      %4180 = vst [vmem:[%s221 + $0x610] sm:$0xff] %v3982
      %4181 = vst.msk [vmem:[%s221 + $0x618] sm:$0xff] %vm421, %v3983
      %4182 = vst [vmem:[%s221 + $0x620] sm:$0xff] %v3984
      %4183 = vst.msk [vmem:[%s221 + $0x628] sm:$0xff] %vm421, %v3985
      %s4184 = smul.u32 99, %s14
      %p4185 = scmp.lt.s32.totalorder %s4184, 197
      %s4186 = scalar_select %p4185, %s4184, 197
      %s4187 = smul.addr %s4186, 2
      %s4188 = smul.addr %s4187, 8
      %s4189 = scalar_lea.vmem %s3, %s4188
      // Predicated region
      $region33: #{tpu_custom_call.1} parent=31 // pred_check
        %p4190 = pneg %p110
      $region34: #{tpu_custom_call.1} parent=31 // pred_check_branch
        %4192 = sbr.rel (%p4190) target = $region36
      $region35: #{tpu_custom_call.1} parent=31 // pred_region
        %s4193 = smul.u32 99, %s14
      $region36: #{tpu_custom_call.1} parent=31 // pred_fallthru
        _
    $region32: #{tpu_custom_call.1} parent=5 // pred_fallthru
      _
    %p4194 = scmp.le.s32.totalorder 2, %s9
    // Predicated region
    $region37: #{tpu_custom_call.1} parent=5 // pred_check
      %p4195 = pneg %p4194
    $region38: #{tpu_custom_call.1} parent=5 // pred_check_branch
      %4197 = sbr.rel (%p4195) target = $region40
    $region39: #{tpu_custom_call.1} parent=5 // pred_region
      %s4198 = ssub.s32 %s9, 2
      // Predicated region
      $region41: #{tpu_custom_call.1} parent=39 // pred_check
        %p4199 = pneg %p116
      $region42: #{tpu_custom_call.1} parent=39 // pred_check_branch
        %4201 = sbr.rel (%p4199) target = $region44
      $region43: #{tpu_custom_call.1} parent=39 // pred_region
        %s4202 = smul.u32 99, %s15
        %p4203 = scmp.lt.s32.totalorder %s4202, 197
        %s4204 = scalar_select %p4203, %s4202, 197
        %s4205 = smul.addr %s4204, 2
        %s4206 = smul.addr %s4205, 8
        %s4207 = scalar_lea.vmem %s3, %s4206
      $region44: #{tpu_custom_call.1} parent=39 // pred_fallthru
        _
    $region40: #{tpu_custom_call.1} parent=5 // pred_fallthru
      _
  $region6: #{tpu_custom_call.1} parent=0 // loop_footer
    %s13 = sadd.s32 1, %s9
  $region7: #{tpu_custom_call.1} parent=0 // loop_footer_branch
    %8 = sbr.rel target = $region3
  $region8: #{tpu_custom_call.1} parent=0 // loop_exit
    _

</llo_original>
